<compile_context>
chip_gen: v7x
topology: tpu7x:2x2x1
jax: 0.10.0
libtpu: 0.0.40
codegen_flags: <defaults>
</compile_context>

<pallas_src>
import math

import jax
import jax.numpy as jnp
from jax import lax
from jax.experimental import pallas as pl
from jax.experimental.pallas import tpu as pltpu

N_DIM = 3
TIME_EMB_DIM = 512
HALF_DIM = TIME_EMB_DIM // 2
LN_EPS = 1e-5

# Natural (per-layer) parameters, PyTorch-equivalent, with nn.Linear weights
# stored transposed as (in_features, out_features) and vectors as (1, C).
# NOTE: time_proj_3 exists in the PyTorch __init__ but is never used in
# forward(), so it is intentionally omitted here.
PARAM_DEFS = [
    ("tm_w1", (TIME_EMB_DIM, TIME_EMB_DIM), "w"), ("tm_b1", (1, TIME_EMB_DIM), "b"),
    ("tm_w2", (TIME_EMB_DIM, TIME_EMB_DIM), "w"), ("tm_b2", (1, TIME_EMB_DIM), "b"),
    ("d1_w", (N_DIM, 128), "w"), ("d1_b", (1, 128), "b"),
    ("n1_g", (1, 128), "g"), ("n1_b", (1, 128), "b"),
    ("d2_w", (128, 256), "w"), ("d2_b", (1, 256), "b"),
    ("n2_g", (1, 256), "g"), ("n2_b", (1, 256), "b"),
    ("bn_w", (256, 256), "w"), ("bn_b", (1, 256), "b"),
    ("nbn_g", (1, 256), "g"), ("nbn_b", (1, 256), "b"),
    ("u1_w", (512, 256), "w"), ("u1_b", (1, 256), "b"),
    ("nu1_g", (1, 256), "g"), ("nu1_b", (1, 256), "b"),
    ("rp_w", (256, 128), "w"), ("rp_b", (1, 128), "b"),
    ("u2_w", (256, 128), "w"), ("u2_b", (1, 128), "b"),
    ("nu2_g", (1, 128), "g"), ("nu2_b", (1, 128), "b"),
    ("u3_w", (256, 64), "w"), ("u3_b", (1, 64), "b"),
    ("nu3_g", (1, 64), "g"), ("nu3_b", (1, 64), "b"),
    ("tp1_w", (TIME_EMB_DIM, N_DIM), "w"), ("tp1_b", (1, N_DIM), "b"),
    ("tp2_w", (TIME_EMB_DIM, 128), "w"), ("tp2_b", (1, 128), "b"),
    ("tpb_w", (TIME_EMB_DIM, 256), "w"), ("tpb_b", (1, 256), "b"),
    ("tpu1_w", (TIME_EMB_DIM, 256), "w"), ("tpu1_b", (1, 256), "b"),
    ("tpu2_w", (TIME_EMB_DIM, 128), "w"), ("tpu2_b", (1, 128), "b"),
    ("tpu3_w", (TIME_EMB_DIM, 128), "w"), ("tpu3_b", (1, 128), "b"),
    ("fin_w", (64, N_DIM), "w"), ("fin_b", (1, N_DIM), "b"),
]

# ---------------- packed slab layouts (all offsets 128-lane aligned) --------
# tp slab (512, 1024) bf16 : [tp1_w@d1_w | tp2_w | tpb_w | tpu1_w | tpu2_w | tpu3_w]
TP_COLS = {"l1": (0, 128), "l2": (128, 256), "bn": (256, 512),
           "u1": (512, 768), "u2": (768, 896), "u3": (896, 1024)}
# w256 slab (256, 896) bf16 : [bn_w | u1_w[:256] | u1_w[256:] | rp_w]
W256_COLS = {"bn": (0, 256), "u1a": (256, 512), "u1b": (512, 768), "rp": (768, 896)}
# w128 slab (128, 896) bf16 : [d2_w | u2a | u2b | u3a | u3b | d1_w(pad) | fin_w(pad)]
W128_COLS = {"d2": (0, 256), "u2a": (256, 384), "u2b": (384, 512),
             "u3a": (512, 576), "u3b": (576, 640), "d1": (640, 768),
             "fin": (768, 896)}
# bias slab (22, 1024) f32, each row left-aligned at column 0.
BIAS_ROWS = [
    ("tp_bias", 1024),          # folded per-layer time-projection biases (+ d1_b)
    ("tm_b1", 512), ("tm_b2", 512),
    ("n1_g", 128), ("n1_b", 128),
    ("d2_b", 256), ("n2_g", 256), ("n2_b", 256),
    ("bn_b", 256), ("nbn_g", 256), ("nbn_b", 256),
    ("u1_b", 256), ("nu1_g", 256), ("nu1_b", 256),
    ("rp_b", 128),
    ("u2_b", 128), ("nu2_g", 128), ("nu2_b", 128),
    ("u3_b", 64), ("nu3_g", 64), ("nu3_b", 64),
    ("fin_b", N_DIM),
]
BIAS_INDEX = {name: (i, length) for i, (name, length) in enumerate(BIAS_ROWS)}


# ---------------- shared forward math (kernel + pure-JAX reference) ---------
def _forward_from_packed(x, t, tm, tp, w256, w128, bias):
    """x: (B, N_DIM) f32, t: (B, 1) f32, slabs as documented above."""
    f32 = jnp.float32
    bf16 = jnp.bfloat16

    def bvec(name):
        r, n = BIAS_INDEX[name]
        return bias[r:r + 1, 0:n]

    def bdot(a, w):                       # bf16 inputs, f32 accumulation
        return jnp.dot(a.astype(bf16), w, preferred_element_type=f32)

    def fdot(a, w):                       # f32 dot for the tiny K=3 / N=3 shapes
        return jnp.dot(a, w.astype(f32), preferred_element_type=f32)

    def silu(h):
        return h * jax.nn.sigmoid(h)

    def layernorm(h, gname, bname):
        m = jnp.mean(h, axis=-1, keepdims=True)
        v = jnp.mean((h - m) ** 2, axis=-1, keepdims=True)
        return (h - m) * lax.rsqrt(v + LN_EPS) * bvec(gname) + bvec(bname)

    def tpc(acts, name):
        lo, hi = TP_COLS[name]
        return acts[:, lo:hi]

    def w256c(name):
        lo, hi = W256_COLS[name]
        return w256[:, lo:hi]

    def w128c(name):
        lo, hi = W128_COLS[name]
        return w128[:, lo:hi]

    # Sinusoidal time embedding; frequency table from a (1, half) iota.
    c = math.log(10000.0) / (HALF_DIM - 1)
    idx = lax.broadcasted_iota(jnp.int32, (1, HALF_DIM), 1).astype(f32)
    freqs = jnp.exp(-c * idx)                                   # (1, 256)
    arg = t * freqs                                             # (B, 256)
    emb = jnp.concatenate([jnp.sin(arg), jnp.cos(arg)], axis=-1)  # (B, 512)
    emb = emb * lax.rsqrt(jnp.sum(emb * emb, axis=-1, keepdims=True))

    # time_mlp: Linear -> SiLU -> Linear
    te = silu(bdot(emb, tm[:, 0:TIME_EMB_DIM]) + bvec("tm_b1"))
    te = bdot(te, tm[:, TIME_EMB_DIM:2 * TIME_EMB_DIM]) + bvec("tm_b2")  # (B, 512)

    # All six time projections in one matmul; packed bias row already includes
    # the folded down1 bias (tp1_b @ d1_w + d1_b).
    tpa = bdot(te, tp) + bvec("tp_bias")                        # (B, 1024)

    # down1 (time_proj_1 folded: x@d1_w + te@(tp1_w@d1_w) + b1')
    d1_lo, d1_hi = W128_COLS["d1"]
    h1 = fdot(x, w128[0:N_DIM, d1_lo:d1_hi]) + tpc(tpa, "l1")
    h1 = layernorm(silu(h1), "n1_g", "n1_b")                    # (B, 128)

    # down2
    h2 = bdot(h1 + tpc(tpa, "l2"), w128c("d2")) + bvec("d2_b")
    h2 = layernorm(silu(h2), "n2_g", "n2_b")                    # (B, 256)

    # bottleneck
    hb = bdot(h2 + tpc(tpa, "bn"), w256c("bn")) + bvec("bn_b")
    hb = layernorm(silu(hb), "nbn_g", "nbn_b")                  # (B, 256)

    # up1: cat([hb + tpu1, h2]) @ u1_w  ->  two accumulated dots (split weight)
    h = (bdot(hb + tpc(tpa, "u1"), w256c("u1a"))
         + bdot(h2, w256c("u1b")) + bvec("u1_b"))
    h = layernorm(silu(h), "nu1_g", "nu1_b")                    # (B, 256)

    # reduce_proj
    h = bdot(h, w256c("rp")) + bvec("rp_b")                     # (B, 128)

    # up2: cat([h + tpu2, h1]) @ u2_w
    h = (bdot(h + tpc(tpa, "u2"), w128c("u2a"))
         + bdot(h1, w128c("u2b")) + bvec("u2_b"))
    h = layernorm(silu(h), "nu2_g", "nu2_b")                    # (B, 128)

    # up3: cat([h + tpu3, h1]) @ u3_w
    h = (bdot(h + tpc(tpa, "u3"), w128c("u3a"))
         + bdot(h1, w128c("u3b")) + bvec("u3_b"))
    h = layernorm(silu(h), "nu3_g", "nu3_b")                    # (B, 64)

    # final
    fin_lo = W128_COLS["fin"][0]
    return fdot(h, w128[0:64, fin_lo:fin_lo + N_DIM]) + bvec("fin_b")  # (B, 3)


# ---------------- Pallas kernel & wrapper ------------------------------------
def ddpm_kernel(x_ref, t_ref, tm_ref, tp_ref, w256_ref, w128_ref, bias_ref,
                out_ref):
    out_ref[...] = _forward_from_packed(
        x_ref[...], t_ref[...], tm_ref[...], tp_ref[...],
        w256_ref[...], w128_ref[...], bias_ref[...])


@jax.jit
def ddpm_forward(x, t_int, packed):
    """x: (B, n_dim) f32, t_int: (B,) integer timesteps, packed: slab dict."""
    B = x.shape[0]
    t = t_int.astype(jnp.float32).reshape(B, 1)
    vmem = pl.BlockSpec(memory_space=pltpu.MemorySpace.VMEM)
    return pl.pallas_call(
        ddpm_kernel,
        out_shape=jax.ShapeDtypeStruct((B, N_DIM), jnp.float32),
        in_specs=[vmem] * 7,
        out_specs=vmem,
        compiler_params=pltpu.CompilerParams(vmem_limit_bytes=16 << 20),
    )(x, t, packed["tm"], packed["tp"], packed["w256"], packed["w128"],
      packed["bias"])


# ---------------- parameter construction / packing ---------------------------
def init_params(key):
    params = {}
    for name, shape, kind in PARAM_DEFS:
        key, sub = jax.random.split(key)
        if kind == "w":
            fan_in = shape[0]
            params[name] = (jax.random.normal(sub, shape, jnp.float32)
                            / math.sqrt(float(fan_in)))
        elif kind == "g":
            params[name] = jnp.ones(shape, jnp.float32)
        else:  # bias / beta
            params[name] = 0.1 * jax.random.normal(sub, shape, jnp.float32)
    return params


def pack_params(p):
    """Fold + pack natural f32 params into the bf16/f32 slab layout."""
    bf16 = jnp.bfloat16
    # Fold time_proj_1 through down1's linear (exact algebra):
    #   (x + te@tp1_w + tp1_b) @ d1_w + d1_b
    # = x@d1_w + te@(tp1_w@d1_w) + (tp1_b@d1_w + d1_b)
    w1_fold = p["tp1_w"] @ p["d1_w"]                       # (512, 128)
    b1_fold = p["tp1_b"] @ p["d1_w"] + p["d1_b"]           # (1, 128)

    tm = jnp.concatenate([p["tm_w1"], p["tm_w2"]], axis=1).astype(bf16)
    tp = jnp.concatenate([w1_fold, p["tp2_w"], p["tpb_w"], p["tpu1_w"],
                          p["tpu2_w"], p["tpu3_w"]], axis=1).astype(bf16)
    tp_bias = jnp.concatenate([b1_fold, p["tp2_b"], p["tpb_b"], p["tpu1_b"],
                               p["tpu2_b"], p["tpu3_b"]], axis=1)      # (1,1024)

    w256 = jnp.concatenate([p["bn_w"], p["u1_w"][:256], p["u1_w"][256:],
                            p["rp_w"]], axis=1).astype(bf16)           # (256,896)

    d1_pad = jnp.zeros((128, 128), jnp.float32).at[:N_DIM, :].set(p["d1_w"])
    fin_pad = jnp.zeros((128, 128), jnp.float32).at[:64, :N_DIM].set(p["fin_w"])
    w128 = jnp.concatenate([p["d2_w"], p["u2_w"][:128], p["u2_w"][128:],
                            p["u3_w"][:128], p["u3_w"][128:],
                            d1_pad, fin_pad], axis=1).astype(bf16)     # (128,896)

    named = dict(p)
    named["tp_bias"] = tp_bias
    rows = [jnp.pad(named[name], ((0, 0), (0, 1024 - length)))
            for name, length in BIAS_ROWS]
    bias = jnp.concatenate(rows, axis=0).astype(jnp.float32)           # (22,1024)

    return {"tm": tm, "tp": tp, "w256": w256, "w128": w128, "bias": bias}


# ---------------- faithful f32 reference (original formulation) --------------
def _unet_forward_f32(x, t, p):
    def lin(a, w, b): return a @ w + b
    def silu(a): return a * jax.nn.sigmoid(a)
    def ln(a, g, b):
        m = jnp.mean(a, -1, keepdims=True)
        v = jnp.mean((a - m) ** 2, -1, keepdims=True)
        return (a - m) * lax.rsqrt(v + LN_EPS) * g + b

    c = math.log(10000.0) / (HALF_DIM - 1)
    freqs = jnp.exp(-c * jnp.arange(HALF_DIM, dtype=jnp.float32))
    arg = t * freqs[None, :]
    emb = jnp.concatenate([jnp.sin(arg), jnp.cos(arg)], axis=-1)
    emb = emb / jnp.linalg.norm(emb, axis=-1, keepdims=True)

    te = lin(emb, p["tm_w1"], p["tm_b1"])
    te = lin(silu(te), p["tm_w2"], p["tm_b2"])

    h1 = ln(silu(lin(x + lin(te, p["tp1_w"], p["tp1_b"]), p["d1_w"], p["d1_b"])),
            p["n1_g"], p["n1_b"])
    h2 = ln(silu(lin(h1 + lin(te, p["tp2_w"], p["tp2_b"]), p["d2_w"], p["d2_b"])),
            p["n2_g"], p["n2_b"])
    h = ln(silu(lin(h2 + lin(te, p["tpb_w"], p["tpb_b"]), p["bn_w"], p["bn_b"])),
           p["nbn_g"], p["nbn_b"])
    h = ln(silu(lin(jnp.concatenate([h + lin(te, p["tpu1_w"], p["tpu1_b"]), h2], -1),
                    p["u1_w"], p["u1_b"])), p["nu1_g"], p["nu1_b"])
    h = lin(h, p["rp_w"], p["rp_b"])
    h = ln(silu(lin(jnp.concatenate([h + lin(te, p["tpu2_w"], p["tpu2_b"]), h1], -1),
                    p["u2_w"], p["u2_b"])), p["nu2_g"], p["nu2_b"])
    h = ln(silu(lin(jnp.concatenate([h + lin(te, p["tpu3_w"], p["tpu3_b"]), h1], -1),
                    p["u3_w"], p["u3_b"])), p["nu3_g"], p["nu3_b"])
    return lin(h, p["fin_w"], p["fin_b"])


if __name__ == "__main__":
    key = jax.random.PRNGKey(0)
    k_param, k_x, k_t = jax.random.split(key, 3)

    B = 8
    params = init_params(k_param)
    packed = pack_params(params)
    x = jax.random.normal(k_x, (B, N_DIM), jnp.float32)
    t = jax.random.randint(k_t, (B,), 0, 200, jnp.int32)

    out = jax.block_until_ready(ddpm_forward(x, t, packed))
    assert out.shape == (B, N_DIM)

    tf = t.astype(jnp.float32).reshape(B, 1)

    # Check 1: identical packed bf16 math executed outside Pallas.
    ref_packed = _forward_from_packed(x, tf, packed["tm"], packed["tp"],
                                      packed["w256"], packed["w128"],
                                      packed["bias"])
    assert jnp.allclose(out, ref_packed, atol=5e-3, rtol=5e-3), \
        "kernel mismatch vs packed-math reference"

    # Check 2: faithful f32 original formulation (loose tolerance: weights are
    # stored in bf16 and time_proj_1 is algebraically folded).
    ref_f32 = _unet_forward_f32(x, tf, params)
    assert jnp.allclose(out, ref_f32, atol=0.15, rtol=0.1), \
        "kernel mismatch vs f32 reference"

    print("KERNEL_OK")
</pallas_src>

<mosaic_0001>
module attributes {stable_mosaic.version = 11 : i64} {
  func.func @ddpm_kernel(%arg0: memref<8x3xf32, #tpu.memory_space<vmem>>, %arg1: memref<8x1xf32, #tpu.memory_space<vmem>>, %arg2: memref<512x1024xbf16, #tpu.memory_space<vmem>>, %arg3: memref<512x1024xbf16, #tpu.memory_space<vmem>>, %arg4: memref<256x896xbf16, #tpu.memory_space<vmem>>, %arg5: memref<128x896xbf16, #tpu.memory_space<vmem>>, %arg6: memref<22x1024xf32, #tpu.memory_space<vmem>>, %arg7: memref<8x3xf32, #tpu.memory_space<vmem>>) attributes {dimension_semantics = [], scalar_prefetch = 0 : i64, scratch_operands = 0 : i64, tpu.core_type = #tpu.core_type<tc>} {
    %c0 = arith.constant 0 : index
    %c0_0 = arith.constant 0 : index
    %0 = vector.load %arg0[%c0, %c0_0] : memref<8x3xf32, #tpu.memory_space<vmem>>, vector<8x3xf32>
    %c0_1 = arith.constant 0 : index
    %c0_2 = arith.constant 0 : index
    %1 = vector.load %arg1[%c0_1, %c0_2] : memref<8x1xf32, #tpu.memory_space<vmem>>, vector<8x1xf32>
    %c0_3 = arith.constant 0 : index
    %c0_4 = arith.constant 0 : index
    %2 = vector.load %arg2[%c0_3, %c0_4] : memref<512x1024xbf16, #tpu.memory_space<vmem>>, vector<512x1024xbf16>
    %c0_5 = arith.constant 0 : index
    %c0_6 = arith.constant 0 : index
    %3 = vector.load %arg3[%c0_5, %c0_6] : memref<512x1024xbf16, #tpu.memory_space<vmem>>, vector<512x1024xbf16>
    %c0_7 = arith.constant 0 : index
    %c0_8 = arith.constant 0 : index
    %4 = vector.load %arg4[%c0_7, %c0_8] : memref<256x896xbf16, #tpu.memory_space<vmem>>, vector<256x896xbf16>
    %c0_9 = arith.constant 0 : index
    %c0_10 = arith.constant 0 : index
    %5 = vector.load %arg5[%c0_9, %c0_10] : memref<128x896xbf16, #tpu.memory_space<vmem>>, vector<128x896xbf16>
    %c0_11 = arith.constant 0 : index
    %c0_12 = arith.constant 0 : index
    %6 = vector.load %arg6[%c0_11, %c0_12] : memref<22x1024xf32, #tpu.memory_space<vmem>>, vector<22x1024xf32>
    %7 = tpu.iota {dimensions = array<i32: 1>} : vector<1x256xi32>
    %8 = arith.sitofp %7 : vector<1x256xi32> to vector<1x256xf32>
    %cst = arith.constant -0.0361189805 : f32
    %9 = vector.broadcast %cst : f32 to vector<1x256xf32>
    %10 = arith.mulf %9, %8 : vector<1x256xf32>
    %11 = math.exp %10 : vector<1x256xf32>
    %12 = vector.broadcast %1 : vector<8x1xf32> to vector<8x256xf32>
    %13 = vector.broadcast %11 : vector<1x256xf32> to vector<8x256xf32>
    %14 = arith.mulf %12, %13 : vector<8x256xf32>
    %15 = math.sin %14 : vector<8x256xf32>
    %16 = math.cos %14 : vector<8x256xf32>
    %17 = tpu.concatenate %15, %16 in 1 : vector<8x256xf32>, vector<8x256xf32> -> vector<8x512xf32>
    %18 = arith.mulf %17, %17 : vector<8x512xf32>
    %cst_13 = arith.constant dense<0.000000e+00> : vector<8xf32>
    %19 = vector.multi_reduction <add>, %18, %cst_13 [1] : vector<8x512xf32> to vector<8xf32>
    %20 = vector.shape_cast %19 : vector<8xf32> to vector<8x1xf32>
    %21 = math.rsqrt %20 : vector<8x1xf32>
    %22 = vector.broadcast %21 : vector<8x1xf32> to vector<8x512xf32>
    %23 = arith.mulf %17, %22 : vector<8x512xf32>
    %24 = vector.extract_strided_slice %2 {offsets = [0, 0], sizes = [512, 512], strides = [1, 1]} : vector<512x1024xbf16> to vector<512x512xbf16>
    %25 = arith.truncf %23 : vector<8x512xf32> to vector<8x512xbf16>
    %cst_14 = arith.constant dense<0.000000e+00> : vector<8x512xf32>
    %26 = tpu.matmul %25, %24, %cst_14 {dimension_numbers = #tpu.dot_dimension_numbers<[1], [0], [0], [1], [0, 0, 1, 1], [], []>} : vector<8x512xbf16>, vector<512x512xbf16>, vector<8x512xf32> -> vector<8x512xf32>
    %27 = vector.extract_strided_slice %6 {offsets = [1, 0], sizes = [1, 512], strides = [1, 1]} : vector<22x1024xf32> to vector<1x512xf32>
    %28 = vector.broadcast %27 : vector<1x512xf32> to vector<8x512xf32>
    %29 = arith.addf %26, %28 : vector<8x512xf32>
    %30 = arith.negf %29 : vector<8x512xf32>
    %31 = math.exp %30 : vector<8x512xf32>
    %cst_15 = arith.constant 1.000000e+00 : f32
    %32 = vector.broadcast %cst_15 : f32 to vector<8x512xf32>
    %33 = arith.addf %32, %31 : vector<8x512xf32>
    %34 = arith.divf %32, %33 : vector<8x512xf32>
    %35 = arith.mulf %29, %34 : vector<8x512xf32>
    %36 = vector.extract_strided_slice %2 {offsets = [0, 512], sizes = [512, 512], strides = [1, 1]} : vector<512x1024xbf16> to vector<512x512xbf16>
    %37 = arith.truncf %35 : vector<8x512xf32> to vector<8x512xbf16>
    %cst_16 = arith.constant dense<0.000000e+00> : vector<8x512xf32>
    %38 = tpu.matmul %37, %36, %cst_16 {dimension_numbers = #tpu.dot_dimension_numbers<[1], [0], [0], [1], [0, 0, 1, 1], [], []>} : vector<8x512xbf16>, vector<512x512xbf16>, vector<8x512xf32> -> vector<8x512xf32>
    %39 = vector.extract_strided_slice %6 {offsets = [2, 0], sizes = [1, 512], strides = [1, 1]} : vector<22x1024xf32> to vector<1x512xf32>
    %40 = vector.broadcast %39 : vector<1x512xf32> to vector<8x512xf32>
    %41 = arith.addf %38, %40 : vector<8x512xf32>
    %42 = arith.truncf %41 : vector<8x512xf32> to vector<8x512xbf16>
    %cst_17 = arith.constant dense<0.000000e+00> : vector<8x1024xf32>
    %43 = tpu.matmul %42, %3, %cst_17 {dimension_numbers = #tpu.dot_dimension_numbers<[1], [0], [0], [1], [0, 0, 1, 1], [], []>} : vector<8x512xbf16>, vector<512x1024xbf16>, vector<8x1024xf32> -> vector<8x1024xf32>
    %44 = vector.extract_strided_slice %6 {offsets = [0, 0], sizes = [1, 1024], strides = [1, 1]} : vector<22x1024xf32> to vector<1x1024xf32>
    %45 = vector.broadcast %44 : vector<1x1024xf32> to vector<8x1024xf32>
    %46 = arith.addf %43, %45 : vector<8x1024xf32>
    %47 = vector.extract_strided_slice %5 {offsets = [0, 640], sizes = [3, 128], strides = [1, 1]} : vector<128x896xbf16> to vector<3x128xbf16>
    %48 = arith.extf %47 : vector<3x128xbf16> to vector<3x128xf32>
    %cst_18 = arith.constant dense<0.000000e+00> : vector<8x128xf32>
    %49 = tpu.matmul %0, %48, %cst_18 {dimension_numbers = #tpu.dot_dimension_numbers<[1], [0], [0], [1], [0, 0, 1, 1], [], []>} : vector<8x3xf32>, vector<3x128xf32>, vector<8x128xf32> -> vector<8x128xf32>
    %50 = vector.extract_strided_slice %46 {offsets = [0, 0], sizes = [8, 128], strides = [1, 1]} : vector<8x1024xf32> to vector<8x128xf32>
    %51 = arith.addf %49, %50 : vector<8x128xf32>
    %52 = arith.negf %51 : vector<8x128xf32>
    %53 = math.exp %52 : vector<8x128xf32>
    %cst_19 = arith.constant 1.000000e+00 : f32
    %54 = vector.broadcast %cst_19 : f32 to vector<8x128xf32>
    %55 = arith.addf %54, %53 : vector<8x128xf32>
    %56 = arith.divf %54, %55 : vector<8x128xf32>
    %57 = arith.mulf %51, %56 : vector<8x128xf32>
    %cst_20 = arith.constant dense<0.000000e+00> : vector<8xf32>
    %58 = vector.multi_reduction <add>, %57, %cst_20 [1] : vector<8x128xf32> to vector<8xf32>
    %59 = vector.shape_cast %58 : vector<8xf32> to vector<8x1xf32>
    %cst_21 = arith.constant 1.280000e+02 : f32
    %60 = vector.broadcast %cst_21 : f32 to vector<8x1xf32>
    %61 = arith.divf %59, %60 : vector<8x1xf32>
    %62 = vector.broadcast %61 : vector<8x1xf32> to vector<8x128xf32>
    %63 = arith.subf %57, %62 : vector<8x128xf32>
    %64 = arith.mulf %63, %63 : vector<8x128xf32>
    %cst_22 = arith.constant dense<0.000000e+00> : vector<8xf32>
    %65 = vector.multi_reduction <add>, %64, %cst_22 [1] : vector<8x128xf32> to vector<8xf32>
    %66 = vector.shape_cast %65 : vector<8xf32> to vector<8x1xf32>
    %cst_23 = arith.constant 1.280000e+02 : f32
    %67 = vector.broadcast %cst_23 : f32 to vector<8x1xf32>
    %68 = arith.divf %66, %67 : vector<8x1xf32>
    %69 = vector.broadcast %61 : vector<8x1xf32> to vector<8x128xf32>
    %70 = arith.subf %57, %69 : vector<8x128xf32>
    %cst_24 = arith.constant 9.99999974E-6 : f32
    %71 = vector.broadcast %cst_24 : f32 to vector<8x1xf32>
    %72 = arith.addf %68, %71 : vector<8x1xf32>
    %73 = math.rsqrt %72 : vector<8x1xf32>
    %74 = vector.broadcast %73 : vector<8x1xf32> to vector<8x128xf32>
    %75 = arith.mulf %70, %74 : vector<8x128xf32>
    %76 = vector.extract_strided_slice %6 {offsets = [3, 0], sizes = [1, 128], strides = [1, 1]} : vector<22x1024xf32> to vector<1x128xf32>
    %77 = vector.broadcast %76 : vector<1x128xf32> to vector<8x128xf32>
    %78 = arith.mulf %75, %77 : vector<8x128xf32>
    %79 = vector.extract_strided_slice %6 {offsets = [4, 0], sizes = [1, 128], strides = [1, 1]} : vector<22x1024xf32> to vector<1x128xf32>
    %80 = vector.broadcast %79 : vector<1x128xf32> to vector<8x128xf32>
    %81 = arith.addf %78, %80 : vector<8x128xf32>
    %82 = vector.extract_strided_slice %46 {offsets = [0, 128], sizes = [8, 128], strides = [1, 1]} : vector<8x1024xf32> to vector<8x128xf32>
    %83 = arith.addf %81, %82 : vector<8x128xf32>
    %84 = vector.extract_strided_slice %5 {offsets = [0, 0], sizes = [128, 256], strides = [1, 1]} : vector<128x896xbf16> to vector<128x256xbf16>
    %85 = arith.truncf %83 : vector<8x128xf32> to vector<8x128xbf16>
    %cst_25 = arith.constant dense<0.000000e+00> : vector<8x256xf32>
    %86 = tpu.matmul %85, %84, %cst_25 {dimension_numbers = #tpu.dot_dimension_numbers<[1], [0], [0], [1], [0, 0, 1, 1], [], []>} : vector<8x128xbf16>, vector<128x256xbf16>, vector<8x256xf32> -> vector<8x256xf32>
    %87 = vector.extract_strided_slice %6 {offsets = [5, 0], sizes = [1, 256], strides = [1, 1]} : vector<22x1024xf32> to vector<1x256xf32>
    %88 = vector.broadcast %87 : vector<1x256xf32> to vector<8x256xf32>
    %89 = arith.addf %86, %88 : vector<8x256xf32>
    %90 = arith.negf %89 : vector<8x256xf32>
    %91 = math.exp %90 : vector<8x256xf32>
    %cst_26 = arith.constant 1.000000e+00 : f32
    %92 = vector.broadcast %cst_26 : f32 to vector<8x256xf32>
    %93 = arith.addf %92, %91 : vector<8x256xf32>
    %94 = arith.divf %92, %93 : vector<8x256xf32>
    %95 = arith.mulf %89, %94 : vector<8x256xf32>
    %cst_27 = arith.constant dense<0.000000e+00> : vector<8xf32>
    %96 = vector.multi_reduction <add>, %95, %cst_27 [1] : vector<8x256xf32> to vector<8xf32>
    %97 = vector.shape_cast %96 : vector<8xf32> to vector<8x1xf32>
    %cst_28 = arith.constant 2.560000e+02 : f32
    %98 = vector.broadcast %cst_28 : f32 to vector<8x1xf32>
    %99 = arith.divf %97, %98 : vector<8x1xf32>
    %100 = vector.broadcast %99 : vector<8x1xf32> to vector<8x256xf32>
    %101 = arith.subf %95, %100 : vector<8x256xf32>
    %102 = arith.mulf %101, %101 : vector<8x256xf32>
    %cst_29 = arith.constant dense<0.000000e+00> : vector<8xf32>
    %103 = vector.multi_reduction <add>, %102, %cst_29 [1] : vector<8x256xf32> to vector<8xf32>
    %104 = vector.shape_cast %103 : vector<8xf32> to vector<8x1xf32>
    %cst_30 = arith.constant 2.560000e+02 : f32
    %105 = vector.broadcast %cst_30 : f32 to vector<8x1xf32>
    %106 = arith.divf %104, %105 : vector<8x1xf32>
    %107 = vector.broadcast %99 : vector<8x1xf32> to vector<8x256xf32>
    %108 = arith.subf %95, %107 : vector<8x256xf32>
    %cst_31 = arith.constant 9.99999974E-6 : f32
    %109 = vector.broadcast %cst_31 : f32 to vector<8x1xf32>
    %110 = arith.addf %106, %109 : vector<8x1xf32>
    %111 = math.rsqrt %110 : vector<8x1xf32>
    %112 = vector.broadcast %111 : vector<8x1xf32> to vector<8x256xf32>
    %113 = arith.mulf %108, %112 : vector<8x256xf32>
    %114 = vector.extract_strided_slice %6 {offsets = [6, 0], sizes = [1, 256], strides = [1, 1]} : vector<22x1024xf32> to vector<1x256xf32>
    %115 = vector.broadcast %114 : vector<1x256xf32> to vector<8x256xf32>
    %116 = arith.mulf %113, %115 : vector<8x256xf32>
    %117 = vector.extract_strided_slice %6 {offsets = [7, 0], sizes = [1, 256], strides = [1, 1]} : vector<22x1024xf32> to vector<1x256xf32>
    %118 = vector.broadcast %117 : vector<1x256xf32> to vector<8x256xf32>
    %119 = arith.addf %116, %118 : vector<8x256xf32>
    %120 = vector.extract_strided_slice %46 {offsets = [0, 256], sizes = [8, 256], strides = [1, 1]} : vector<8x1024xf32> to vector<8x256xf32>
    %121 = arith.addf %119, %120 : vector<8x256xf32>
    %122 = vector.extract_strided_slice %4 {offsets = [0, 0], sizes = [256, 256], strides = [1, 1]} : vector<256x896xbf16> to vector<256x256xbf16>
    %123 = arith.truncf %121 : vector<8x256xf32> to vector<8x256xbf16>
    %cst_32 = arith.constant dense<0.000000e+00> : vector<8x256xf32>
    %124 = tpu.matmul %123, %122, %cst_32 {dimension_numbers = #tpu.dot_dimension_numbers<[1], [0], [0], [1], [0, 0, 1, 1], [], []>} : vector<8x256xbf16>, vector<256x256xbf16>, vector<8x256xf32> -> vector<8x256xf32>
    %125 = vector.extract_strided_slice %6 {offsets = [8, 0], sizes = [1, 256], strides = [1, 1]} : vector<22x1024xf32> to vector<1x256xf32>
    %126 = vector.broadcast %125 : vector<1x256xf32> to vector<8x256xf32>
    %127 = arith.addf %124, %126 : vector<8x256xf32>
    %128 = arith.negf %127 : vector<8x256xf32>
    %129 = math.exp %128 : vector<8x256xf32>
    %cst_33 = arith.constant 1.000000e+00 : f32
    %130 = vector.broadcast %cst_33 : f32 to vector<8x256xf32>
    %131 = arith.addf %130, %129 : vector<8x256xf32>
    %132 = arith.divf %130, %131 : vector<8x256xf32>
    %133 = arith.mulf %127, %132 : vector<8x256xf32>
    %cst_34 = arith.constant dense<0.000000e+00> : vector<8xf32>
    %134 = vector.multi_reduction <add>, %133, %cst_34 [1] : vector<8x256xf32> to vector<8xf32>
    %135 = vector.shape_cast %134 : vector<8xf32> to vector<8x1xf32>
    %cst_35 = arith.constant 2.560000e+02 : f32
    %136 = vector.broadcast %cst_35 : f32 to vector<8x1xf32>
    %137 = arith.divf %135, %136 : vector<8x1xf32>
    %138 = vector.broadcast %137 : vector<8x1xf32> to vector<8x256xf32>
    %139 = arith.subf %133, %138 : vector<8x256xf32>
    %140 = arith.mulf %139, %139 : vector<8x256xf32>
    %cst_36 = arith.constant dense<0.000000e+00> : vector<8xf32>
    %141 = vector.multi_reduction <add>, %140, %cst_36 [1] : vector<8x256xf32> to vector<8xf32>
    %142 = vector.shape_cast %141 : vector<8xf32> to vector<8x1xf32>
    %cst_37 = arith.constant 2.560000e+02 : f32
    %143 = vector.broadcast %cst_37 : f32 to vector<8x1xf32>
    %144 = arith.divf %142, %143 : vector<8x1xf32>
    %145 = vector.broadcast %137 : vector<8x1xf32> to vector<8x256xf32>
    %146 = arith.subf %133, %145 : vector<8x256xf32>
    %cst_38 = arith.constant 9.99999974E-6 : f32
    %147 = vector.broadcast %cst_38 : f32 to vector<8x1xf32>
    %148 = arith.addf %144, %147 : vector<8x1xf32>
    %149 = math.rsqrt %148 : vector<8x1xf32>
    %150 = vector.broadcast %149 : vector<8x1xf32> to vector<8x256xf32>
    %151 = arith.mulf %146, %150 : vector<8x256xf32>
    %152 = vector.extract_strided_slice %6 {offsets = [9, 0], sizes = [1, 256], strides = [1, 1]} : vector<22x1024xf32> to vector<1x256xf32>
    %153 = vector.broadcast %152 : vector<1x256xf32> to vector<8x256xf32>
    %154 = arith.mulf %151, %153 : vector<8x256xf32>
    %155 = vector.extract_strided_slice %6 {offsets = [10, 0], sizes = [1, 256], strides = [1, 1]} : vector<22x1024xf32> to vector<1x256xf32>
    %156 = vector.broadcast %155 : vector<1x256xf32> to vector<8x256xf32>
    %157 = arith.addf %154, %156 : vector<8x256xf32>
    %158 = vector.extract_strided_slice %46 {offsets = [0, 512], sizes = [8, 256], strides = [1, 1]} : vector<8x1024xf32> to vector<8x256xf32>
    %159 = arith.addf %157, %158 : vector<8x256xf32>
    %160 = vector.extract_strided_slice %4 {offsets = [0, 256], sizes = [256, 256], strides = [1, 1]} : vector<256x896xbf16> to vector<256x256xbf16>
    %161 = arith.truncf %159 : vector<8x256xf32> to vector<8x256xbf16>
    %cst_39 = arith.constant dense<0.000000e+00> : vector<8x256xf32>
    %162 = tpu.matmul %161, %160, %cst_39 {dimension_numbers = #tpu.dot_dimension_numbers<[1], [0], [0], [1], [0, 0, 1, 1], [], []>} : vector<8x256xbf16>, vector<256x256xbf16>, vector<8x256xf32> -> vector<8x256xf32>
    %163 = vector.extract_strided_slice %4 {offsets = [0, 512], sizes = [256, 256], strides = [1, 1]} : vector<256x896xbf16> to vector<256x256xbf16>
    %164 = arith.truncf %119 : vector<8x256xf32> to vector<8x256xbf16>
    %cst_40 = arith.constant dense<0.000000e+00> : vector<8x256xf32>
    %165 = tpu.matmul %164, %163, %cst_40 {dimension_numbers = #tpu.dot_dimension_numbers<[1], [0], [0], [1], [0, 0, 1, 1], [], []>} : vector<8x256xbf16>, vector<256x256xbf16>, vector<8x256xf32> -> vector<8x256xf32>
    %166 = arith.addf %162, %165 : vector<8x256xf32>
    %167 = vector.extract_strided_slice %6 {offsets = [11, 0], sizes = [1, 256], strides = [1, 1]} : vector<22x1024xf32> to vector<1x256xf32>
    %168 = vector.broadcast %167 : vector<1x256xf32> to vector<8x256xf32>
    %169 = arith.addf %166, %168 : vector<8x256xf32>
    %170 = arith.negf %169 : vector<8x256xf32>
    %171 = math.exp %170 : vector<8x256xf32>
    %cst_41 = arith.constant 1.000000e+00 : f32
    %172 = vector.broadcast %cst_41 : f32 to vector<8x256xf32>
    %173 = arith.addf %172, %171 : vector<8x256xf32>
    %174 = arith.divf %172, %173 : vector<8x256xf32>
    %175 = arith.mulf %169, %174 : vector<8x256xf32>
    %cst_42 = arith.constant dense<0.000000e+00> : vector<8xf32>
    %176 = vector.multi_reduction <add>, %175, %cst_42 [1] : vector<8x256xf32> to vector<8xf32>
    %177 = vector.shape_cast %176 : vector<8xf32> to vector<8x1xf32>
    %cst_43 = arith.constant 2.560000e+02 : f32
    %178 = vector.broadcast %cst_43 : f32 to vector<8x1xf32>
    %179 = arith.divf %177, %178 : vector<8x1xf32>
    %180 = vector.broadcast %179 : vector<8x1xf32> to vector<8x256xf32>
    %181 = arith.subf %175, %180 : vector<8x256xf32>
    %182 = arith.mulf %181, %181 : vector<8x256xf32>
    %cst_44 = arith.constant dense<0.000000e+00> : vector<8xf32>
    %183 = vector.multi_reduction <add>, %182, %cst_44 [1] : vector<8x256xf32> to vector<8xf32>
    %184 = vector.shape_cast %183 : vector<8xf32> to vector<8x1xf32>
    %cst_45 = arith.constant 2.560000e+02 : f32
    %185 = vector.broadcast %cst_45 : f32 to vector<8x1xf32>
    %186 = arith.divf %184, %185 : vector<8x1xf32>
    %187 = vector.broadcast %179 : vector<8x1xf32> to vector<8x256xf32>
    %188 = arith.subf %175, %187 : vector<8x256xf32>
    %cst_46 = arith.constant 9.99999974E-6 : f32
    %189 = vector.broadcast %cst_46 : f32 to vector<8x1xf32>
    %190 = arith.addf %186, %189 : vector<8x1xf32>
    %191 = math.rsqrt %190 : vector<8x1xf32>
    %192 = vector.broadcast %191 : vector<8x1xf32> to vector<8x256xf32>
    %193 = arith.mulf %188, %192 : vector<8x256xf32>
    %194 = vector.extract_strided_slice %6 {offsets = [12, 0], sizes = [1, 256], strides = [1, 1]} : vector<22x1024xf32> to vector<1x256xf32>
    %195 = vector.broadcast %194 : vector<1x256xf32> to vector<8x256xf32>
    %196 = arith.mulf %193, %195 : vector<8x256xf32>
    %197 = vector.extract_strided_slice %6 {offsets = [13, 0], sizes = [1, 256], strides = [1, 1]} : vector<22x1024xf32> to vector<1x256xf32>
    %198 = vector.broadcast %197 : vector<1x256xf32> to vector<8x256xf32>
    %199 = arith.addf %196, %198 : vector<8x256xf32>
    %200 = vector.extract_strided_slice %4 {offsets = [0, 768], sizes = [256, 128], strides = [1, 1]} : vector<256x896xbf16> to vector<256x128xbf16>
    %201 = arith.truncf %199 : vector<8x256xf32> to vector<8x256xbf16>
    %cst_47 = arith.constant dense<0.000000e+00> : vector<8x128xf32>
    %202 = tpu.matmul %201, %200, %cst_47 {dimension_numbers = #tpu.dot_dimension_numbers<[1], [0], [0], [1], [0, 0, 1, 1], [], []>} : vector<8x256xbf16>, vector<256x128xbf16>, vector<8x128xf32> -> vector<8x128xf32>
    %203 = vector.extract_strided_slice %6 {offsets = [14, 0], sizes = [1, 128], strides = [1, 1]} : vector<22x1024xf32> to vector<1x128xf32>
    %204 = vector.broadcast %203 : vector<1x128xf32> to vector<8x128xf32>
    %205 = arith.addf %202, %204 : vector<8x128xf32>
    %206 = vector.extract_strided_slice %46 {offsets = [0, 768], sizes = [8, 128], strides = [1, 1]} : vector<8x1024xf32> to vector<8x128xf32>
    %207 = arith.addf %205, %206 : vector<8x128xf32>
    %208 = vector.extract_strided_slice %5 {offsets = [0, 256], sizes = [128, 128], strides = [1, 1]} : vector<128x896xbf16> to vector<128x128xbf16>
    %209 = arith.truncf %207 : vector<8x128xf32> to vector<8x128xbf16>
    %cst_48 = arith.constant dense<0.000000e+00> : vector<8x128xf32>
    %210 = tpu.matmul %209, %208, %cst_48 {dimension_numbers = #tpu.dot_dimension_numbers<[1], [0], [0], [1], [0, 0, 1, 1], [], []>} : vector<8x128xbf16>, vector<128x128xbf16>, vector<8x128xf32> -> vector<8x128xf32>
    %211 = vector.extract_strided_slice %5 {offsets = [0, 384], sizes = [128, 128], strides = [1, 1]} : vector<128x896xbf16> to vector<128x128xbf16>
    %212 = arith.truncf %81 : vector<8x128xf32> to vector<8x128xbf16>
    %cst_49 = arith.constant dense<0.000000e+00> : vector<8x128xf32>
    %213 = tpu.matmul %212, %211, %cst_49 {dimension_numbers = #tpu.dot_dimension_numbers<[1], [0], [0], [1], [0, 0, 1, 1], [], []>} : vector<8x128xbf16>, vector<128x128xbf16>, vector<8x128xf32> -> vector<8x128xf32>
    %214 = arith.addf %210, %213 : vector<8x128xf32>
    %215 = vector.extract_strided_slice %6 {offsets = [15, 0], sizes = [1, 128], strides = [1, 1]} : vector<22x1024xf32> to vector<1x128xf32>
    %216 = vector.broadcast %215 : vector<1x128xf32> to vector<8x128xf32>
    %217 = arith.addf %214, %216 : vector<8x128xf32>
    %218 = arith.negf %217 : vector<8x128xf32>
    %219 = math.exp %218 : vector<8x128xf32>
    %cst_50 = arith.constant 1.000000e+00 : f32
    %220 = vector.broadcast %cst_50 : f32 to vector<8x128xf32>
    %221 = arith.addf %220, %219 : vector<8x128xf32>
    %222 = arith.divf %220, %221 : vector<8x128xf32>
    %223 = arith.mulf %217, %222 : vector<8x128xf32>
    %cst_51 = arith.constant dense<0.000000e+00> : vector<8xf32>
    %224 = vector.multi_reduction <add>, %223, %cst_51 [1] : vector<8x128xf32> to vector<8xf32>
    %225 = vector.shape_cast %224 : vector<8xf32> to vector<8x1xf32>
    %cst_52 = arith.constant 1.280000e+02 : f32
    %226 = vector.broadcast %cst_52 : f32 to vector<8x1xf32>
    %227 = arith.divf %225, %226 : vector<8x1xf32>
    %228 = vector.broadcast %227 : vector<8x1xf32> to vector<8x128xf32>
    %229 = arith.subf %223, %228 : vector<8x128xf32>
    %230 = arith.mulf %229, %229 : vector<8x128xf32>
    %cst_53 = arith.constant dense<0.000000e+00> : vector<8xf32>
    %231 = vector.multi_reduction <add>, %230, %cst_53 [1] : vector<8x128xf32> to vector<8xf32>
    %232 = vector.shape_cast %231 : vector<8xf32> to vector<8x1xf32>
    %cst_54 = arith.constant 1.280000e+02 : f32
    %233 = vector.broadcast %cst_54 : f32 to vector<8x1xf32>
    %234 = arith.divf %232, %233 : vector<8x1xf32>
    %235 = vector.broadcast %227 : vector<8x1xf32> to vector<8x128xf32>
    %236 = arith.subf %223, %235 : vector<8x128xf32>
    %cst_55 = arith.constant 9.99999974E-6 : f32
    %237 = vector.broadcast %cst_55 : f32 to vector<8x1xf32>
    %238 = arith.addf %234, %237 : vector<8x1xf32>
    %239 = math.rsqrt %238 : vector<8x1xf32>
    %240 = vector.broadcast %239 : vector<8x1xf32> to vector<8x128xf32>
    %241 = arith.mulf %236, %240 : vector<8x128xf32>
    %242 = vector.extract_strided_slice %6 {offsets = [16, 0], sizes = [1, 128], strides = [1, 1]} : vector<22x1024xf32> to vector<1x128xf32>
    %243 = vector.broadcast %242 : vector<1x128xf32> to vector<8x128xf32>
    %244 = arith.mulf %241, %243 : vector<8x128xf32>
    %245 = vector.extract_strided_slice %6 {offsets = [17, 0], sizes = [1, 128], strides = [1, 1]} : vector<22x1024xf32> to vector<1x128xf32>
    %246 = vector.broadcast %245 : vector<1x128xf32> to vector<8x128xf32>
    %247 = arith.addf %244, %246 : vector<8x128xf32>
    %248 = vector.extract_strided_slice %46 {offsets = [0, 896], sizes = [8, 128], strides = [1, 1]} : vector<8x1024xf32> to vector<8x128xf32>
    %249 = arith.addf %247, %248 : vector<8x128xf32>
    %250 = vector.extract_strided_slice %5 {offsets = [0, 512], sizes = [128, 64], strides = [1, 1]} : vector<128x896xbf16> to vector<128x64xbf16>
    %251 = arith.truncf %249 : vector<8x128xf32> to vector<8x128xbf16>
    %cst_56 = arith.constant dense<0.000000e+00> : vector<8x64xf32>
    %252 = tpu.matmul %251, %250, %cst_56 {dimension_numbers = #tpu.dot_dimension_numbers<[1], [0], [0], [1], [0, 0, 1, 1], [], []>} : vector<8x128xbf16>, vector<128x64xbf16>, vector<8x64xf32> -> vector<8x64xf32>
    %253 = vector.extract_strided_slice %5 {offsets = [0, 576], sizes = [128, 64], strides = [1, 1]} : vector<128x896xbf16> to vector<128x64xbf16>
    %254 = arith.truncf %81 : vector<8x128xf32> to vector<8x128xbf16>
    %cst_57 = arith.constant dense<0.000000e+00> : vector<8x64xf32>
    %255 = tpu.matmul %254, %253, %cst_57 {dimension_numbers = #tpu.dot_dimension_numbers<[1], [0], [0], [1], [0, 0, 1, 1], [], []>} : vector<8x128xbf16>, vector<128x64xbf16>, vector<8x64xf32> -> vector<8x64xf32>
    %256 = arith.addf %252, %255 : vector<8x64xf32>
    %257 = vector.extract_strided_slice %6 {offsets = [18, 0], sizes = [1, 64], strides = [1, 1]} : vector<22x1024xf32> to vector<1x64xf32>
    %258 = vector.broadcast %257 : vector<1x64xf32> to vector<8x64xf32>
    %259 = arith.addf %256, %258 : vector<8x64xf32>
    %260 = arith.negf %259 : vector<8x64xf32>
    %261 = math.exp %260 : vector<8x64xf32>
    %cst_58 = arith.constant 1.000000e+00 : f32
    %262 = vector.broadcast %cst_58 : f32 to vector<8x64xf32>
    %263 = arith.addf %262, %261 : vector<8x64xf32>
    %264 = arith.divf %262, %263 : vector<8x64xf32>
    %265 = arith.mulf %259, %264 : vector<8x64xf32>
    %cst_59 = arith.constant dense<0.000000e+00> : vector<8xf32>
    %266 = vector.multi_reduction <add>, %265, %cst_59 [1] : vector<8x64xf32> to vector<8xf32>
    %267 = vector.shape_cast %266 : vector<8xf32> to vector<8x1xf32>
    %cst_60 = arith.constant 6.400000e+01 : f32
    %268 = vector.broadcast %cst_60 : f32 to vector<8x1xf32>
    %269 = arith.divf %267, %268 : vector<8x1xf32>
    %270 = vector.broadcast %269 : vector<8x1xf32> to vector<8x64xf32>
    %271 = arith.subf %265, %270 : vector<8x64xf32>
    %272 = arith.mulf %271, %271 : vector<8x64xf32>
    %cst_61 = arith.constant dense<0.000000e+00> : vector<8xf32>
    %273 = vector.multi_reduction <add>, %272, %cst_61 [1] : vector<8x64xf32> to vector<8xf32>
    %274 = vector.shape_cast %273 : vector<8xf32> to vector<8x1xf32>
    %cst_62 = arith.constant 6.400000e+01 : f32
    %275 = vector.broadcast %cst_62 : f32 to vector<8x1xf32>
    %276 = arith.divf %274, %275 : vector<8x1xf32>
    %277 = vector.broadcast %269 : vector<8x1xf32> to vector<8x64xf32>
    %278 = arith.subf %265, %277 : vector<8x64xf32>
    %cst_63 = arith.constant 9.99999974E-6 : f32
    %279 = vector.broadcast %cst_63 : f32 to vector<8x1xf32>
    %280 = arith.addf %276, %279 : vector<8x1xf32>
    %281 = math.rsqrt %280 : vector<8x1xf32>
    %282 = vector.broadcast %281 : vector<8x1xf32> to vector<8x64xf32>
    %283 = arith.mulf %278, %282 : vector<8x64xf32>
    %284 = vector.extract_strided_slice %6 {offsets = [19, 0], sizes = [1, 64], strides = [1, 1]} : vector<22x1024xf32> to vector<1x64xf32>
    %285 = vector.broadcast %284 : vector<1x64xf32> to vector<8x64xf32>
    %286 = arith.mulf %283, %285 : vector<8x64xf32>
    %287 = vector.extract_strided_slice %6 {offsets = [20, 0], sizes = [1, 64], strides = [1, 1]} : vector<22x1024xf32> to vector<1x64xf32>
    %288 = vector.broadcast %287 : vector<1x64xf32> to vector<8x64xf32>
    %289 = arith.addf %286, %288 : vector<8x64xf32>
    %290 = vector.extract_strided_slice %5 {offsets = [0, 768], sizes = [64, 3], strides = [1, 1]} : vector<128x896xbf16> to vector<64x3xbf16>
    %291 = arith.extf %290 : vector<64x3xbf16> to vector<64x3xf32>
    %cst_64 = arith.constant dense<0.000000e+00> : vector<8x3xf32>
    %292 = tpu.matmul %289, %291, %cst_64 {dimension_numbers = #tpu.dot_dimension_numbers<[1], [0], [0], [1], [0, 0, 1, 1], [], []>} : vector<8x64xf32>, vector<64x3xf32>, vector<8x3xf32> -> vector<8x3xf32>
    %293 = vector.extract_strided_slice %6 {offsets = [21, 0], sizes = [1, 3], strides = [1, 1]} : vector<22x1024xf32> to vector<1x3xf32>
    %294 = vector.broadcast %293 : vector<1x3xf32> to vector<8x3xf32>
    %295 = arith.addf %292, %294 : vector<8x3xf32>
    %c0_65 = arith.constant 0 : index
    %c0_66 = arith.constant 0 : index
    %296 = vector.load %arg7[%c0_65, %c0_66] : memref<8x3xf32, #tpu.memory_space<vmem>>, vector<8x3xf32>
    tpu.vector_store %arg7[%c0_65, %c0_66], %295 {strides = array<i32>} : memref<8x3xf32, #tpu.memory_space<vmem>>, vector<8x3xf32>,
    return
  }
}

</mosaic_0001>

<llo_original>
// kernel: ddpm_forward.1
$region0: #{ddpm_forward.1}
  #allocation0 [shape = 'u32[]', space=smem, size = 0x4, offset = 0x4, fixed_abs, tag = 'smem constant byte address 0x4 - core index']
  #allocation1 [shape = 'u32[144,128]{1,0:T(1,128)}', space=vmem, size = 0x12000, scoped, tag = 'internal scratch']
  %s0 = inlined_call_operand.vmem [shape: f32[8,3], index: 0, kind: input, shape index: {}]
  %s1 = inlined_call_operand.vmem [shape: f32[8,1], index: 1, kind: input, shape index: {}]
  %s2 = inlined_call_operand.hbm [shape: bf16[512,1024], index: 2, kind: input, shape index: {}]
  %s3 = inlined_call_operand.hbm [shape: bf16[512,1024], index: 3, kind: input, shape index: {}]
  %s4 = inlined_call_operand.hbm [shape: bf16[256,896], index: 4, kind: input, shape index: {}]
  %s5 = inlined_call_operand.hbm [shape: bf16[128,896], index: 5, kind: input, shape index: {}]
  %s6 = inlined_call_operand.hbm [shape: f32[22,1024], index: 6, kind: input, shape index: {}]
  %s7 = inlined_call_operand.vmem [shape: f32[8,3], index: 7, kind: output, shape index: {}]
  %s8 = sld [smem:[#allocation0]]
  $region58: #{ddpm_forward.1} parent=0
    _
  %s10 = ssub.s32 1, %s8
  %s11 = scalar_select 0, %s10, %s8
  $region1: #{ddpm_forward.1} parent=0
    #allocation2 [shape = 'u8[1048576]{0}', space=vmem, size = 0x100000, scoped, tag = 'input window, operand 2, single buffered']
    #allocation3 [shape = 's32[1]{0}', space=sflag, size = 0x4, scoped, tag = 'scoped memory for ddpm_forward.1']
    #allocation4 [shape = 'u8[1048576]{0}', space=vmem, size = 0x100000, scoped, tag = 'input window, operand 3, single buffered']
    #allocation5 [shape = 's32[1]{0}', space=sflag, size = 0x4, scoped, tag = 'scoped memory for ddpm_forward.1']
    #allocation6 [shape = 'u8[458752]{0}', space=vmem, size = 0x70000, scoped, tag = 'input window, operand 4, single buffered']
    #allocation7 [shape = 'u8[229376]{0}', space=vmem, size = 0x38000, scoped, tag = 'input window, operand 5, single buffered']
    #allocation8 [shape = 's32[1]{0}', space=sflag, size = 0x4, scoped, tag = 'scoped memory for ddpm_forward.1']
    #allocation9 [shape = 'u8[98304]{0}', space=vmem, size = 0x18000, scoped, tag = 'input window, operand 6, single buffered']
    %12 = vsyncpa [#allocation3], 0
    %13 = vsyncpa [#allocation5], 0
    %14 = vsyncpa [#allocation8], 0
    // Predicated region
    $region2: #{ddpm_forward.1} parent=1 // pred_check
      _
    $region3: #{ddpm_forward.1} parent=1 // pred_check_branch
      %16 = sbr.rel (0) target = $region5
    $region4: #{ddpm_forward.1} parent=1 // pred_region
      _
    $region5: #{ddpm_forward.1} parent=1 // pred_fallthru
      _
    // Predicated region
    $region6: #{ddpm_forward.1} parent=1 // pred_check
      _
    $region7: #{ddpm_forward.1} parent=1 // pred_check_branch
      %18 = sbr.rel (0) target = $region9
    $region8: #{ddpm_forward.1} parent=1 // pred_region
      _
    $region9: #{ddpm_forward.1} parent=1 // pred_fallthru
      _
    // Predicated region
    $region10: #{ddpm_forward.1} parent=1 // pred_check
      _
    $region11: #{ddpm_forward.1} parent=1 // pred_check_branch
      %20 = sbr.rel (0) target = $region13
    $region12: #{ddpm_forward.1} parent=1 // pred_region
      %s22 = ssub.s32 32768, 32768
      %23 = vsyncadd [#allocation3], %s22
      %s24 = sshll.u32 [#allocation2], 4
      %s25 = int_to_ptr.vmem [resolvable:$true] %s24
      %30 = dma.hbm_to_vmem [thread:$0]  %s2, 32768, %s25, [#allocation3], 512, 512, 32
    $region13: #{ddpm_forward.1} parent=1 // pred_fallthru
      _
    // Predicated region
    $region14: #{ddpm_forward.1} parent=1 // pred_check
      _
    $region15: #{ddpm_forward.1} parent=1 // pred_check_branch
      %32 = sbr.rel (0) target = $region17
    $region16: #{ddpm_forward.1} parent=1 // pred_region
      %s34 = ssub.s32 32768, 32768
      %35 = vsyncadd [#allocation5], %s34
      %s36 = sshll.u32 [#allocation4], 4
      %s37 = int_to_ptr.vmem [resolvable:$true] %s36
      %42 = dma.hbm_to_vmem [thread:$0]  %s3, 32768, %s37, [#allocation5], 512, 512, 32
    $region17: #{ddpm_forward.1} parent=1 // pred_fallthru
      _
    // Predicated region
    $region18: #{ddpm_forward.1} parent=1 // pred_check
      _
    $region19: #{ddpm_forward.1} parent=1 // pred_check_branch
      %44 = sbr.rel (0) target = $region21
    $region20: #{ddpm_forward.1} parent=1 // pred_region
      %s46 = ssub.s32 14336, 14336
      %47 = vsyncadd [#allocation5], %s46
      %s48 = sshll.u32 [#allocation6], 4
      %s49 = int_to_ptr.vmem [resolvable:$true] %s48
      %54 = dma.hbm_to_vmem [thread:$0]  %s4, 14336, %s49, [#allocation5], 448, 448, 28
    $region21: #{ddpm_forward.1} parent=1 // pred_fallthru
      _
    // Predicated region
    $region22: #{ddpm_forward.1} parent=1 // pred_check
      _
    $region23: #{ddpm_forward.1} parent=1 // pred_check_branch
      %56 = sbr.rel (0) target = $region25
    $region24: #{ddpm_forward.1} parent=1 // pred_region
      %s58 = ssub.s32 7168, 7168
      %59 = vsyncadd [#allocation8], %s58
      %s60 = sshll.u32 [#allocation7], 4
      %s61 = int_to_ptr.vmem [resolvable:$true] %s60
      %66 = dma.hbm_to_vmem [thread:$0]  %s5, 7168, %s61, [#allocation8], 448, 448, 28
    $region25: #{ddpm_forward.1} parent=1 // pred_fallthru
      _
    // Predicated region
    $region26: #{ddpm_forward.1} parent=1 // pred_check
      _
    $region27: #{ddpm_forward.1} parent=1 // pred_check_branch
      %68 = sbr.rel (0) target = $region29
    $region28: #{ddpm_forward.1} parent=1 // pred_region
      %s70 = ssub.s32 3072, 3072
      %71 = vsyncadd [#allocation8], %s70
      %s72 = sshll.u32 [#allocation9], 4
      %s73 = int_to_ptr.vmem [resolvable:$true] %s72
      %78 = dma.hbm_to_vmem [thread:$0]  %s6, 3072, %s73, [#allocation8], 1024, 1024, 64
    $region29: #{ddpm_forward.1} parent=1 // pred_fallthru
      _
    // Predicated region
    $region30: #{ddpm_forward.1} parent=1 // pred_check
      _
    $region31: #{ddpm_forward.1} parent=1 // pred_check_branch
      %80 = sbr.rel (0) target = $region33
    $region32: #{ddpm_forward.1} parent=1 // pred_region
      %81 = dma.done [#allocation3], 32768
    $region33: #{ddpm_forward.1} parent=1 // pred_fallthru
      _
    // Predicated region
    $region34: #{ddpm_forward.1} parent=1 // pred_check
      _
    $region35: #{ddpm_forward.1} parent=1 // pred_check_branch
      %83 = sbr.rel (0) target = $region37
    $region36: #{ddpm_forward.1} parent=1 // pred_region
      %84 = dma.done [#allocation5], 32768
    $region37: #{ddpm_forward.1} parent=1 // pred_fallthru
      _
    // Predicated region
    $region38: #{ddpm_forward.1} parent=1 // pred_check
      _
    $region39: #{ddpm_forward.1} parent=1 // pred_check_branch
      %86 = sbr.rel (0) target = $region41
    $region40: #{ddpm_forward.1} parent=1 // pred_region
      %87 = dma.done [#allocation5], 14336
    $region41: #{ddpm_forward.1} parent=1 // pred_fallthru
      _
    // Predicated region
    $region42: #{ddpm_forward.1} parent=1 // pred_check
      _
    $region43: #{ddpm_forward.1} parent=1 // pred_check_branch
      %89 = sbr.rel (0) target = $region45
    $region44: #{ddpm_forward.1} parent=1 // pred_region
      %90 = dma.done [#allocation8], 7168
    $region45: #{ddpm_forward.1} parent=1 // pred_fallthru
      _
    // Predicated region
    $region46: #{ddpm_forward.1} parent=1 // pred_check
      _
    $region47: #{ddpm_forward.1} parent=1 // pred_check_branch
      %92 = sbr.rel (0) target = $region49
    $region48: #{ddpm_forward.1} parent=1 // pred_region
      %93 = dma.done [#allocation8], 3072
    $region49: #{ddpm_forward.1} parent=1 // pred_fallthru
      _
    %v95 = vld [vmem:[%s0] sm:$0xff]
    %v96 = vld [vmem:[%s1] sm:$0xff]
    %v97 = vld [vmem:[#allocation2] sm:$0xff]
    %v98 = vld [vmem:[#allocation2 + $0x8] sm:$0xff]
    %v99 = vld [vmem:[#allocation2 + $0x10] sm:$0xff]
    %v100 = vld [vmem:[#allocation2 + $0x18] sm:$0xff]
    %v101 = vld [vmem:[#allocation2 + $0x20] sm:$0xff]
    %v102 = vld [vmem:[#allocation2 + $0x28] sm:$0xff]
    %v103 = vld [vmem:[#allocation2 + $0x30] sm:$0xff]
    %v104 = vld [vmem:[#allocation2 + $0x38] sm:$0xff]
    %v105 = vld [vmem:[#allocation2 + $0x40] sm:$0xff]
    %v106 = vld [vmem:[#allocation2 + $0x48] sm:$0xff]
    %v107 = vld [vmem:[#allocation2 + $0x50] sm:$0xff]
    %v108 = vld [vmem:[#allocation2 + $0x58] sm:$0xff]
    %v109 = vld [vmem:[#allocation2 + $0x60] sm:$0xff]
    %v110 = vld [vmem:[#allocation2 + $0x68] sm:$0xff]
    %v111 = vld [vmem:[#allocation2 + $0x70] sm:$0xff]
    %v112 = vld [vmem:[#allocation2 + $0x78] sm:$0xff]
    %v113 = vld [vmem:[#allocation2 + $0x80] sm:$0xff]
    %v114 = vld [vmem:[#allocation2 + $0x88] sm:$0xff]
    %v115 = vld [vmem:[#allocation2 + $0x90] sm:$0xff]
    %v116 = vld [vmem:[#allocation2 + $0x98] sm:$0xff]
    %v117 = vld [vmem:[#allocation2 + $0xa0] sm:$0xff]
    %v118 = vld [vmem:[#allocation2 + $0xa8] sm:$0xff]
    %v119 = vld [vmem:[#allocation2 + $0xb0] sm:$0xff]
    %v120 = vld [vmem:[#allocation2 + $0xb8] sm:$0xff]
    %v121 = vld [vmem:[#allocation2 + $0xc0] sm:$0xff]
    %v122 = vld [vmem:[#allocation2 + $0xc8] sm:$0xff]
    %v123 = vld [vmem:[#allocation2 + $0xd0] sm:$0xff]
    %v124 = vld [vmem:[#allocation2 + $0xd8] sm:$0xff]
    %v125 = vld [vmem:[#allocation2 + $0xe0] sm:$0xff]
    %v126 = vld [vmem:[#allocation2 + $0xe8] sm:$0xff]
    %v127 = vld [vmem:[#allocation2 + $0xf0] sm:$0xff]
    %v128 = vld [vmem:[#allocation2 + $0xf8] sm:$0xff]
    %v129 = vld [vmem:[#allocation2 + $0x100] sm:$0xff]
    %v130 = vld [vmem:[#allocation2 + $0x108] sm:$0xff]
    %v131 = vld [vmem:[#allocation2 + $0x110] sm:$0xff]
    %v132 = vld [vmem:[#allocation2 + $0x118] sm:$0xff]
    %v133 = vld [vmem:[#allocation2 + $0x120] sm:$0xff]
    %v134 = vld [vmem:[#allocation2 + $0x128] sm:$0xff]
    %v135 = vld [vmem:[#allocation2 + $0x130] sm:$0xff]
    %v136 = vld [vmem:[#allocation2 + $0x138] sm:$0xff]
    %v137 = vld [vmem:[#allocation2 + $0x140] sm:$0xff]
    %v138 = vld [vmem:[#allocation2 + $0x148] sm:$0xff]
    %v139 = vld [vmem:[#allocation2 + $0x150] sm:$0xff]
    %v140 = vld [vmem:[#allocation2 + $0x158] sm:$0xff]
    %v141 = vld [vmem:[#allocation2 + $0x160] sm:$0xff]
    %v142 = vld [vmem:[#allocation2 + $0x168] sm:$0xff]
    %v143 = vld [vmem:[#allocation2 + $0x170] sm:$0xff]
    %v144 = vld [vmem:[#allocation2 + $0x178] sm:$0xff]
    %v145 = vld [vmem:[#allocation2 + $0x180] sm:$0xff]
    %v146 = vld [vmem:[#allocation2 + $0x188] sm:$0xff]
    %v147 = vld [vmem:[#allocation2 + $0x190] sm:$0xff]
    %v148 = vld [vmem:[#allocation2 + $0x198] sm:$0xff]
    %v149 = vld [vmem:[#allocation2 + $0x1a0] sm:$0xff]
    %v150 = vld [vmem:[#allocation2 + $0x1a8] sm:$0xff]
    %v151 = vld [vmem:[#allocation2 + $0x1b0] sm:$0xff]
    %v152 = vld [vmem:[#allocation2 + $0x1b8] sm:$0xff]
    %v153 = vld [vmem:[#allocation2 + $0x1c0] sm:$0xff]
    %v154 = vld [vmem:[#allocation2 + $0x1c8] sm:$0xff]
    %v155 = vld [vmem:[#allocation2 + $0x1d0] sm:$0xff]
    %v156 = vld [vmem:[#allocation2 + $0x1d8] sm:$0xff]
    %v157 = vld [vmem:[#allocation2 + $0x1e0] sm:$0xff]
    %v158 = vld [vmem:[#allocation2 + $0x1e8] sm:$0xff]
    %v159 = vld [vmem:[#allocation2 + $0x1f0] sm:$0xff]
    %v160 = vld [vmem:[#allocation2 + $0x1f8] sm:$0xff]
    %v161 = vld [vmem:[#allocation2 + $0x200] sm:$0xff]
    %v162 = vld [vmem:[#allocation2 + $0x208] sm:$0xff]
    %v163 = vld [vmem:[#allocation2 + $0x210] sm:$0xff]
    %v164 = vld [vmem:[#allocation2 + $0x218] sm:$0xff]
    %v165 = vld [vmem:[#allocation2 + $0x220] sm:$0xff]
    %v166 = vld [vmem:[#allocation2 + $0x228] sm:$0xff]
    %v167 = vld [vmem:[#allocation2 + $0x230] sm:$0xff]
    %v168 = vld [vmem:[#allocation2 + $0x238] sm:$0xff]
    %v169 = vld [vmem:[#allocation2 + $0x240] sm:$0xff]
    %v170 = vld [vmem:[#allocation2 + $0x248] sm:$0xff]
    %v171 = vld [vmem:[#allocation2 + $0x250] sm:$0xff]
    %v172 = vld [vmem:[#allocation2 + $0x258] sm:$0xff]
    %v173 = vld [vmem:[#allocation2 + $0x260] sm:$0xff]
    %v174 = vld [vmem:[#allocation2 + $0x268] sm:$0xff]
    %v175 = vld [vmem:[#allocation2 + $0x270] sm:$0xff]
    %v176 = vld [vmem:[#allocation2 + $0x278] sm:$0xff]
    %v177 = vld [vmem:[#allocation2 + $0x280] sm:$0xff]
    %v178 = vld [vmem:[#allocation2 + $0x288] sm:$0xff]
    %v179 = vld [vmem:[#allocation2 + $0x290] sm:$0xff]
    %v180 = vld [vmem:[#allocation2 + $0x298] sm:$0xff]
    %v181 = vld [vmem:[#allocation2 + $0x2a0] sm:$0xff]
    %v182 = vld [vmem:[#allocation2 + $0x2a8] sm:$0xff]
    %v183 = vld [vmem:[#allocation2 + $0x2b0] sm:$0xff]
    %v184 = vld [vmem:[#allocation2 + $0x2b8] sm:$0xff]
    %v185 = vld [vmem:[#allocation2 + $0x2c0] sm:$0xff]
    %v186 = vld [vmem:[#allocation2 + $0x2c8] sm:$0xff]
    %v187 = vld [vmem:[#allocation2 + $0x2d0] sm:$0xff]
    %v188 = vld [vmem:[#allocation2 + $0x2d8] sm:$0xff]
    %v189 = vld [vmem:[#allocation2 + $0x2e0] sm:$0xff]
    %v190 = vld [vmem:[#allocation2 + $0x2e8] sm:$0xff]
    %v191 = vld [vmem:[#allocation2 + $0x2f0] sm:$0xff]
    %v192 = vld [vmem:[#allocation2 + $0x2f8] sm:$0xff]
    %v193 = vld [vmem:[#allocation2 + $0x300] sm:$0xff]
    %v194 = vld [vmem:[#allocation2 + $0x308] sm:$0xff]
    %v195 = vld [vmem:[#allocation2 + $0x310] sm:$0xff]
    %v196 = vld [vmem:[#allocation2 + $0x318] sm:$0xff]
    %v197 = vld [vmem:[#allocation2 + $0x320] sm:$0xff]
    %v198 = vld [vmem:[#allocation2 + $0x328] sm:$0xff]
    %v199 = vld [vmem:[#allocation2 + $0x330] sm:$0xff]
    %v200 = vld [vmem:[#allocation2 + $0x338] sm:$0xff]
    %v201 = vld [vmem:[#allocation2 + $0x340] sm:$0xff]
    %v202 = vld [vmem:[#allocation2 + $0x348] sm:$0xff]
    %v203 = vld [vmem:[#allocation2 + $0x350] sm:$0xff]
    %v204 = vld [vmem:[#allocation2 + $0x358] sm:$0xff]
    %v205 = vld [vmem:[#allocation2 + $0x360] sm:$0xff]
    %v206 = vld [vmem:[#allocation2 + $0x368] sm:$0xff]
    %v207 = vld [vmem:[#allocation2 + $0x370] sm:$0xff]
    %v208 = vld [vmem:[#allocation2 + $0x378] sm:$0xff]
    %v209 = vld [vmem:[#allocation2 + $0x380] sm:$0xff]
    %v210 = vld [vmem:[#allocation2 + $0x388] sm:$0xff]
    %v211 = vld [vmem:[#allocation2 + $0x390] sm:$0xff]
    %v212 = vld [vmem:[#allocation2 + $0x398] sm:$0xff]
    %v213 = vld [vmem:[#allocation2 + $0x3a0] sm:$0xff]
    %v214 = vld [vmem:[#allocation2 + $0x3a8] sm:$0xff]
    %v215 = vld [vmem:[#allocation2 + $0x3b0] sm:$0xff]
    %v216 = vld [vmem:[#allocation2 + $0x3b8] sm:$0xff]
    %v217 = vld [vmem:[#allocation2 + $0x3c0] sm:$0xff]
    %v218 = vld [vmem:[#allocation2 + $0x3c8] sm:$0xff]
    %v219 = vld [vmem:[#allocation2 + $0x3d0] sm:$0xff]
    %v220 = vld [vmem:[#allocation2 + $0x3d8] sm:$0xff]
    %v221 = vld [vmem:[#allocation2 + $0x3e0] sm:$0xff]
    %v222 = vld [vmem:[#allocation2 + $0x3e8] sm:$0xff]
    %v223 = vld [vmem:[#allocation2 + $0x3f0] sm:$0xff]
    %v224 = vld [vmem:[#allocation2 + $0x3f8] sm:$0xff]
    %v225 = vld [vmem:[#allocation2 + $0x400] sm:$0xff]
    %v226 = vld [vmem:[#allocation2 + $0x408] sm:$0xff]
    %v227 = vld [vmem:[#allocation2 + $0x410] sm:$0xff]
    %v228 = vld [vmem:[#allocation2 + $0x418] sm:$0xff]
    %v229 = vld [vmem:[#allocation2 + $0x420] sm:$0xff]
    %v230 = vld [vmem:[#allocation2 + $0x428] sm:$0xff]
    %v231 = vld [vmem:[#allocation2 + $0x430] sm:$0xff]
    %v232 = vld [vmem:[#allocation2 + $0x438] sm:$0xff]
    %v233 = vld [vmem:[#allocation2 + $0x440] sm:$0xff]
    %v234 = vld [vmem:[#allocation2 + $0x448] sm:$0xff]
    %v235 = vld [vmem:[#allocation2 + $0x450] sm:$0xff]
    %v236 = vld [vmem:[#allocation2 + $0x458] sm:$0xff]
    %v237 = vld [vmem:[#allocation2 + $0x460] sm:$0xff]
    %v238 = vld [vmem:[#allocation2 + $0x468] sm:$0xff]
    %v239 = vld [vmem:[#allocation2 + $0x470] sm:$0xff]
    %v240 = vld [vmem:[#allocation2 + $0x478] sm:$0xff]
    %v241 = vld [vmem:[#allocation2 + $0x480] sm:$0xff]
    %v242 = vld [vmem:[#allocation2 + $0x488] sm:$0xff]
    %v243 = vld [vmem:[#allocation2 + $0x490] sm:$0xff]
    %v244 = vld [vmem:[#allocation2 + $0x498] sm:$0xff]
    %v245 = vld [vmem:[#allocation2 + $0x4a0] sm:$0xff]
    %v246 = vld [vmem:[#allocation2 + $0x4a8] sm:$0xff]
    %v247 = vld [vmem:[#allocation2 + $0x4b0] sm:$0xff]
    %v248 = vld [vmem:[#allocation2 + $0x4b8] sm:$0xff]
    %v249 = vld [vmem:[#allocation2 + $0x4c0] sm:$0xff]
    %v250 = vld [vmem:[#allocation2 + $0x4c8] sm:$0xff]
    %v251 = vld [vmem:[#allocation2 + $0x4d0] sm:$0xff]
    %v252 = vld [vmem:[#allocation2 + $0x4d8] sm:$0xff]
    %v253 = vld [vmem:[#allocation2 + $0x4e0] sm:$0xff]
    %v254 = vld [vmem:[#allocation2 + $0x4e8] sm:$0xff]
    %v255 = vld [vmem:[#allocation2 + $0x4f0] sm:$0xff]
    %v256 = vld [vmem:[#allocation2 + $0x4f8] sm:$0xff]
    %v257 = vld [vmem:[#allocation2 + $0x500] sm:$0xff]
    %v258 = vld [vmem:[#allocation2 + $0x508] sm:$0xff]
    %v259 = vld [vmem:[#allocation2 + $0x510] sm:$0xff]
    %v260 = vld [vmem:[#allocation2 + $0x518] sm:$0xff]
    %v261 = vld [vmem:[#allocation2 + $0x520] sm:$0xff]
    %v262 = vld [vmem:[#allocation2 + $0x528] sm:$0xff]
    %v263 = vld [vmem:[#allocation2 + $0x530] sm:$0xff]
    %v264 = vld [vmem:[#allocation2 + $0x538] sm:$0xff]
    %v265 = vld [vmem:[#allocation2 + $0x540] sm:$0xff]
    %v266 = vld [vmem:[#allocation2 + $0x548] sm:$0xff]
    %v267 = vld [vmem:[#allocation2 + $0x550] sm:$0xff]
    %v268 = vld [vmem:[#allocation2 + $0x558] sm:$0xff]
    %v269 = vld [vmem:[#allocation2 + $0x560] sm:$0xff]
    %v270 = vld [vmem:[#allocation2 + $0x568] sm:$0xff]
    %v271 = vld [vmem:[#allocation2 + $0x570] sm:$0xff]
    %v272 = vld [vmem:[#allocation2 + $0x578] sm:$0xff]
    %v273 = vld [vmem:[#allocation2 + $0x580] sm:$0xff]
    %v274 = vld [vmem:[#allocation2 + $0x588] sm:$0xff]
    %v275 = vld [vmem:[#allocation2 + $0x590] sm:$0xff]
    %v276 = vld [vmem:[#allocation2 + $0x598] sm:$0xff]
    %v277 = vld [vmem:[#allocation2 + $0x5a0] sm:$0xff]
    %v278 = vld [vmem:[#allocation2 + $0x5a8] sm:$0xff]
    %v279 = vld [vmem:[#allocation2 + $0x5b0] sm:$0xff]
    %v280 = vld [vmem:[#allocation2 + $0x5b8] sm:$0xff]
    %v281 = vld [vmem:[#allocation2 + $0x5c0] sm:$0xff]
    %v282 = vld [vmem:[#allocation2 + $0x5c8] sm:$0xff]
    %v283 = vld [vmem:[#allocation2 + $0x5d0] sm:$0xff]
    %v284 = vld [vmem:[#allocation2 + $0x5d8] sm:$0xff]
    %v285 = vld [vmem:[#allocation2 + $0x5e0] sm:$0xff]
    %v286 = vld [vmem:[#allocation2 + $0x5e8] sm:$0xff]
    %v287 = vld [vmem:[#allocation2 + $0x5f0] sm:$0xff]
    %v288 = vld [vmem:[#allocation2 + $0x5f8] sm:$0xff]
    %v289 = vld [vmem:[#allocation2 + $0x600] sm:$0xff]
    %v290 = vld [vmem:[#allocation2 + $0x608] sm:$0xff]
    %v291 = vld [vmem:[#allocation2 + $0x610] sm:$0xff]
    %v292 = vld [vmem:[#allocation2 + $0x618] sm:$0xff]
    %v293 = vld [vmem:[#allocation2 + $0x620] sm:$0xff]
    %v294 = vld [vmem:[#allocation2 + $0x628] sm:$0xff]
    %v295 = vld [vmem:[#allocation2 + $0x630] sm:$0xff]
    %v296 = vld [vmem:[#allocation2 + $0x638] sm:$0xff]
    %v297 = vld [vmem:[#allocation2 + $0x640] sm:$0xff]
    %v298 = vld [vmem:[#allocation2 + $0x648] sm:$0xff]
    %v299 = vld [vmem:[#allocation2 + $0x650] sm:$0xff]
    %v300 = vld [vmem:[#allocation2 + $0x658] sm:$0xff]
    %v301 = vld [vmem:[#allocation2 + $0x660] sm:$0xff]
    %v302 = vld [vmem:[#allocation2 + $0x668] sm:$0xff]
    %v303 = vld [vmem:[#allocation2 + $0x670] sm:$0xff]
    %v304 = vld [vmem:[#allocation2 + $0x678] sm:$0xff]
    %v305 = vld [vmem:[#allocation2 + $0x680] sm:$0xff]
    %v306 = vld [vmem:[#allocation2 + $0x688] sm:$0xff]
    %v307 = vld [vmem:[#allocation2 + $0x690] sm:$0xff]
    %v308 = vld [vmem:[#allocation2 + $0x698] sm:$0xff]
    %v309 = vld [vmem:[#allocation2 + $0x6a0] sm:$0xff]
    %v310 = vld [vmem:[#allocation2 + $0x6a8] sm:$0xff]
    %v311 = vld [vmem:[#allocation2 + $0x6b0] sm:$0xff]
    %v312 = vld [vmem:[#allocation2 + $0x6b8] sm:$0xff]
    %v313 = vld [vmem:[#allocation2 + $0x6c0] sm:$0xff]
    %v314 = vld [vmem:[#allocation2 + $0x6c8] sm:$0xff]
    %v315 = vld [vmem:[#allocation2 + $0x6d0] sm:$0xff]
    %v316 = vld [vmem:[#allocation2 + $0x6d8] sm:$0xff]
    %v317 = vld [vmem:[#allocation2 + $0x6e0] sm:$0xff]
    %v318 = vld [vmem:[#allocation2 + $0x6e8] sm:$0xff]
    %v319 = vld [vmem:[#allocation2 + $0x6f0] sm:$0xff]
    %v320 = vld [vmem:[#allocation2 + $0x6f8] sm:$0xff]
    %v321 = vld [vmem:[#allocation2 + $0x700] sm:$0xff]
    %v322 = vld [vmem:[#allocation2 + $0x708] sm:$0xff]
    %v323 = vld [vmem:[#allocation2 + $0x710] sm:$0xff]
    %v324 = vld [vmem:[#allocation2 + $0x718] sm:$0xff]
    %v325 = vld [vmem:[#allocation2 + $0x720] sm:$0xff]
    %v326 = vld [vmem:[#allocation2 + $0x728] sm:$0xff]
    %v327 = vld [vmem:[#allocation2 + $0x730] sm:$0xff]
    %v328 = vld [vmem:[#allocation2 + $0x738] sm:$0xff]
    %v329 = vld [vmem:[#allocation2 + $0x740] sm:$0xff]
    %v330 = vld [vmem:[#allocation2 + $0x748] sm:$0xff]
    %v331 = vld [vmem:[#allocation2 + $0x750] sm:$0xff]
    %v332 = vld [vmem:[#allocation2 + $0x758] sm:$0xff]
    %v333 = vld [vmem:[#allocation2 + $0x760] sm:$0xff]
    %v334 = vld [vmem:[#allocation2 + $0x768] sm:$0xff]
    %v335 = vld [vmem:[#allocation2 + $0x770] sm:$0xff]
    %v336 = vld [vmem:[#allocation2 + $0x778] sm:$0xff]
    %v337 = vld [vmem:[#allocation2 + $0x780] sm:$0xff]
    %v338 = vld [vmem:[#allocation2 + $0x788] sm:$0xff]
    %v339 = vld [vmem:[#allocation2 + $0x790] sm:$0xff]
    %v340 = vld [vmem:[#allocation2 + $0x798] sm:$0xff]
    %v341 = vld [vmem:[#allocation2 + $0x7a0] sm:$0xff]
    %v342 = vld [vmem:[#allocation2 + $0x7a8] sm:$0xff]
    %v343 = vld [vmem:[#allocation2 + $0x7b0] sm:$0xff]
    %v344 = vld [vmem:[#allocation2 + $0x7b8] sm:$0xff]
    %v345 = vld [vmem:[#allocation2 + $0x7c0] sm:$0xff]
    %v346 = vld [vmem:[#allocation2 + $0x7c8] sm:$0xff]
    %v347 = vld [vmem:[#allocation2 + $0x7d0] sm:$0xff]
    %v348 = vld [vmem:[#allocation2 + $0x7d8] sm:$0xff]
    %v349 = vld [vmem:[#allocation2 + $0x7e0] sm:$0xff]
    %v350 = vld [vmem:[#allocation2 + $0x7e8] sm:$0xff]
    %v351 = vld [vmem:[#allocation2 + $0x7f0] sm:$0xff]
    %v352 = vld [vmem:[#allocation2 + $0x7f8] sm:$0xff]
    %v353 = vld [vmem:[#allocation4] sm:$0xff]
    %v354 = vld [vmem:[#allocation4 + $0x8] sm:$0xff]
    %v355 = vld [vmem:[#allocation4 + $0x10] sm:$0xff]
    %v356 = vld [vmem:[#allocation4 + $0x18] sm:$0xff]
    %v357 = vld [vmem:[#allocation4 + $0x20] sm:$0xff]
    %v358 = vld [vmem:[#allocation4 + $0x28] sm:$0xff]
    %v359 = vld [vmem:[#allocation4 + $0x30] sm:$0xff]
    %v360 = vld [vmem:[#allocation4 + $0x38] sm:$0xff]
    %v361 = vld [vmem:[#allocation4 + $0x40] sm:$0xff]
    %v362 = vld [vmem:[#allocation4 + $0x48] sm:$0xff]
    %v363 = vld [vmem:[#allocation4 + $0x50] sm:$0xff]
    %v364 = vld [vmem:[#allocation4 + $0x58] sm:$0xff]
    %v365 = vld [vmem:[#allocation4 + $0x60] sm:$0xff]
    %v366 = vld [vmem:[#allocation4 + $0x68] sm:$0xff]
    %v367 = vld [vmem:[#allocation4 + $0x70] sm:$0xff]
    %v368 = vld [vmem:[#allocation4 + $0x78] sm:$0xff]
    %v369 = vld [vmem:[#allocation4 + $0x80] sm:$0xff]
    %v370 = vld [vmem:[#allocation4 + $0x88] sm:$0xff]
    %v371 = vld [vmem:[#allocation4 + $0x90] sm:$0xff]
    %v372 = vld [vmem:[#allocation4 + $0x98] sm:$0xff]
    %v373 = vld [vmem:[#allocation4 + $0xa0] sm:$0xff]
    %v374 = vld [vmem:[#allocation4 + $0xa8] sm:$0xff]
    %v375 = vld [vmem:[#allocation4 + $0xb0] sm:$0xff]
    %v376 = vld [vmem:[#allocation4 + $0xb8] sm:$0xff]
    %v377 = vld [vmem:[#allocation4 + $0xc0] sm:$0xff]
    %v378 = vld [vmem:[#allocation4 + $0xc8] sm:$0xff]
    %v379 = vld [vmem:[#allocation4 + $0xd0] sm:$0xff]
    %v380 = vld [vmem:[#allocation4 + $0xd8] sm:$0xff]
    %v381 = vld [vmem:[#allocation4 + $0xe0] sm:$0xff]
    %v382 = vld [vmem:[#allocation4 + $0xe8] sm:$0xff]
    %v383 = vld [vmem:[#allocation4 + $0xf0] sm:$0xff]
    %v384 = vld [vmem:[#allocation4 + $0xf8] sm:$0xff]
    %v385 = vld [vmem:[#allocation4 + $0x100] sm:$0xff]
    %v386 = vld [vmem:[#allocation4 + $0x108] sm:$0xff]
    %v387 = vld [vmem:[#allocation4 + $0x110] sm:$0xff]
    %v388 = vld [vmem:[#allocation4 + $0x118] sm:$0xff]
    %v389 = vld [vmem:[#allocation4 + $0x120] sm:$0xff]
    %v390 = vld [vmem:[#allocation4 + $0x128] sm:$0xff]
    %v391 = vld [vmem:[#allocation4 + $0x130] sm:$0xff]
    %v392 = vld [vmem:[#allocation4 + $0x138] sm:$0xff]
    %v393 = vld [vmem:[#allocation4 + $0x140] sm:$0xff]
    %v394 = vld [vmem:[#allocation4 + $0x148] sm:$0xff]
    %v395 = vld [vmem:[#allocation4 + $0x150] sm:$0xff]
    %v396 = vld [vmem:[#allocation4 + $0x158] sm:$0xff]
    %v397 = vld [vmem:[#allocation4 + $0x160] sm:$0xff]
    %v398 = vld [vmem:[#allocation4 + $0x168] sm:$0xff]
    %v399 = vld [vmem:[#allocation4 + $0x170] sm:$0xff]
    %v400 = vld [vmem:[#allocation4 + $0x178] sm:$0xff]
    %v401 = vld [vmem:[#allocation4 + $0x180] sm:$0xff]
    %v402 = vld [vmem:[#allocation4 + $0x188] sm:$0xff]
    %v403 = vld [vmem:[#allocation4 + $0x190] sm:$0xff]
    %v404 = vld [vmem:[#allocation4 + $0x198] sm:$0xff]
    %v405 = vld [vmem:[#allocation4 + $0x1a0] sm:$0xff]
    %v406 = vld [vmem:[#allocation4 + $0x1a8] sm:$0xff]
    %v407 = vld [vmem:[#allocation4 + $0x1b0] sm:$0xff]
    %v408 = vld [vmem:[#allocation4 + $0x1b8] sm:$0xff]
    %v409 = vld [vmem:[#allocation4 + $0x1c0] sm:$0xff]
    %v410 = vld [vmem:[#allocation4 + $0x1c8] sm:$0xff]
    %v411 = vld [vmem:[#allocation4 + $0x1d0] sm:$0xff]
    %v412 = vld [vmem:[#allocation4 + $0x1d8] sm:$0xff]
    %v413 = vld [vmem:[#allocation4 + $0x1e0] sm:$0xff]
    %v414 = vld [vmem:[#allocation4 + $0x1e8] sm:$0xff]
    %v415 = vld [vmem:[#allocation4 + $0x1f0] sm:$0xff]
    %v416 = vld [vmem:[#allocation4 + $0x1f8] sm:$0xff]
    %v417 = vld [vmem:[#allocation4 + $0x200] sm:$0xff]
    %v418 = vld [vmem:[#allocation4 + $0x208] sm:$0xff]
    %v419 = vld [vmem:[#allocation4 + $0x210] sm:$0xff]
    %v420 = vld [vmem:[#allocation4 + $0x218] sm:$0xff]
    %v421 = vld [vmem:[#allocation4 + $0x220] sm:$0xff]
    %v422 = vld [vmem:[#allocation4 + $0x228] sm:$0xff]
    %v423 = vld [vmem:[#allocation4 + $0x230] sm:$0xff]
    %v424 = vld [vmem:[#allocation4 + $0x238] sm:$0xff]
    %v425 = vld [vmem:[#allocation4 + $0x240] sm:$0xff]
    %v426 = vld [vmem:[#allocation4 + $0x248] sm:$0xff]
    %v427 = vld [vmem:[#allocation4 + $0x250] sm:$0xff]
    %v428 = vld [vmem:[#allocation4 + $0x258] sm:$0xff]
    %v429 = vld [vmem:[#allocation4 + $0x260] sm:$0xff]
    %v430 = vld [vmem:[#allocation4 + $0x268] sm:$0xff]
    %v431 = vld [vmem:[#allocation4 + $0x270] sm:$0xff]
    %v432 = vld [vmem:[#allocation4 + $0x278] sm:$0xff]
    %v433 = vld [vmem:[#allocation4 + $0x280] sm:$0xff]
    %v434 = vld [vmem:[#allocation4 + $0x288] sm:$0xff]
    %v435 = vld [vmem:[#allocation4 + $0x290] sm:$0xff]
    %v436 = vld [vmem:[#allocation4 + $0x298] sm:$0xff]
    %v437 = vld [vmem:[#allocation4 + $0x2a0] sm:$0xff]
    %v438 = vld [vmem:[#allocation4 + $0x2a8] sm:$0xff]
    %v439 = vld [vmem:[#allocation4 + $0x2b0] sm:$0xff]
    %v440 = vld [vmem:[#allocation4 + $0x2b8] sm:$0xff]
    %v441 = vld [vmem:[#allocation4 + $0x2c0] sm:$0xff]
    %v442 = vld [vmem:[#allocation4 + $0x2c8] sm:$0xff]
    %v443 = vld [vmem:[#allocation4 + $0x2d0] sm:$0xff]
    %v444 = vld [vmem:[#allocation4 + $0x2d8] sm:$0xff]
    %v445 = vld [vmem:[#allocation4 + $0x2e0] sm:$0xff]
    %v446 = vld [vmem:[#allocation4 + $0x2e8] sm:$0xff]
    %v447 = vld [vmem:[#allocation4 + $0x2f0] sm:$0xff]
    %v448 = vld [vmem:[#allocation4 + $0x2f8] sm:$0xff]
    %v449 = vld [vmem:[#allocation4 + $0x300] sm:$0xff]
    %v450 = vld [vmem:[#allocation4 + $0x308] sm:$0xff]
    %v451 = vld [vmem:[#allocation4 + $0x310] sm:$0xff]
    %v452 = vld [vmem:[#allocation4 + $0x318] sm:$0xff]
    %v453 = vld [vmem:[#allocation4 + $0x320] sm:$0xff]
    %v454 = vld [vmem:[#allocation4 + $0x328] sm:$0xff]
    %v455 = vld [vmem:[#allocation4 + $0x330] sm:$0xff]
    %v456 = vld [vmem:[#allocation4 + $0x338] sm:$0xff]
    %v457 = vld [vmem:[#allocation4 + $0x340] sm:$0xff]
    %v458 = vld [vmem:[#allocation4 + $0x348] sm:$0xff]
    %v459 = vld [vmem:[#allocation4 + $0x350] sm:$0xff]
    %v460 = vld [vmem:[#allocation4 + $0x358] sm:$0xff]
    %v461 = vld [vmem:[#allocation4 + $0x360] sm:$0xff]
    %v462 = vld [vmem:[#allocation4 + $0x368] sm:$0xff]
    %v463 = vld [vmem:[#allocation4 + $0x370] sm:$0xff]
    %v464 = vld [vmem:[#allocation4 + $0x378] sm:$0xff]
    %v465 = vld [vmem:[#allocation4 + $0x380] sm:$0xff]
    %v466 = vld [vmem:[#allocation4 + $0x388] sm:$0xff]
    %v467 = vld [vmem:[#allocation4 + $0x390] sm:$0xff]
    %v468 = vld [vmem:[#allocation4 + $0x398] sm:$0xff]
    %v469 = vld [vmem:[#allocation4 + $0x3a0] sm:$0xff]
    %v470 = vld [vmem:[#allocation4 + $0x3a8] sm:$0xff]
    %v471 = vld [vmem:[#allocation4 + $0x3b0] sm:$0xff]
    %v472 = vld [vmem:[#allocation4 + $0x3b8] sm:$0xff]
    %v473 = vld [vmem:[#allocation4 + $0x3c0] sm:$0xff]
    %v474 = vld [vmem:[#allocation4 + $0x3c8] sm:$0xff]
    %v475 = vld [vmem:[#allocation4 + $0x3d0] sm:$0xff]
    %v476 = vld [vmem:[#allocation4 + $0x3d8] sm:$0xff]
    %v477 = vld [vmem:[#allocation4 + $0x3e0] sm:$0xff]
    %v478 = vld [vmem:[#allocation4 + $0x3e8] sm:$0xff]
    %v479 = vld [vmem:[#allocation4 + $0x3f0] sm:$0xff]
    %v480 = vld [vmem:[#allocation4 + $0x3f8] sm:$0xff]
    %v481 = vld [vmem:[#allocation4 + $0x400] sm:$0xff]
    %v482 = vld [vmem:[#allocation4 + $0x408] sm:$0xff]
    %v483 = vld [vmem:[#allocation4 + $0x410] sm:$0xff]
    %v484 = vld [vmem:[#allocation4 + $0x418] sm:$0xff]
    %v485 = vld [vmem:[#allocation4 + $0x420] sm:$0xff]
    %v486 = vld [vmem:[#allocation4 + $0x428] sm:$0xff]
    %v487 = vld [vmem:[#allocation4 + $0x430] sm:$0xff]
    %v488 = vld [vmem:[#allocation4 + $0x438] sm:$0xff]
    %v489 = vld [vmem:[#allocation4 + $0x440] sm:$0xff]
    %v490 = vld [vmem:[#allocation4 + $0x448] sm:$0xff]
    %v491 = vld [vmem:[#allocation4 + $0x450] sm:$0xff]
    %v492 = vld [vmem:[#allocation4 + $0x458] sm:$0xff]
    %v493 = vld [vmem:[#allocation4 + $0x460] sm:$0xff]
    %v494 = vld [vmem:[#allocation4 + $0x468] sm:$0xff]
    %v495 = vld [vmem:[#allocation4 + $0x470] sm:$0xff]
    %v496 = vld [vmem:[#allocation4 + $0x478] sm:$0xff]
    %v497 = vld [vmem:[#allocation4 + $0x480] sm:$0xff]
    %v498 = vld [vmem:[#allocation4 + $0x488] sm:$0xff]
    %v499 = vld [vmem:[#allocation4 + $0x490] sm:$0xff]
    %v500 = vld [vmem:[#allocation4 + $0x498] sm:$0xff]
    %v501 = vld [vmem:[#allocation4 + $0x4a0] sm:$0xff]
    %v502 = vld [vmem:[#allocation4 + $0x4a8] sm:$0xff]
    %v503 = vld [vmem:[#allocation4 + $0x4b0] sm:$0xff]
    %v504 = vld [vmem:[#allocation4 + $0x4b8] sm:$0xff]
    %v505 = vld [vmem:[#allocation4 + $0x4c0] sm:$0xff]
    %v506 = vld [vmem:[#allocation4 + $0x4c8] sm:$0xff]
    %v507 = vld [vmem:[#allocation4 + $0x4d0] sm:$0xff]
    %v508 = vld [vmem:[#allocation4 + $0x4d8] sm:$0xff]
    %v509 = vld [vmem:[#allocation4 + $0x4e0] sm:$0xff]
    %v510 = vld [vmem:[#allocation4 + $0x4e8] sm:$0xff]
    %v511 = vld [vmem:[#allocation4 + $0x4f0] sm:$0xff]
    %v512 = vld [vmem:[#allocation4 + $0x4f8] sm:$0xff]
    %v513 = vld [vmem:[#allocation4 + $0x500] sm:$0xff]
    %v514 = vld [vmem:[#allocation4 + $0x508] sm:$0xff]
    %v515 = vld [vmem:[#allocation4 + $0x510] sm:$0xff]
    %v516 = vld [vmem:[#allocation4 + $0x518] sm:$0xff]
    %v517 = vld [vmem:[#allocation4 + $0x520] sm:$0xff]
    %v518 = vld [vmem:[#allocation4 + $0x528] sm:$0xff]
    %v519 = vld [vmem:[#allocation4 + $0x530] sm:$0xff]
    %v520 = vld [vmem:[#allocation4 + $0x538] sm:$0xff]
    %v521 = vld [vmem:[#allocation4 + $0x540] sm:$0xff]
    %v522 = vld [vmem:[#allocation4 + $0x548] sm:$0xff]
    %v523 = vld [vmem:[#allocation4 + $0x550] sm:$0xff]
    %v524 = vld [vmem:[#allocation4 + $0x558] sm:$0xff]
    %v525 = vld [vmem:[#allocation4 + $0x560] sm:$0xff]
    %v526 = vld [vmem:[#allocation4 + $0x568] sm:$0xff]
    %v527 = vld [vmem:[#allocation4 + $0x570] sm:$0xff]
    %v528 = vld [vmem:[#allocation4 + $0x578] sm:$0xff]
    %v529 = vld [vmem:[#allocation4 + $0x580] sm:$0xff]
    %v530 = vld [vmem:[#allocation4 + $0x588] sm:$0xff]
    %v531 = vld [vmem:[#allocation4 + $0x590] sm:$0xff]
    %v532 = vld [vmem:[#allocation4 + $0x598] sm:$0xff]
    %v533 = vld [vmem:[#allocation4 + $0x5a0] sm:$0xff]
    %v534 = vld [vmem:[#allocation4 + $0x5a8] sm:$0xff]
    %v535 = vld [vmem:[#allocation4 + $0x5b0] sm:$0xff]
    %v536 = vld [vmem:[#allocation4 + $0x5b8] sm:$0xff]
    %v537 = vld [vmem:[#allocation4 + $0x5c0] sm:$0xff]
    %v538 = vld [vmem:[#allocation4 + $0x5c8] sm:$0xff]
    %v539 = vld [vmem:[#allocation4 + $0x5d0] sm:$0xff]
    %v540 = vld [vmem:[#allocation4 + $0x5d8] sm:$0xff]
    %v541 = vld [vmem:[#allocation4 + $0x5e0] sm:$0xff]
    %v542 = vld [vmem:[#allocation4 + $0x5e8] sm:$0xff]
    %v543 = vld [vmem:[#allocation4 + $0x5f0] sm:$0xff]
    %v544 = vld [vmem:[#allocation4 + $0x5f8] sm:$0xff]
    %v545 = vld [vmem:[#allocation4 + $0x600] sm:$0xff]
    %v546 = vld [vmem:[#allocation4 + $0x608] sm:$0xff]
    %v547 = vld [vmem:[#allocation4 + $0x610] sm:$0xff]
    %v548 = vld [vmem:[#allocation4 + $0x618] sm:$0xff]
    %v549 = vld [vmem:[#allocation4 + $0x620] sm:$0xff]
    %v550 = vld [vmem:[#allocation4 + $0x628] sm:$0xff]
    %v551 = vld [vmem:[#allocation4 + $0x630] sm:$0xff]
    %v552 = vld [vmem:[#allocation4 + $0x638] sm:$0xff]
    %v553 = vld [vmem:[#allocation4 + $0x640] sm:$0xff]
    %v554 = vld [vmem:[#allocation4 + $0x648] sm:$0xff]
    %v555 = vld [vmem:[#allocation4 + $0x650] sm:$0xff]
    %v556 = vld [vmem:[#allocation4 + $0x658] sm:$0xff]
    %v557 = vld [vmem:[#allocation4 + $0x660] sm:$0xff]
    %v558 = vld [vmem:[#allocation4 + $0x668] sm:$0xff]
    %v559 = vld [vmem:[#allocation4 + $0x670] sm:$0xff]
    %v560 = vld [vmem:[#allocation4 + $0x678] sm:$0xff]
    %v561 = vld [vmem:[#allocation4 + $0x680] sm:$0xff]
    %v562 = vld [vmem:[#allocation4 + $0x688] sm:$0xff]
    %v563 = vld [vmem:[#allocation4 + $0x690] sm:$0xff]
    %v564 = vld [vmem:[#allocation4 + $0x698] sm:$0xff]
    %v565 = vld [vmem:[#allocation4 + $0x6a0] sm:$0xff]
    %v566 = vld [vmem:[#allocation4 + $0x6a8] sm:$0xff]
    %v567 = vld [vmem:[#allocation4 + $0x6b0] sm:$0xff]
    %v568 = vld [vmem:[#allocation4 + $0x6b8] sm:$0xff]
    %v569 = vld [vmem:[#allocation4 + $0x6c0] sm:$0xff]
    %v570 = vld [vmem:[#allocation4 + $0x6c8] sm:$0xff]
    %v571 = vld [vmem:[#allocation4 + $0x6d0] sm:$0xff]
    %v572 = vld [vmem:[#allocation4 + $0x6d8] sm:$0xff]
    %v573 = vld [vmem:[#allocation4 + $0x6e0] sm:$0xff]
    %v574 = vld [vmem:[#allocation4 + $0x6e8] sm:$0xff]
    %v575 = vld [vmem:[#allocation4 + $0x6f0] sm:$0xff]
    %v576 = vld [vmem:[#allocation4 + $0x6f8] sm:$0xff]
    %v577 = vld [vmem:[#allocation4 + $0x700] sm:$0xff]
    %v578 = vld [vmem:[#allocation4 + $0x708] sm:$0xff]
    %v579 = vld [vmem:[#allocation4 + $0x710] sm:$0xff]
    %v580 = vld [vmem:[#allocation4 + $0x718] sm:$0xff]
    %v581 = vld [vmem:[#allocation4 + $0x720] sm:$0xff]
    %v582 = vld [vmem:[#allocation4 + $0x728] sm:$0xff]
    %v583 = vld [vmem:[#allocation4 + $0x730] sm:$0xff]
    %v584 = vld [vmem:[#allocation4 + $0x738] sm:$0xff]
    %v585 = vld [vmem:[#allocation4 + $0x740] sm:$0xff]
    %v586 = vld [vmem:[#allocation4 + $0x748] sm:$0xff]
    %v587 = vld [vmem:[#allocation4 + $0x750] sm:$0xff]
    %v588 = vld [vmem:[#allocation4 + $0x758] sm:$0xff]
    %v589 = vld [vmem:[#allocation4 + $0x760] sm:$0xff]
    %v590 = vld [vmem:[#allocation4 + $0x768] sm:$0xff]
    %v591 = vld [vmem:[#allocation4 + $0x770] sm:$0xff]
    %v592 = vld [vmem:[#allocation4 + $0x778] sm:$0xff]
    %v593 = vld [vmem:[#allocation4 + $0x780] sm:$0xff]
    %v594 = vld [vmem:[#allocation4 + $0x788] sm:$0xff]
    %v595 = vld [vmem:[#allocation4 + $0x790] sm:$0xff]
    %v596 = vld [vmem:[#allocation4 + $0x798] sm:$0xff]
    %v597 = vld [vmem:[#allocation4 + $0x7a0] sm:$0xff]
    %v598 = vld [vmem:[#allocation4 + $0x7a8] sm:$0xff]
    %v599 = vld [vmem:[#allocation4 + $0x7b0] sm:$0xff]
    %v600 = vld [vmem:[#allocation4 + $0x7b8] sm:$0xff]
    %v601 = vld [vmem:[#allocation4 + $0x7c0] sm:$0xff]
    %v602 = vld [vmem:[#allocation4 + $0x7c8] sm:$0xff]
    %v603 = vld [vmem:[#allocation4 + $0x7d0] sm:$0xff]
    %v604 = vld [vmem:[#allocation4 + $0x7d8] sm:$0xff]
    %v605 = vld [vmem:[#allocation4 + $0x7e0] sm:$0xff]
    %v606 = vld [vmem:[#allocation4 + $0x7e8] sm:$0xff]
    %v607 = vld [vmem:[#allocation4 + $0x7f0] sm:$0xff]
    %v608 = vld [vmem:[#allocation4 + $0x7f8] sm:$0xff]
    %v609 = vld [vmem:[#allocation6] sm:$0xff]
    %v610 = vld [vmem:[#allocation6 + $0x8] sm:$0xff]
    %v611 = vld [vmem:[#allocation6 + $0x10] sm:$0xff]
    %v612 = vld [vmem:[#allocation6 + $0x18] sm:$0xf]
    %v613 = vld [vmem:[#allocation6 + $0x1c] sm:$0xff]
    %v614 = vld [vmem:[#allocation6 + $0x24] sm:$0xff]
    %v615 = vld [vmem:[#allocation6 + $0x2c] sm:$0xff]
    %v616 = vld [vmem:[#allocation6 + $0x34] sm:$0xf]
    %v617 = vld [vmem:[#allocation6 + $0x38] sm:$0xff]
    %v618 = vld [vmem:[#allocation6 + $0x40] sm:$0xff]
    %v619 = vld [vmem:[#allocation6 + $0x48] sm:$0xff]
    %v620 = vld [vmem:[#allocation6 + $0x50] sm:$0xf]
    %v621 = vld [vmem:[#allocation6 + $0x54] sm:$0xff]
    %v622 = vld [vmem:[#allocation6 + $0x5c] sm:$0xff]
    %v623 = vld [vmem:[#allocation6 + $0x64] sm:$0xff]
    %v624 = vld [vmem:[#allocation6 + $0x6c] sm:$0xf]
    %v625 = vld [vmem:[#allocation6 + $0x70] sm:$0xff]
    %v626 = vld [vmem:[#allocation6 + $0x78] sm:$0xff]
    %v627 = vld [vmem:[#allocation6 + $0x80] sm:$0xff]
    %v628 = vld [vmem:[#allocation6 + $0x88] sm:$0xf]
    %v629 = vld [vmem:[#allocation6 + $0x8c] sm:$0xff]
    %v630 = vld [vmem:[#allocation6 + $0x94] sm:$0xff]
    %v631 = vld [vmem:[#allocation6 + $0x9c] sm:$0xff]
    %v632 = vld [vmem:[#allocation6 + $0xa4] sm:$0xf]
    %v633 = vld [vmem:[#allocation6 + $0xa8] sm:$0xff]
    %v634 = vld [vmem:[#allocation6 + $0xb0] sm:$0xff]
    %v635 = vld [vmem:[#allocation6 + $0xb8] sm:$0xff]
    %v636 = vld [vmem:[#allocation6 + $0xc0] sm:$0xf]
    %v637 = vld [vmem:[#allocation6 + $0xc4] sm:$0xff]
    %v638 = vld [vmem:[#allocation6 + $0xcc] sm:$0xff]
    %v639 = vld [vmem:[#allocation6 + $0xd4] sm:$0xff]
    %v640 = vld [vmem:[#allocation6 + $0xdc] sm:$0xf]
    %v641 = vld [vmem:[#allocation6 + $0xe0] sm:$0xff]
    %v642 = vld [vmem:[#allocation6 + $0xe8] sm:$0xff]
    %v643 = vld [vmem:[#allocation6 + $0xf0] sm:$0xff]
    %v644 = vld [vmem:[#allocation6 + $0xf8] sm:$0xf]
    %v645 = vld [vmem:[#allocation6 + $0xfc] sm:$0xff]
    %v646 = vld [vmem:[#allocation6 + $0x104] sm:$0xff]
    %v647 = vld [vmem:[#allocation6 + $0x10c] sm:$0xff]
    %v648 = vld [vmem:[#allocation6 + $0x114] sm:$0xf]
    %v649 = vld [vmem:[#allocation6 + $0x118] sm:$0xff]
    %v650 = vld [vmem:[#allocation6 + $0x120] sm:$0xff]
    %v651 = vld [vmem:[#allocation6 + $0x128] sm:$0xff]
    %v652 = vld [vmem:[#allocation6 + $0x130] sm:$0xf]
    %v653 = vld [vmem:[#allocation6 + $0x134] sm:$0xff]
    %v654 = vld [vmem:[#allocation6 + $0x13c] sm:$0xff]
    %v655 = vld [vmem:[#allocation6 + $0x144] sm:$0xff]
    %v656 = vld [vmem:[#allocation6 + $0x14c] sm:$0xf]
    %v657 = vld [vmem:[#allocation6 + $0x150] sm:$0xff]
    %v658 = vld [vmem:[#allocation6 + $0x158] sm:$0xff]
    %v659 = vld [vmem:[#allocation6 + $0x160] sm:$0xff]
    %v660 = vld [vmem:[#allocation6 + $0x168] sm:$0xf]
    %v661 = vld [vmem:[#allocation6 + $0x16c] sm:$0xff]
    %v662 = vld [vmem:[#allocation6 + $0x174] sm:$0xff]
    %v663 = vld [vmem:[#allocation6 + $0x17c] sm:$0xff]
    %v664 = vld [vmem:[#allocation6 + $0x184] sm:$0xf]
    %v665 = vld [vmem:[#allocation6 + $0x188] sm:$0xff]
    %v666 = vld [vmem:[#allocation6 + $0x190] sm:$0xff]
    %v667 = vld [vmem:[#allocation6 + $0x198] sm:$0xff]
    %v668 = vld [vmem:[#allocation6 + $0x1a0] sm:$0xf]
    %v669 = vld [vmem:[#allocation6 + $0x1a4] sm:$0xff]
    %v670 = vld [vmem:[#allocation6 + $0x1ac] sm:$0xff]
    %v671 = vld [vmem:[#allocation6 + $0x1b4] sm:$0xff]
    %v672 = vld [vmem:[#allocation6 + $0x1bc] sm:$0xf]
    %v673 = vld [vmem:[#allocation6 + $0x1c0] sm:$0xff]
    %v674 = vld [vmem:[#allocation6 + $0x1c8] sm:$0xff]
    %v675 = vld [vmem:[#allocation6 + $0x1d0] sm:$0xff]
    %v676 = vld [vmem:[#allocation6 + $0x1d8] sm:$0xf]
    %v677 = vld [vmem:[#allocation6 + $0x1dc] sm:$0xff]
    %v678 = vld [vmem:[#allocation6 + $0x1e4] sm:$0xff]
    %v679 = vld [vmem:[#allocation6 + $0x1ec] sm:$0xff]
    %v680 = vld [vmem:[#allocation6 + $0x1f4] sm:$0xf]
    %v681 = vld [vmem:[#allocation6 + $0x1f8] sm:$0xff]
    %v682 = vld [vmem:[#allocation6 + $0x200] sm:$0xff]
    %v683 = vld [vmem:[#allocation6 + $0x208] sm:$0xff]
    %v684 = vld [vmem:[#allocation6 + $0x210] sm:$0xf]
    %v685 = vld [vmem:[#allocation6 + $0x214] sm:$0xff]
    %v686 = vld [vmem:[#allocation6 + $0x21c] sm:$0xff]
    %v687 = vld [vmem:[#allocation6 + $0x224] sm:$0xff]
    %v688 = vld [vmem:[#allocation6 + $0x22c] sm:$0xf]
    %v689 = vld [vmem:[#allocation6 + $0x230] sm:$0xff]
    %v690 = vld [vmem:[#allocation6 + $0x238] sm:$0xff]
    %v691 = vld [vmem:[#allocation6 + $0x240] sm:$0xff]
    %v692 = vld [vmem:[#allocation6 + $0x248] sm:$0xf]
    %v693 = vld [vmem:[#allocation6 + $0x24c] sm:$0xff]
    %v694 = vld [vmem:[#allocation6 + $0x254] sm:$0xff]
    %v695 = vld [vmem:[#allocation6 + $0x25c] sm:$0xff]
    %v696 = vld [vmem:[#allocation6 + $0x264] sm:$0xf]
    %v697 = vld [vmem:[#allocation6 + $0x268] sm:$0xff]
    %v698 = vld [vmem:[#allocation6 + $0x270] sm:$0xff]
    %v699 = vld [vmem:[#allocation6 + $0x278] sm:$0xff]
    %v700 = vld [vmem:[#allocation6 + $0x280] sm:$0xf]
    %v701 = vld [vmem:[#allocation6 + $0x284] sm:$0xff]
    %v702 = vld [vmem:[#allocation6 + $0x28c] sm:$0xff]
    %v703 = vld [vmem:[#allocation6 + $0x294] sm:$0xff]
    %v704 = vld [vmem:[#allocation6 + $0x29c] sm:$0xf]
    %v705 = vld [vmem:[#allocation6 + $0x2a0] sm:$0xff]
    %v706 = vld [vmem:[#allocation6 + $0x2a8] sm:$0xff]
    %v707 = vld [vmem:[#allocation6 + $0x2b0] sm:$0xff]
    %v708 = vld [vmem:[#allocation6 + $0x2b8] sm:$0xf]
    %v709 = vld [vmem:[#allocation6 + $0x2bc] sm:$0xff]
    %v710 = vld [vmem:[#allocation6 + $0x2c4] sm:$0xff]
    %v711 = vld [vmem:[#allocation6 + $0x2cc] sm:$0xff]
    %v712 = vld [vmem:[#allocation6 + $0x2d4] sm:$0xf]
    %v713 = vld [vmem:[#allocation6 + $0x2d8] sm:$0xff]
    %v714 = vld [vmem:[#allocation6 + $0x2e0] sm:$0xff]
    %v715 = vld [vmem:[#allocation6 + $0x2e8] sm:$0xff]
    %v716 = vld [vmem:[#allocation6 + $0x2f0] sm:$0xf]
    %v717 = vld [vmem:[#allocation6 + $0x2f4] sm:$0xff]
    %v718 = vld [vmem:[#allocation6 + $0x2fc] sm:$0xff]
    %v719 = vld [vmem:[#allocation6 + $0x304] sm:$0xff]
    %v720 = vld [vmem:[#allocation6 + $0x30c] sm:$0xf]
    %v721 = vld [vmem:[#allocation6 + $0x310] sm:$0xff]
    %v722 = vld [vmem:[#allocation6 + $0x318] sm:$0xff]
    %v723 = vld [vmem:[#allocation6 + $0x320] sm:$0xff]
    %v724 = vld [vmem:[#allocation6 + $0x328] sm:$0xf]
    %v725 = vld [vmem:[#allocation6 + $0x32c] sm:$0xff]
    %v726 = vld [vmem:[#allocation6 + $0x334] sm:$0xff]
    %v727 = vld [vmem:[#allocation6 + $0x33c] sm:$0xff]
    %v728 = vld [vmem:[#allocation6 + $0x344] sm:$0xf]
    %v729 = vld [vmem:[#allocation6 + $0x348] sm:$0xff]
    %v730 = vld [vmem:[#allocation6 + $0x350] sm:$0xff]
    %v731 = vld [vmem:[#allocation6 + $0x358] sm:$0xff]
    %v732 = vld [vmem:[#allocation6 + $0x360] sm:$0xf]
    %v733 = vld [vmem:[#allocation6 + $0x364] sm:$0xff]
    %v734 = vld [vmem:[#allocation6 + $0x36c] sm:$0xff]
    %v735 = vld [vmem:[#allocation6 + $0x374] sm:$0xff]
    %v736 = vld [vmem:[#allocation6 + $0x37c] sm:$0xf]
    %v737 = vld [vmem:[#allocation7] sm:$0xff]
    %v738 = vld [vmem:[#allocation7 + $0x8] sm:$0xff]
    %v739 = vld [vmem:[#allocation7 + $0x10] sm:$0xff]
    %v740 = vld [vmem:[#allocation7 + $0x18] sm:$0xf]
    %v741 = vld [vmem:[#allocation7 + $0x1c] sm:$0xff]
    %v742 = vld [vmem:[#allocation7 + $0x24] sm:$0xff]
    %v743 = vld [vmem:[#allocation7 + $0x2c] sm:$0xff]
    %v744 = vld [vmem:[#allocation7 + $0x34] sm:$0xf]
    %v745 = vld [vmem:[#allocation7 + $0x38] sm:$0xff]
    %v746 = vld [vmem:[#allocation7 + $0x40] sm:$0xff]
    %v747 = vld [vmem:[#allocation7 + $0x48] sm:$0xff]
    %v748 = vld [vmem:[#allocation7 + $0x50] sm:$0xf]
    %v749 = vld [vmem:[#allocation7 + $0x54] sm:$0xff]
    %v750 = vld [vmem:[#allocation7 + $0x5c] sm:$0xff]
    %v751 = vld [vmem:[#allocation7 + $0x64] sm:$0xff]
    %v752 = vld [vmem:[#allocation7 + $0x6c] sm:$0xf]
    %v753 = vld [vmem:[#allocation7 + $0x70] sm:$0xff]
    %v754 = vld [vmem:[#allocation7 + $0x78] sm:$0xff]
    %v755 = vld [vmem:[#allocation7 + $0x80] sm:$0xff]
    %v756 = vld [vmem:[#allocation7 + $0x88] sm:$0xf]
    %v757 = vld [vmem:[#allocation7 + $0x8c] sm:$0xff]
    %v758 = vld [vmem:[#allocation7 + $0x94] sm:$0xff]
    %v759 = vld [vmem:[#allocation7 + $0x9c] sm:$0xff]
    %v760 = vld [vmem:[#allocation7 + $0xa4] sm:$0xf]
    %v761 = vld [vmem:[#allocation7 + $0xa8] sm:$0xff]
    %v762 = vld [vmem:[#allocation7 + $0xb0] sm:$0xff]
    %v763 = vld [vmem:[#allocation7 + $0xb8] sm:$0xff]
    %v764 = vld [vmem:[#allocation7 + $0xc0] sm:$0xf]
    %v765 = vld [vmem:[#allocation7 + $0xc4] sm:$0xff]
    %v766 = vld [vmem:[#allocation7 + $0xcc] sm:$0xff]
    %v767 = vld [vmem:[#allocation7 + $0xd4] sm:$0xff]
    %v768 = vld [vmem:[#allocation7 + $0xdc] sm:$0xf]
    %v769 = vld [vmem:[#allocation7 + $0xe0] sm:$0xff]
    %v770 = vld [vmem:[#allocation7 + $0xe8] sm:$0xff]
    %v771 = vld [vmem:[#allocation7 + $0xf0] sm:$0xff]
    %v772 = vld [vmem:[#allocation7 + $0xfc] sm:$0xff]
    %v773 = vld [vmem:[#allocation7 + $0x104] sm:$0xff]
    %v774 = vld [vmem:[#allocation7 + $0x10c] sm:$0xff]
    %v775 = vld [vmem:[#allocation7 + $0x118] sm:$0xff]
    %v776 = vld [vmem:[#allocation7 + $0x120] sm:$0xff]
    %v777 = vld [vmem:[#allocation7 + $0x128] sm:$0xff]
    %v778 = vld [vmem:[#allocation7 + $0x134] sm:$0xff]
    %v779 = vld [vmem:[#allocation7 + $0x13c] sm:$0xff]
    %v780 = vld [vmem:[#allocation7 + $0x144] sm:$0xff]
    %v781 = vld [vmem:[#allocation7 + $0x150] sm:$0xff]
    %v782 = vld [vmem:[#allocation7 + $0x158] sm:$0xff]
    %v783 = vld [vmem:[#allocation7 + $0x160] sm:$0xff]
    %v784 = vld [vmem:[#allocation7 + $0x16c] sm:$0xff]
    %v785 = vld [vmem:[#allocation7 + $0x174] sm:$0xff]
    %v786 = vld [vmem:[#allocation7 + $0x17c] sm:$0xff]
    %v787 = vld [vmem:[#allocation7 + $0x188] sm:$0xff]
    %v788 = vld [vmem:[#allocation7 + $0x190] sm:$0xff]
    %v789 = vld [vmem:[#allocation7 + $0x198] sm:$0xff]
    %v790 = vld [vmem:[#allocation7 + $0x1a4] sm:$0xff]
    %v791 = vld [vmem:[#allocation7 + $0x1ac] sm:$0xff]
    %v792 = vld [vmem:[#allocation7 + $0x1b4] sm:$0xff]
    %v793 = vld [vmem:[#allocation9] sm:$0xff]
    %v794 = vld [vmem:[#allocation9 + $0x8] sm:$0xff]
    %v795 = vld [vmem:[#allocation9 + $0x10] sm:$0xff]
    %v796 = vld [vmem:[#allocation9 + $0x18] sm:$0xff]
    %v797 = vld [vmem:[#allocation9 + $0x20] sm:$0xff]
    %v798 = vld [vmem:[#allocation9 + $0x28] sm:$0xff]
    %v799 = vld [vmem:[#allocation9 + $0x30] sm:$0xff]
    %v800 = vld [vmem:[#allocation9 + $0x38] sm:$0xff]
    %v801 = vld [vmem:[#allocation9 + $0x40] sm:$0xff]
    %v802 = vld [vmem:[#allocation9 + $0x48] sm:$0xff]
    %v803 = vld [vmem:[#allocation9 + $0x80] sm:$0x3f]
    %v804 = vlaneseq
    %v805 = vand.u32 %v804, 127
    %v806 = vadd.s32 %v805, 128
    %v807 = vcvt.s32.f32 %v805
    %v808 = vcvt.s32.f32 %v806
    %v809 = vmul.f32 %v807, -0.03611898
    %v810 = vmul.f32 %v808, -0.03611898
    %v811 = vmul.f32 %v809, 1.442695
    %v812 = vpow.pop %v811
    %v813 = vmul.f32 %v810, 1.442695
    %v814 = vpow.pop %v813
    %816 = vset.pattern.permute.xlu0 0
    %817 = vperm.xlu0 %816, %v96
    %v818 = vpop.permute.xlu0 %817
    %v820 = vmul.f32 %v818, %v812
    %v821 = vmul.f32 %v818, %v814
    %v822 = vand.u32 2147483647, %v820
    %vm823 = vcmp.le.f32.partialorder %v822, 0.7853982
    %vm824 = vcmp.lt.s32.totalorder %v820, 0
    %v825 = vand.u32 %v820, 2139095040
    %v826 = vshrl.u32 %v825, 23
    %v827 = vsub.s32 %v826, 127
    %v828 = vand.u32 2147483647, %v820
    %v829 = vand.u32 %v828, 8388607
    %v830 = vor.u32 %v829, 8388608
    %v831 = vsub.s32 0, %v830
    %v832 = vadd.s32 %v827, 1
    %vm833 = vcmp.gt.s32.totalorder %v832, 0
    %v834 = vsel %vm833, %v832, 0
    %v835 = vshrl.u32 %v834, 5
    %v836 = vand.u32 %v834, 31
    %v837 = vsub.s32 32, %v836
    %v838 = vshrl.u32 683565275, %v837
    %v839 = vshll.u32 683565275, %v836
    %v840 = vshrl.u32 2475754826, %v837
    %v841 = vor.u32 %v839, %v840
    %v842 = vshll.u32 2475754826, %v836
    %v843 = vshrl.u32 2131351028, %v837
    %v844 = vor.u32 %v842, %v843
    %v845 = vshll.u32 2131351028, %v836
    %v846 = vshrl.u32 2102212464, %v837
    %v847 = vor.u32 %v845, %v846
    %v848 = vshll.u32 2102212464, %v836
    %v849 = vshrl.u32 920167782, %v837
    %v850 = vor.u32 %v848, %v849
    %v851 = vshll.u32 920167782, %v836
    %v852 = vshrl.u32 1326507024, %v837
    %v853 = vor.u32 %v851, %v852
    %vm854 = vcmp.lt.s32.totalorder %v835, 1
    %vm855 = vcmp.lt.s32.totalorder %v835, 2
    %vm856 = vcmp.lt.s32.totalorder %v835, 3
    %vm857 = vcmp.lt.s32.totalorder %v835, 4
    %v858 = vsel %vm854, %v838, %v841
    %v859 = vsel %vm857, %v847, 2102212464
    %v860 = vsel %vm856, %v844, %v859
    %v861 = vsel %vm855, %v858, %v860
    %v862 = vsel %vm854, %v841, %v844
    %v863 = vsel %vm857, %v850, 920167782
    %v864 = vsel %vm856, %v847, %v863
    %v865 = vsel %vm855, %v862, %v864
    %v866 = vsel %vm854, %v844, %v847
    %v867 = vsel %vm857, %v853, 1326507024
    %v868 = vsel %vm856, %v850, %v867
    %v869 = vsel %vm855, %v866, %v868
    %v870 = vshll.u32 %v830, 8
    %v871 = vmul.u32.u64.compose %v870, %v869
    %v872 = vextract.low.u32 %v871
    %v873 = vextract.high.u32 %v871
    %v874 = vmul.u32.u64.compose %v870, %v865
    %v875 = vextract.low.u32 %v874
    %v876 = vextract.high.u32 %v874
    %v877 = vmul.u32 %v870, %v861
    %v878 = vadd.s32 %v873, %v875
    %vm879 = vc.u32 %v873, %v875
    %v880 = vadd.s32 %v876, 1
    %v881 = vsel %vm879, %v880, %v876
    %v882 = vadd.s32 %v877, %v881
    %v883 = vadd.s32 %v882, 536870912
    %v884 = vshrl.u32 %v883, 30
    %v885 = vshll.u32 %v884, 30
    %v886 = vsub.s32 %v882, %v885
    %vm887 = vcmp.lt.s32.totalorder %v886, 0
    %v888 = vsub.s32 0, %v886
    %v889 = vsel %vm887, %v888, %v886
    %v890 = vclz %v889
    %v891 = vsub.s32 %v890, 2
    %vm892 = vcmp.gt.s32.totalorder 0, %v891
    %v893 = vsel %vm892, 0, %v891
    %v894 = vsub.s32 32, %v893
    %v895 = vshll.u32 %v886, %v893
    %v896 = vshrl.u32 %v878, %v894
    %v897 = vor.u32 %v895, %v896
    %v898 = vsub.s32 4294967266, %v893
    %v899 = vadd.s32 %v898, 127
    %v900 = vshll.u32 %v899, 23
    %v901 = vor.u32 4788187, %v900
    %v902 = vand.u32 2147483647, %v901
    %v904 = vcvt.s32.f32 %v897
    %v905 = vmul.f32 %v904, %v902
    %v906 = vxor.u32 %v905, 2147483648
    %v907 = vsel %vm824, %v906, %v905
    %v908 = vsub.s32 4, %v884
    %v909 = vsel %vm824, %v908, %v884
    %v910 = vsel %vm823, %v820, %v907
    %v911 = vsel %vm823, 0, %v909
    %v912 = vcosq.f32.pop %v910
    %v913 = vsinq.f32.pop %v910
    %vm914 = vweird.f32 %v820
    %v915 = vadd.s32 %v911, 3
    %v916 = vand.u32 %v915, 3
    %vm917 = vcmp.lt.s32.totalorder %v916, 2
    %vm918 = vcmp.eq.s32.totalorder %v916, 0
    %v919 = vxor.u32 %v913, 2147483648
    %v920 = vsel %vm918, %v912, %v919
    %vm921 = vcmp.eq.s32.totalorder %v916, 2
    %v922 = vxor.u32 %v912, 2147483648
    %v923 = vsel %vm921, %v922, %v913
    %v924 = vsel %vm917, %v920, %v923
    %v925 = vsel %vm914, nan, %v924
    %v926 = vand.u32 2147483647, %v821
    %vm927 = vcmp.le.f32.partialorder %v926, 0.7853982
    %vm928 = vcmp.lt.s32.totalorder %v821, 0
    %v929 = vand.u32 %v821, 2139095040
    %v930 = vshrl.u32 %v929, 23
    %v931 = vsub.s32 %v930, 127
    %v932 = vand.u32 2147483647, %v821
    %v933 = vand.u32 %v932, 8388607
    %v934 = vor.u32 %v933, 8388608
    %v935 = vsub.s32 0, %v934
    %v936 = vadd.s32 %v931, 1
    %vm937 = vcmp.gt.s32.totalorder %v936, 0
    %v938 = vsel %vm937, %v936, 0
    %v939 = vshrl.u32 %v938, 5
    %v940 = vand.u32 %v938, 31
    %v941 = vsub.s32 32, %v940
    %v942 = vshrl.u32 683565275, %v941
    %v943 = vshll.u32 683565275, %v940
    %v944 = vshrl.u32 2475754826, %v941
    %v945 = vor.u32 %v943, %v944
    %v946 = vshll.u32 2475754826, %v940
    %v947 = vshrl.u32 2131351028, %v941
    %v948 = vor.u32 %v946, %v947
    %v949 = vshll.u32 2131351028, %v940
    %v950 = vshrl.u32 2102212464, %v941
    %v951 = vor.u32 %v949, %v950
    %v952 = vshll.u32 2102212464, %v940
    %v953 = vshrl.u32 920167782, %v941
    %v954 = vor.u32 %v952, %v953
    %v955 = vshll.u32 920167782, %v940
    %v956 = vshrl.u32 1326507024, %v941
    %v957 = vor.u32 %v955, %v956
    %vm958 = vcmp.lt.s32.totalorder %v939, 1
    %vm959 = vcmp.lt.s32.totalorder %v939, 2
    %vm960 = vcmp.lt.s32.totalorder %v939, 3
    %vm961 = vcmp.lt.s32.totalorder %v939, 4
    %v962 = vsel %vm958, %v942, %v945
    %v963 = vsel %vm961, %v951, 2102212464
    %v964 = vsel %vm960, %v948, %v963
    %v965 = vsel %vm959, %v962, %v964
    %v966 = vsel %vm958, %v945, %v948
    %v967 = vsel %vm961, %v954, 920167782
    %v968 = vsel %vm960, %v951, %v967
    %v969 = vsel %vm959, %v966, %v968
    %v970 = vsel %vm958, %v948, %v951
    %v971 = vsel %vm961, %v957, 1326507024
    %v972 = vsel %vm960, %v954, %v971
    %v973 = vsel %vm959, %v970, %v972
    %v974 = vshll.u32 %v934, 8
    %v975 = vmul.u32.u64.compose %v974, %v973
    %v976 = vextract.low.u32 %v975
    %v977 = vextract.high.u32 %v975
    %v978 = vmul.u32.u64.compose %v974, %v969
    %v979 = vextract.low.u32 %v978
    %v980 = vextract.high.u32 %v978
    %v981 = vmul.u32 %v974, %v965
    %v982 = vadd.s32 %v977, %v979
    %vm983 = vc.u32 %v977, %v979
    %v984 = vadd.s32 %v980, 1
    %v985 = vsel %vm983, %v984, %v980
    %v986 = vadd.s32 %v981, %v985
    %v987 = vadd.s32 %v986, 536870912
    %v988 = vshrl.u32 %v987, 30
    %v989 = vshll.u32 %v988, 30
    %v990 = vsub.s32 %v986, %v989
    %vm991 = vcmp.lt.s32.totalorder %v990, 0
    %v992 = vsub.s32 0, %v990
    %v993 = vsel %vm991, %v992, %v990
    %v994 = vclz %v993
    %v995 = vsub.s32 %v994, 2
    %vm996 = vcmp.gt.s32.totalorder 0, %v995
    %v997 = vsel %vm996, 0, %v995
    %v998 = vsub.s32 32, %v997
    %v999 = vshll.u32 %v990, %v997
    %v1000 = vshrl.u32 %v982, %v998
    %v1001 = vor.u32 %v999, %v1000
    %v1002 = vsub.s32 4294967266, %v997
    %v1003 = vadd.s32 %v1002, 127
    %v1004 = vshll.u32 %v1003, 23
    %v1005 = vor.u32 4788187, %v1004
    %v1006 = vand.u32 2147483647, %v1005
    %v1008 = vcvt.s32.f32 %v1001
    %v1009 = vmul.f32 %v1008, %v1006
    %v1010 = vxor.u32 %v1009, 2147483648
    %v1011 = vsel %vm928, %v1010, %v1009
    %v1012 = vsub.s32 4, %v988
    %v1013 = vsel %vm928, %v1012, %v988
    %v1014 = vsel %vm927, %v821, %v1011
    %v1015 = vsel %vm927, 0, %v1013
    %v1016 = vcosq.f32.pop %v1014
    %v1017 = vsinq.f32.pop %v1014
    %vm1018 = vweird.f32 %v821
    %v1019 = vadd.s32 %v1015, 3
    %v1020 = vand.u32 %v1019, 3
    %vm1021 = vcmp.lt.s32.totalorder %v1020, 2
    %vm1022 = vcmp.eq.s32.totalorder %v1020, 0
    %v1023 = vxor.u32 %v1017, 2147483648
    %v1024 = vsel %vm1022, %v1016, %v1023
    %vm1025 = vcmp.eq.s32.totalorder %v1020, 2
    %v1026 = vxor.u32 %v1016, 2147483648
    %v1027 = vsel %vm1025, %v1026, %v1017
    %v1028 = vsel %vm1021, %v1024, %v1027
    %v1029 = vsel %vm1018, nan, %v1028
    %v1030 = vand.u32 2147483647, %v820
    %vm1031 = vcmp.le.f32.partialorder %v1030, 0.7853982
    %vm1032 = vcmp.lt.s32.totalorder %v820, 0
    %v1033 = vand.u32 %v820, 2139095040
    %v1034 = vshrl.u32 %v1033, 23
    %v1035 = vsub.s32 %v1034, 127
    %v1036 = vand.u32 2147483647, %v820
    %v1037 = vand.u32 %v1036, 8388607
    %v1038 = vor.u32 %v1037, 8388608
    %v1039 = vsub.s32 0, %v1038
    %v1040 = vadd.s32 %v1035, 1
    %vm1041 = vcmp.gt.s32.totalorder %v1040, 0
    %v1042 = vsel %vm1041, %v1040, 0
    %v1043 = vshrl.u32 %v1042, 5
    %v1044 = vand.u32 %v1042, 31
    %v1045 = vsub.s32 32, %v1044
    %v1046 = vshrl.u32 683565275, %v1045
    %v1047 = vshll.u32 683565275, %v1044
    %v1048 = vshrl.u32 2475754826, %v1045
    %v1049 = vor.u32 %v1047, %v1048
    %v1050 = vshll.u32 2475754826, %v1044
    %v1051 = vshrl.u32 2131351028, %v1045
    %v1052 = vor.u32 %v1050, %v1051
    %v1053 = vshll.u32 2131351028, %v1044
    %v1054 = vshrl.u32 2102212464, %v1045
    %v1055 = vor.u32 %v1053, %v1054
    %v1056 = vshll.u32 2102212464, %v1044
    %v1057 = vshrl.u32 920167782, %v1045
    %v1058 = vor.u32 %v1056, %v1057
    %v1059 = vshll.u32 920167782, %v1044
    %v1060 = vshrl.u32 1326507024, %v1045
    %v1061 = vor.u32 %v1059, %v1060
    %vm1062 = vcmp.lt.s32.totalorder %v1043, 1
    %vm1063 = vcmp.lt.s32.totalorder %v1043, 2
    %vm1064 = vcmp.lt.s32.totalorder %v1043, 3
    %vm1065 = vcmp.lt.s32.totalorder %v1043, 4
    %v1066 = vsel %vm1062, %v1046, %v1049
    %v1067 = vsel %vm1065, %v1055, 2102212464
    %v1068 = vsel %vm1064, %v1052, %v1067
    %v1069 = vsel %vm1063, %v1066, %v1068
    %v1070 = vsel %vm1062, %v1049, %v1052
    %v1071 = vsel %vm1065, %v1058, 920167782
    %v1072 = vsel %vm1064, %v1055, %v1071
    %v1073 = vsel %vm1063, %v1070, %v1072
    %v1074 = vsel %vm1062, %v1052, %v1055
    %v1075 = vsel %vm1065, %v1061, 1326507024
    %v1076 = vsel %vm1064, %v1058, %v1075
    %v1077 = vsel %vm1063, %v1074, %v1076
    %v1078 = vshll.u32 %v1038, 8
    %v1079 = vmul.u32.u64.compose %v1078, %v1077
    %v1080 = vextract.low.u32 %v1079
    %v1081 = vextract.high.u32 %v1079
    %v1082 = vmul.u32.u64.compose %v1078, %v1073
    %v1083 = vextract.low.u32 %v1082
    %v1084 = vextract.high.u32 %v1082
    %v1085 = vmul.u32 %v1078, %v1069
    %v1086 = vadd.s32 %v1081, %v1083
    %vm1087 = vc.u32 %v1081, %v1083
    %v1088 = vadd.s32 %v1084, 1
    %v1089 = vsel %vm1087, %v1088, %v1084
    %v1090 = vadd.s32 %v1085, %v1089
    %v1091 = vadd.s32 %v1090, 536870912
    %v1092 = vshrl.u32 %v1091, 30
    %v1093 = vshll.u32 %v1092, 30
    %v1094 = vsub.s32 %v1090, %v1093
    %vm1095 = vcmp.lt.s32.totalorder %v1094, 0
    %v1096 = vsub.s32 0, %v1094
    %v1097 = vsel %vm1095, %v1096, %v1094
    %v1098 = vclz %v1097
    %v1099 = vsub.s32 %v1098, 2
    %vm1100 = vcmp.gt.s32.totalorder 0, %v1099
    %v1101 = vsel %vm1100, 0, %v1099
    %v1102 = vsub.s32 32, %v1101
    %v1103 = vshll.u32 %v1094, %v1101
    %v1104 = vshrl.u32 %v1086, %v1102
    %v1105 = vor.u32 %v1103, %v1104
    %v1106 = vsub.s32 4294967266, %v1101
    %v1107 = vadd.s32 %v1106, 127
    %v1108 = vshll.u32 %v1107, 23
    %v1109 = vor.u32 4788187, %v1108
    %v1110 = vand.u32 2147483647, %v1109
    %v1112 = vcvt.s32.f32 %v1105
    %v1113 = vmul.f32 %v1112, %v1110
    %v1114 = vxor.u32 %v1113, 2147483648
    %v1115 = vsel %vm1032, %v1114, %v1113
    %v1116 = vsub.s32 4, %v1092
    %v1117 = vsel %vm1032, %v1116, %v1092
    %v1118 = vsel %vm1031, %v820, %v1115
    %v1119 = vsel %vm1031, 0, %v1117
    %v1120 = vcosq.f32.pop %v1118
    %v1121 = vsinq.f32.pop %v1118
    %vm1122 = vweird.f32 %v820
    %v1123 = vand.u32 %v1119, 3
    %vm1124 = vcmp.lt.s32.totalorder %v1123, 2
    %vm1125 = vcmp.eq.s32.totalorder %v1123, 0
    %v1126 = vxor.u32 %v1121, 2147483648
    %v1127 = vsel %vm1125, %v1120, %v1126
    %vm1128 = vcmp.eq.s32.totalorder %v1123, 2
    %v1129 = vxor.u32 %v1120, 2147483648
    %v1130 = vsel %vm1128, %v1129, %v1121
    %v1131 = vsel %vm1124, %v1127, %v1130
    %v1132 = vsel %vm1122, nan, %v1131
    %v1133 = vand.u32 2147483647, %v821
    %vm1134 = vcmp.le.f32.partialorder %v1133, 0.7853982
    %vm1135 = vcmp.lt.s32.totalorder %v821, 0
    %v1136 = vand.u32 %v821, 2139095040
    %v1137 = vshrl.u32 %v1136, 23
    %v1138 = vsub.s32 %v1137, 127
    %v1139 = vand.u32 2147483647, %v821
    %v1140 = vand.u32 %v1139, 8388607
    %v1141 = vor.u32 %v1140, 8388608
    %v1142 = vsub.s32 0, %v1141
    %v1143 = vadd.s32 %v1138, 1
    %vm1144 = vcmp.gt.s32.totalorder %v1143, 0
    %v1145 = vsel %vm1144, %v1143, 0
    %v1146 = vshrl.u32 %v1145, 5
    %v1147 = vand.u32 %v1145, 31
    %v1148 = vsub.s32 32, %v1147
    %v1149 = vshrl.u32 683565275, %v1148
    %v1150 = vshll.u32 683565275, %v1147
    %v1151 = vshrl.u32 2475754826, %v1148
    %v1152 = vor.u32 %v1150, %v1151
    %v1153 = vshll.u32 2475754826, %v1147
    %v1154 = vshrl.u32 2131351028, %v1148
    %v1155 = vor.u32 %v1153, %v1154
    %v1156 = vshll.u32 2131351028, %v1147
    %v1157 = vshrl.u32 2102212464, %v1148
    %v1158 = vor.u32 %v1156, %v1157
    %v1159 = vshll.u32 2102212464, %v1147
    %v1160 = vshrl.u32 920167782, %v1148
    %v1161 = vor.u32 %v1159, %v1160
    %v1162 = vshll.u32 920167782, %v1147
    %v1163 = vshrl.u32 1326507024, %v1148
    %v1164 = vor.u32 %v1162, %v1163
    %vm1165 = vcmp.lt.s32.totalorder %v1146, 1
    %vm1166 = vcmp.lt.s32.totalorder %v1146, 2
    %vm1167 = vcmp.lt.s32.totalorder %v1146, 3
    %vm1168 = vcmp.lt.s32.totalorder %v1146, 4
    %v1169 = vsel %vm1165, %v1149, %v1152
    %v1170 = vsel %vm1168, %v1158, 2102212464
    %v1171 = vsel %vm1167, %v1155, %v1170
    %v1172 = vsel %vm1166, %v1169, %v1171
    %v1173 = vsel %vm1165, %v1152, %v1155
    %v1174 = vsel %vm1168, %v1161, 920167782
    %v1175 = vsel %vm1167, %v1158, %v1174
    %v1176 = vsel %vm1166, %v1173, %v1175
    %v1177 = vsel %vm1165, %v1155, %v1158
    %v1178 = vsel %vm1168, %v1164, 1326507024
    %v1179 = vsel %vm1167, %v1161, %v1178
    %v1180 = vsel %vm1166, %v1177, %v1179
    %v1181 = vshll.u32 %v1141, 8
    %v1182 = vmul.u32.u64.compose %v1181, %v1180
    %v1183 = vextract.low.u32 %v1182
    %v1184 = vextract.high.u32 %v1182
    %v1185 = vmul.u32.u64.compose %v1181, %v1176
    %v1186 = vextract.low.u32 %v1185
    %v1187 = vextract.high.u32 %v1185
    %v1188 = vmul.u32 %v1181, %v1172
    %v1189 = vadd.s32 %v1184, %v1186
    %vm1190 = vc.u32 %v1184, %v1186
    %v1191 = vadd.s32 %v1187, 1
    %v1192 = vsel %vm1190, %v1191, %v1187
    %v1193 = vadd.s32 %v1188, %v1192
    %v1194 = vadd.s32 %v1193, 536870912
    %v1195 = vshrl.u32 %v1194, 30
    %v1196 = vshll.u32 %v1195, 30
    %v1197 = vsub.s32 %v1193, %v1196
    %vm1198 = vcmp.lt.s32.totalorder %v1197, 0
    %v1199 = vsub.s32 0, %v1197
    %v1200 = vsel %vm1198, %v1199, %v1197
    %v1201 = vclz %v1200
    %v1202 = vsub.s32 %v1201, 2
    %vm1203 = vcmp.gt.s32.totalorder 0, %v1202
    %v1204 = vsel %vm1203, 0, %v1202
    %v1205 = vsub.s32 32, %v1204
    %v1206 = vshll.u32 %v1197, %v1204
    %v1207 = vshrl.u32 %v1189, %v1205
    %v1208 = vor.u32 %v1206, %v1207
    %v1209 = vsub.s32 4294967266, %v1204
    %v1210 = vadd.s32 %v1209, 127
    %v1211 = vshll.u32 %v1210, 23
    %v1212 = vor.u32 4788187, %v1211
    %v1213 = vand.u32 2147483647, %v1212
    %v1215 = vcvt.s32.f32 %v1208
    %v1216 = vmul.f32 %v1215, %v1213
    %v1217 = vxor.u32 %v1216, 2147483648
    %v1218 = vsel %vm1135, %v1217, %v1216
    %v1219 = vsub.s32 4, %v1195
    %v1220 = vsel %vm1135, %v1219, %v1195
    %v1221 = vsel %vm1134, %v821, %v1218
    %v1222 = vsel %vm1134, 0, %v1220
    %v1223 = vcosq.f32.pop %v1221
    %v1224 = vsinq.f32.pop %v1221
    %vm1225 = vweird.f32 %v821
    %v1226 = vand.u32 %v1222, 3
    %vm1227 = vcmp.lt.s32.totalorder %v1226, 2
    %vm1228 = vcmp.eq.s32.totalorder %v1226, 0
    %v1229 = vxor.u32 %v1224, 2147483648
    %v1230 = vsel %vm1228, %v1223, %v1229
    %vm1231 = vcmp.eq.s32.totalorder %v1226, 2
    %v1232 = vxor.u32 %v1223, 2147483648
    %v1233 = vsel %vm1231, %v1232, %v1224
    %v1234 = vsel %vm1227, %v1230, %v1233
    %v1235 = vsel %vm1225, nan, %v1234
    %v1236 = vmul.f32 %v925, %v925
    %v1237 = vmul.f32 %v1029, %v1029
    %v1238 = vmul.f32 %v1132, %v1132
    %v1239 = vmul.f32 %v1235, %v1235
    %v1240 = vadd.f32 %v1236, %v1237
    %v1241 = vadd.f32 %v1240, %v1238
    %v1242 = vadd.f32 %v1241, %v1239
    %1243 = vadd.xlane.f32.xlu0 %v1242
    %v1244 = vpop.xlane.xlu0 %1243
    %v1245 = vrsqrt.pop %v1244
    %v1246 = vmul.f32 %v925, %v1245
    %v1247 = vmul.f32 %v1029, %v1245
    %v1248 = vmul.f32 %v1132, %v1245
    %v1249 = vmul.f32 %v1235, %v1245
    %v1250 = vpack.c.bf16 %v1246, %v1246
    %v1251 = vpack.c.bf16 %v1247, %v1247
    %v1252 = vpack.c.bf16 %v1248, %v1248
    %v1253 = vpack.c.bf16 %v1249, %v1249
    %v1254 = vlaneseq
    %v1255 = vshrl.u32 %v1254, 7
    %v1256 = vsub.s32 1, %v1255
    %v1257 = vrot.slane %v793, %v1256
    %v1258 = vlaneseq
    %v1259 = vshrl.u32 %v1258, 7
    %v1260 = vsub.s32 1, %v1259
    %v1261 = vrot.slane %v794, %v1260
    %v1262 = vlaneseq
    %v1263 = vshrl.u32 %v1262, 7
    %v1264 = vsub.s32 1, %v1263
    %v1265 = vrot.slane %v795, %v1264
    %v1266 = vlaneseq
    %v1267 = vshrl.u32 %v1266, 7
    %v1268 = vsub.s32 1, %v1267
    %v1269 = vrot.slane %v796, %v1268
    %v1398 = vunpack.c.l.b16 %v97
    %v1399 = vunpack.c.h.b16 %v97
    %v1400 = vunpack.c.l.b16 %v98
    %v1401 = vunpack.c.h.b16 %v98
    %v1402 = vunpack.c.l.b16 %v101
    %v1403 = vunpack.c.h.b16 %v101
    %v1404 = vunpack.c.l.b16 %v102
    %v1405 = vunpack.c.h.b16 %v102
    %v1406 = vunpack.c.l.b16 %v105
    %v1407 = vunpack.c.h.b16 %v105
    %v1408 = vunpack.c.l.b16 %v106
    %v1409 = vunpack.c.h.b16 %v106
    %v1410 = vunpack.c.l.b16 %v109
    %v1411 = vunpack.c.h.b16 %v109
    %v1412 = vunpack.c.l.b16 %v110
    %v1413 = vunpack.c.h.b16 %v110
    %v1414 = vunpack.c.l.b16 %v113
    %v1415 = vunpack.c.h.b16 %v113
    %v1416 = vunpack.c.l.b16 %v114
    %v1417 = vunpack.c.h.b16 %v114
    %v1418 = vunpack.c.l.b16 %v117
    %v1419 = vunpack.c.h.b16 %v117
    %v1420 = vunpack.c.l.b16 %v118
    %v1421 = vunpack.c.h.b16 %v118
    %v1422 = vunpack.c.l.b16 %v121
    %v1423 = vunpack.c.h.b16 %v121
    %v1424 = vunpack.c.l.b16 %v122
    %v1425 = vunpack.c.h.b16 %v122
    %v1426 = vunpack.c.l.b16 %v125
    %v1427 = vunpack.c.h.b16 %v125
    %v1428 = vunpack.c.l.b16 %v126
    %v1429 = vunpack.c.h.b16 %v126
    %v1430 = vunpack.c.l.b16 %v129
    %v1431 = vunpack.c.h.b16 %v129
    %v1432 = vunpack.c.l.b16 %v130
    %v1433 = vunpack.c.h.b16 %v130
    %v1434 = vunpack.c.l.b16 %v133
    %v1435 = vunpack.c.h.b16 %v133
    %v1436 = vunpack.c.l.b16 %v134
    %v1437 = vunpack.c.h.b16 %v134
    %v1438 = vunpack.c.l.b16 %v137
    %v1439 = vunpack.c.h.b16 %v137
    %v1440 = vunpack.c.l.b16 %v138
    %v1441 = vunpack.c.h.b16 %v138
    %v1442 = vunpack.c.l.b16 %v141
    %v1443 = vunpack.c.h.b16 %v141
    %v1444 = vunpack.c.l.b16 %v142
    %v1445 = vunpack.c.h.b16 %v142
    %v1446 = vunpack.c.l.b16 %v145
    %v1447 = vunpack.c.h.b16 %v145
    %v1448 = vunpack.c.l.b16 %v146
    %v1449 = vunpack.c.h.b16 %v146
    %v1450 = vunpack.c.l.b16 %v149
    %v1451 = vunpack.c.h.b16 %v149
    %v1452 = vunpack.c.l.b16 %v150
    %v1453 = vunpack.c.h.b16 %v150
    %v1454 = vunpack.c.l.b16 %v153
    %v1455 = vunpack.c.h.b16 %v153
    %v1456 = vunpack.c.l.b16 %v154
    %v1457 = vunpack.c.h.b16 %v154
    %v1458 = vunpack.c.l.b16 %v157
    %v1459 = vunpack.c.h.b16 %v157
    %v1460 = vunpack.c.l.b16 %v158
    %v1461 = vunpack.c.h.b16 %v158
    %v1462 = vunpack.c.l.b16 %v161
    %v1463 = vunpack.c.h.b16 %v161
    %v1464 = vunpack.c.l.b16 %v162
    %v1465 = vunpack.c.h.b16 %v162
    %v1466 = vunpack.c.l.b16 %v165
    %v1467 = vunpack.c.h.b16 %v165
    %v1468 = vunpack.c.l.b16 %v166
    %v1469 = vunpack.c.h.b16 %v166
    %v1470 = vunpack.c.l.b16 %v169
    %v1471 = vunpack.c.h.b16 %v169
    %v1472 = vunpack.c.l.b16 %v170
    %v1473 = vunpack.c.h.b16 %v170
    %v1474 = vunpack.c.l.b16 %v173
    %v1475 = vunpack.c.h.b16 %v173
    %v1476 = vunpack.c.l.b16 %v174
    %v1477 = vunpack.c.h.b16 %v174
    %v1478 = vunpack.c.l.b16 %v177
    %v1479 = vunpack.c.h.b16 %v177
    %v1480 = vunpack.c.l.b16 %v178
    %v1481 = vunpack.c.h.b16 %v178
    %v1482 = vunpack.c.l.b16 %v181
    %v1483 = vunpack.c.h.b16 %v181
    %v1484 = vunpack.c.l.b16 %v182
    %v1485 = vunpack.c.h.b16 %v182
    %v1486 = vunpack.c.l.b16 %v185
    %v1487 = vunpack.c.h.b16 %v185
    %v1488 = vunpack.c.l.b16 %v186
    %v1489 = vunpack.c.h.b16 %v186
    %v1490 = vunpack.c.l.b16 %v189
    %v1491 = vunpack.c.h.b16 %v189
    %v1492 = vunpack.c.l.b16 %v190
    %v1493 = vunpack.c.h.b16 %v190
    %v1494 = vunpack.c.l.b16 %v193
    %v1495 = vunpack.c.h.b16 %v193
    %v1496 = vunpack.c.l.b16 %v194
    %v1497 = vunpack.c.h.b16 %v194
    %v1498 = vunpack.c.l.b16 %v197
    %v1499 = vunpack.c.h.b16 %v197
    %v1500 = vunpack.c.l.b16 %v198
    %v1501 = vunpack.c.h.b16 %v198
    %v1502 = vunpack.c.l.b16 %v201
    %v1503 = vunpack.c.h.b16 %v201
    %v1504 = vunpack.c.l.b16 %v202
    %v1505 = vunpack.c.h.b16 %v202
    %v1506 = vunpack.c.l.b16 %v205
    %v1507 = vunpack.c.h.b16 %v205
    %v1508 = vunpack.c.l.b16 %v206
    %v1509 = vunpack.c.h.b16 %v206
    %v1510 = vunpack.c.l.b16 %v209
    %v1511 = vunpack.c.h.b16 %v209
    %v1512 = vunpack.c.l.b16 %v210
    %v1513 = vunpack.c.h.b16 %v210
    %v1514 = vunpack.c.l.b16 %v213
    %v1515 = vunpack.c.h.b16 %v213
    %v1516 = vunpack.c.l.b16 %v214
    %v1517 = vunpack.c.h.b16 %v214
    %v1518 = vunpack.c.l.b16 %v217
    %v1519 = vunpack.c.h.b16 %v217
    %v1520 = vunpack.c.l.b16 %v218
    %v1521 = vunpack.c.h.b16 %v218
    %v1522 = vunpack.c.l.b16 %v221
    %v1523 = vunpack.c.h.b16 %v221
    %v1524 = vunpack.c.l.b16 %v222
    %v1525 = vunpack.c.h.b16 %v222
    %v1526 = vunpack.c.l.b16 %v225
    %v1527 = vunpack.c.h.b16 %v225
    %v1528 = vunpack.c.l.b16 %v226
    %v1529 = vunpack.c.h.b16 %v226
    %v1530 = vunpack.c.l.b16 %v229
    %v1531 = vunpack.c.h.b16 %v229
    %v1532 = vunpack.c.l.b16 %v230
    %v1533 = vunpack.c.h.b16 %v230
    %v1534 = vunpack.c.l.b16 %v233
    %v1535 = vunpack.c.h.b16 %v233
    %v1536 = vunpack.c.l.b16 %v234
    %v1537 = vunpack.c.h.b16 %v234
    %v1538 = vunpack.c.l.b16 %v237
    %v1539 = vunpack.c.h.b16 %v237
    %v1540 = vunpack.c.l.b16 %v238
    %v1541 = vunpack.c.h.b16 %v238
    %v1542 = vunpack.c.l.b16 %v241
    %v1543 = vunpack.c.h.b16 %v241
    %v1544 = vunpack.c.l.b16 %v242
    %v1545 = vunpack.c.h.b16 %v242
    %v1546 = vunpack.c.l.b16 %v245
    %v1547 = vunpack.c.h.b16 %v245
    %v1548 = vunpack.c.l.b16 %v246
    %v1549 = vunpack.c.h.b16 %v246
    %v1550 = vunpack.c.l.b16 %v249
    %v1551 = vunpack.c.h.b16 %v249
    %v1552 = vunpack.c.l.b16 %v250
    %v1553 = vunpack.c.h.b16 %v250
    %v1554 = vunpack.c.l.b16 %v253
    %v1555 = vunpack.c.h.b16 %v253
    %v1556 = vunpack.c.l.b16 %v254
    %v1557 = vunpack.c.h.b16 %v254
    %v1558 = vunpack.c.l.b16 %v257
    %v1559 = vunpack.c.h.b16 %v257
    %v1560 = vunpack.c.l.b16 %v258
    %v1561 = vunpack.c.h.b16 %v258
    %v1562 = vunpack.c.l.b16 %v261
    %v1563 = vunpack.c.h.b16 %v261
    %v1564 = vunpack.c.l.b16 %v262
    %v1565 = vunpack.c.h.b16 %v262
    %v1566 = vunpack.c.l.b16 %v265
    %v1567 = vunpack.c.h.b16 %v265
    %v1568 = vunpack.c.l.b16 %v266
    %v1569 = vunpack.c.h.b16 %v266
    %v1570 = vunpack.c.l.b16 %v269
    %v1571 = vunpack.c.h.b16 %v269
    %v1572 = vunpack.c.l.b16 %v270
    %v1573 = vunpack.c.h.b16 %v270
    %v1574 = vunpack.c.l.b16 %v273
    %v1575 = vunpack.c.h.b16 %v273
    %v1576 = vunpack.c.l.b16 %v274
    %v1577 = vunpack.c.h.b16 %v274
    %v1578 = vunpack.c.l.b16 %v277
    %v1579 = vunpack.c.h.b16 %v277
    %v1580 = vunpack.c.l.b16 %v278
    %v1581 = vunpack.c.h.b16 %v278
    %v1582 = vunpack.c.l.b16 %v281
    %v1583 = vunpack.c.h.b16 %v281
    %v1584 = vunpack.c.l.b16 %v282
    %v1585 = vunpack.c.h.b16 %v282
    %v1586 = vunpack.c.l.b16 %v285
    %v1587 = vunpack.c.h.b16 %v285
    %v1588 = vunpack.c.l.b16 %v286
    %v1589 = vunpack.c.h.b16 %v286
    %v1590 = vunpack.c.l.b16 %v289
    %v1591 = vunpack.c.h.b16 %v289
    %v1592 = vunpack.c.l.b16 %v290
    %v1593 = vunpack.c.h.b16 %v290
    %v1594 = vunpack.c.l.b16 %v293
    %v1595 = vunpack.c.h.b16 %v293
    %v1596 = vunpack.c.l.b16 %v294
    %v1597 = vunpack.c.h.b16 %v294
    %v1598 = vunpack.c.l.b16 %v297
    %v1599 = vunpack.c.h.b16 %v297
    %v1600 = vunpack.c.l.b16 %v298
    %v1601 = vunpack.c.h.b16 %v298
    %v1602 = vunpack.c.l.b16 %v301
    %v1603 = vunpack.c.h.b16 %v301
    %v1604 = vunpack.c.l.b16 %v302
    %v1605 = vunpack.c.h.b16 %v302
    %v1606 = vunpack.c.l.b16 %v305
    %v1607 = vunpack.c.h.b16 %v305
    %v1608 = vunpack.c.l.b16 %v306
    %v1609 = vunpack.c.h.b16 %v306
    %v1610 = vunpack.c.l.b16 %v309
    %v1611 = vunpack.c.h.b16 %v309
    %v1612 = vunpack.c.l.b16 %v310
    %v1613 = vunpack.c.h.b16 %v310
    %v1614 = vunpack.c.l.b16 %v313
    %v1615 = vunpack.c.h.b16 %v313
    %v1616 = vunpack.c.l.b16 %v314
    %v1617 = vunpack.c.h.b16 %v314
    %v1618 = vunpack.c.l.b16 %v317
    %v1619 = vunpack.c.h.b16 %v317
    %v1620 = vunpack.c.l.b16 %v318
    %v1621 = vunpack.c.h.b16 %v318
    %v1622 = vunpack.c.l.b16 %v321
    %v1623 = vunpack.c.h.b16 %v321
    %v1624 = vunpack.c.l.b16 %v322
    %v1625 = vunpack.c.h.b16 %v322
    %v1626 = vunpack.c.l.b16 %v325
    %v1627 = vunpack.c.h.b16 %v325
    %v1628 = vunpack.c.l.b16 %v326
    %v1629 = vunpack.c.h.b16 %v326
    %v1630 = vunpack.c.l.b16 %v329
    %v1631 = vunpack.c.h.b16 %v329
    %v1632 = vunpack.c.l.b16 %v330
    %v1633 = vunpack.c.h.b16 %v330
    %v1634 = vunpack.c.l.b16 %v333
    %v1635 = vunpack.c.h.b16 %v333
    %v1636 = vunpack.c.l.b16 %v334
    %v1637 = vunpack.c.h.b16 %v334
    %v1638 = vunpack.c.l.b16 %v337
    %v1639 = vunpack.c.h.b16 %v337
    %v1640 = vunpack.c.l.b16 %v338
    %v1641 = vunpack.c.h.b16 %v338
    %v1642 = vunpack.c.l.b16 %v341
    %v1643 = vunpack.c.h.b16 %v341
    %v1644 = vunpack.c.l.b16 %v342
    %v1645 = vunpack.c.h.b16 %v342
    %v1646 = vunpack.c.l.b16 %v345
    %v1647 = vunpack.c.h.b16 %v345
    %v1648 = vunpack.c.l.b16 %v346
    %v1649 = vunpack.c.h.b16 %v346
    %v1650 = vunpack.c.l.b16 %v349
    %v1651 = vunpack.c.h.b16 %v349
    %v1652 = vunpack.c.l.b16 %v350
    %v1653 = vunpack.c.h.b16 %v350
    %v1654 = vpack.c.b16 %v1402, %v1398
    %v1655 = vpack.c.b16 %v1403, %v1399
    %v1656 = vpack.c.b16 %v1404, %v1400
    %v1657 = vpack.c.b16 %v1405, %v1401
    %v1658 = vpack.c.b16 %v1410, %v1406
    %v1659 = vpack.c.b16 %v1411, %v1407
    %v1660 = vpack.c.b16 %v1412, %v1408
    %v1661 = vpack.c.b16 %v1413, %v1409
    %v1662 = vpack.c.b16 %v1418, %v1414
    %v1663 = vpack.c.b16 %v1419, %v1415
    %v1664 = vpack.c.b16 %v1420, %v1416
    %v1665 = vpack.c.b16 %v1421, %v1417
    %v1666 = vpack.c.b16 %v1426, %v1422
    %v1667 = vpack.c.b16 %v1427, %v1423
    %v1668 = vpack.c.b16 %v1428, %v1424
    %v1669 = vpack.c.b16 %v1429, %v1425
    %v1670 = vpack.c.b16 %v1434, %v1430
    %v1671 = vpack.c.b16 %v1435, %v1431
    %v1672 = vpack.c.b16 %v1436, %v1432
    %v1673 = vpack.c.b16 %v1437, %v1433
    %v1674 = vpack.c.b16 %v1442, %v1438
    %v1675 = vpack.c.b16 %v1443, %v1439
    %v1676 = vpack.c.b16 %v1444, %v1440
    %v1677 = vpack.c.b16 %v1445, %v1441
    %v1678 = vpack.c.b16 %v1450, %v1446
    %v1679 = vpack.c.b16 %v1451, %v1447
    %v1680 = vpack.c.b16 %v1452, %v1448
    %v1681 = vpack.c.b16 %v1453, %v1449
    %v1682 = vpack.c.b16 %v1458, %v1454
    %v1683 = vpack.c.b16 %v1459, %v1455
    %v1684 = vpack.c.b16 %v1460, %v1456
    %v1685 = vpack.c.b16 %v1461, %v1457
    %v1686 = vpack.c.b16 %v1466, %v1462
    %v1687 = vpack.c.b16 %v1467, %v1463
    %v1688 = vpack.c.b16 %v1468, %v1464
    %v1689 = vpack.c.b16 %v1469, %v1465
    %v1690 = vpack.c.b16 %v1474, %v1470
    %v1691 = vpack.c.b16 %v1475, %v1471
    %v1692 = vpack.c.b16 %v1476, %v1472
    %v1693 = vpack.c.b16 %v1477, %v1473
    %v1694 = vpack.c.b16 %v1482, %v1478
    %v1695 = vpack.c.b16 %v1483, %v1479
    %v1696 = vpack.c.b16 %v1484, %v1480
    %v1697 = vpack.c.b16 %v1485, %v1481
    %v1698 = vpack.c.b16 %v1490, %v1486
    %v1699 = vpack.c.b16 %v1491, %v1487
    %v1700 = vpack.c.b16 %v1492, %v1488
    %v1701 = vpack.c.b16 %v1493, %v1489
    %v1702 = vpack.c.b16 %v1498, %v1494
    %v1703 = vpack.c.b16 %v1499, %v1495
    %v1704 = vpack.c.b16 %v1500, %v1496
    %v1705 = vpack.c.b16 %v1501, %v1497
    %v1706 = vpack.c.b16 %v1506, %v1502
    %v1707 = vpack.c.b16 %v1507, %v1503
    %v1708 = vpack.c.b16 %v1508, %v1504
    %v1709 = vpack.c.b16 %v1509, %v1505
    %v1710 = vpack.c.b16 %v1514, %v1510
    %v1711 = vpack.c.b16 %v1515, %v1511
    %v1712 = vpack.c.b16 %v1516, %v1512
    %v1713 = vpack.c.b16 %v1517, %v1513
    %v1714 = vpack.c.b16 %v1522, %v1518
    %v1715 = vpack.c.b16 %v1523, %v1519
    %v1716 = vpack.c.b16 %v1524, %v1520
    %v1717 = vpack.c.b16 %v1525, %v1521
    %v1718 = vpack.c.b16 %v1530, %v1526
    %v1719 = vpack.c.b16 %v1531, %v1527
    %v1720 = vpack.c.b16 %v1532, %v1528
    %v1721 = vpack.c.b16 %v1533, %v1529
    %v1722 = vpack.c.b16 %v1538, %v1534
    %v1723 = vpack.c.b16 %v1539, %v1535
    %v1724 = vpack.c.b16 %v1540, %v1536
    %v1725 = vpack.c.b16 %v1541, %v1537
    %v1726 = vpack.c.b16 %v1546, %v1542
    %v1727 = vpack.c.b16 %v1547, %v1543
    %v1728 = vpack.c.b16 %v1548, %v1544
    %v1729 = vpack.c.b16 %v1549, %v1545
    %v1730 = vpack.c.b16 %v1554, %v1550
    %v1731 = vpack.c.b16 %v1555, %v1551
    %v1732 = vpack.c.b16 %v1556, %v1552
    %v1733 = vpack.c.b16 %v1557, %v1553
    %v1734 = vpack.c.b16 %v1562, %v1558
    %v1735 = vpack.c.b16 %v1563, %v1559
    %v1736 = vpack.c.b16 %v1564, %v1560
    %v1737 = vpack.c.b16 %v1565, %v1561
    %v1738 = vpack.c.b16 %v1570, %v1566
    %v1739 = vpack.c.b16 %v1571, %v1567
    %v1740 = vpack.c.b16 %v1572, %v1568
    %v1741 = vpack.c.b16 %v1573, %v1569
    %v1742 = vpack.c.b16 %v1578, %v1574
    %v1743 = vpack.c.b16 %v1579, %v1575
    %v1744 = vpack.c.b16 %v1580, %v1576
    %v1745 = vpack.c.b16 %v1581, %v1577
    %v1746 = vpack.c.b16 %v1586, %v1582
    %v1747 = vpack.c.b16 %v1587, %v1583
    %v1748 = vpack.c.b16 %v1588, %v1584
    %v1749 = vpack.c.b16 %v1589, %v1585
    %v1750 = vpack.c.b16 %v1594, %v1590
    %v1751 = vpack.c.b16 %v1595, %v1591
    %v1752 = vpack.c.b16 %v1596, %v1592
    %v1753 = vpack.c.b16 %v1597, %v1593
    %v1754 = vpack.c.b16 %v1602, %v1598
    %v1755 = vpack.c.b16 %v1603, %v1599
    %v1756 = vpack.c.b16 %v1604, %v1600
    %v1757 = vpack.c.b16 %v1605, %v1601
    %v1758 = vpack.c.b16 %v1610, %v1606
    %v1759 = vpack.c.b16 %v1611, %v1607
    %v1760 = vpack.c.b16 %v1612, %v1608
    %v1761 = vpack.c.b16 %v1613, %v1609
    %v1762 = vpack.c.b16 %v1618, %v1614
    %v1763 = vpack.c.b16 %v1619, %v1615
    %v1764 = vpack.c.b16 %v1620, %v1616
    %v1765 = vpack.c.b16 %v1621, %v1617
    %v1766 = vpack.c.b16 %v1626, %v1622
    %v1767 = vpack.c.b16 %v1627, %v1623
    %v1768 = vpack.c.b16 %v1628, %v1624
    %v1769 = vpack.c.b16 %v1629, %v1625
    %v1770 = vpack.c.b16 %v1634, %v1630
    %v1771 = vpack.c.b16 %v1635, %v1631
    %v1772 = vpack.c.b16 %v1636, %v1632
    %v1773 = vpack.c.b16 %v1637, %v1633
    %v1774 = vpack.c.b16 %v1642, %v1638
    %v1775 = vpack.c.b16 %v1643, %v1639
    %v1776 = vpack.c.b16 %v1644, %v1640
    %v1777 = vpack.c.b16 %v1645, %v1641
    %v1778 = vpack.c.b16 %v1650, %v1646
    %v1779 = vpack.c.b16 %v1651, %v1647
    %v1780 = vpack.c.b16 %v1652, %v1648
    %v1781 = vpack.c.b16 %v1653, %v1649
    %1910 = vmatprep.subr.bf16.mxu0 %v1655
    %1911 = vmatpush1.bf16.msra.mxu0 %v1654
    %1912 = vmatprep.subr.bf16.mxu0 %v1659
    %1913 = vmatpush1.bf16.msra.mxu0 %v1658
    %1914 = vmatprep.subr.bf16.mxu0 %v1663
    %1915 = vmatpush1.bf16.msra.mxu0 %v1662
    %1916 = vmatprep.subr.bf16.mxu0 %v1667
    %1917 = vmatpush1.bf16.msra.mxu0 %v1666
    %1918 = vmatprep.subr.bf16.mxu0 %v1671
    %1919 = vmatpush1.bf16.msra.mxu0 %v1670
    %1920 = vmatprep.subr.bf16.mxu0 %v1675
    %1921 = vmatpush1.bf16.msra.mxu0 %v1674
    %1922 = vmatprep.subr.bf16.mxu0 %v1679
    %1923 = vmatpush1.bf16.msra.mxu0 %v1678
    %1924 = vmatprep.subr.bf16.mxu0 %v1683
    %1925 = vmatpush1.bf16.msra.mxu0 %v1682
    %1926 = vmatprep.subr.bf16.mxu0 %v1687
    %1927 = vmatpush1.bf16.msra.mxu0 %v1686
    %1928 = vmatprep.subr.bf16.mxu0 %v1691
    %1929 = vmatpush1.bf16.msra.mxu0 %v1690
    %1930 = vmatprep.subr.bf16.mxu0 %v1695
    %1931 = vmatpush1.bf16.msra.mxu0 %v1694
    %1932 = vmatprep.subr.bf16.mxu0 %v1699
    %1933 = vmatpush1.bf16.msra.mxu0 %v1698
    %1934 = vmatprep.subr.bf16.mxu0 %v1703
    %1935 = vmatpush1.bf16.msra.mxu0 %v1702
    %1936 = vmatprep.subr.bf16.mxu0 %v1707
    %1937 = vmatpush1.bf16.msra.mxu0 %v1706
    %1938 = vmatprep.subr.bf16.mxu0 %v1711
    %1939 = vmatpush1.bf16.msra.mxu0 %v1710
    %1940 = vmatprep.subr.bf16.mxu0 %v1715
    %1941 = vmatpush1.bf16.msra.mxu0 %v1714
    %1942 = vmatprep.mubr.bf16.mxu0 %v1251
    %1943 = vmatmul.mubr.bf16.gmra.mrb[0].mxu0 %v1250
    %v1944 = vpop.f32.mrb[0].mxu0
    %v1945 = vadd.f32 %v1257, %v1944
    %v1946 = vpop.f32.mrb[0].mxu0
    %v1947 = vadd.f32 %v1261, %v1946
    %v1948 = vpop.f32.mrb[0].mxu0
    %v1949 = vpop.f32.mrb[0].mxu0
    %1950 = vdwg.mxu0
    %1951 = vmatprep.subr.bf16.mxu0 %v1719
    %1952 = vmatpush1.bf16.msra.mxu0 %v1718
    %1953 = vmatprep.subr.bf16.mxu0 %v1723
    %1954 = vmatpush1.bf16.msra.mxu0 %v1722
    %1955 = vmatprep.subr.bf16.mxu0 %v1727
    %1956 = vmatpush1.bf16.msra.mxu0 %v1726
    %1957 = vmatprep.subr.bf16.mxu0 %v1731
    %1958 = vmatpush1.bf16.msra.mxu0 %v1730
    %1959 = vmatprep.subr.bf16.mxu0 %v1735
    %1960 = vmatpush1.bf16.msra.mxu0 %v1734
    %1961 = vmatprep.subr.bf16.mxu0 %v1739
    %1962 = vmatpush1.bf16.msra.mxu0 %v1738
    %1963 = vmatprep.subr.bf16.mxu0 %v1743
    %1964 = vmatpush1.bf16.msra.mxu0 %v1742
    %1965 = vmatprep.subr.bf16.mxu0 %v1747
    %1966 = vmatpush1.bf16.msra.mxu0 %v1746
    %1967 = vmatprep.subr.bf16.mxu0 %v1751
    %1968 = vmatpush1.bf16.msra.mxu0 %v1750
    %1969 = vmatprep.subr.bf16.mxu0 %v1755
    %1970 = vmatpush1.bf16.msra.mxu0 %v1754
    %1971 = vmatprep.subr.bf16.mxu0 %v1759
    %1972 = vmatpush1.bf16.msra.mxu0 %v1758
    %1973 = vmatprep.subr.bf16.mxu0 %v1763
    %1974 = vmatpush1.bf16.msra.mxu0 %v1762
    %1975 = vmatprep.subr.bf16.mxu0 %v1767
    %1976 = vmatpush1.bf16.msra.mxu0 %v1766
    %1977 = vmatprep.subr.bf16.mxu0 %v1771
    %1978 = vmatpush1.bf16.msra.mxu0 %v1770
    %1979 = vmatprep.subr.bf16.mxu0 %v1775
    %1980 = vmatpush1.bf16.msra.mxu0 %v1774
    %1981 = vmatprep.subr.bf16.mxu0 %v1779
    %1982 = vmatpush1.bf16.msra.mxu0 %v1778
    %1983 = vmatprep.mubr.bf16.mxu0 %v1253
    %1984 = vmatmul.mubr.bf16.gmra.mrb[0].mxu0 %v1252
    %v1985 = vpop.f32.mrb[0].mxu0
    %v1986 = vadd.f32 %v1945, %v1985
    %v1987 = vpop.f32.mrb[0].mxu0
    %v1988 = vadd.f32 %v1947, %v1987
    %v1989 = vpop.f32.mrb[0].mxu0
    %v1990 = vpop.f32.mrb[0].mxu0
    %1991 = vdwg.mxu0
    %1992 = vmatprep.subr.bf16.mxu0 %v1657
    %1993 = vmatpush1.bf16.msra.mxu0 %v1656
    %1994 = vmatprep.subr.bf16.mxu0 %v1661
    %1995 = vmatpush1.bf16.msra.mxu0 %v1660
    %1996 = vmatprep.subr.bf16.mxu0 %v1665
    %1997 = vmatpush1.bf16.msra.mxu0 %v1664
    %1998 = vmatprep.subr.bf16.mxu0 %v1669
    %1999 = vmatpush1.bf16.msra.mxu0 %v1668
    %2000 = vmatprep.subr.bf16.mxu0 %v1673
    %2001 = vmatpush1.bf16.msra.mxu0 %v1672
    %2002 = vmatprep.subr.bf16.mxu0 %v1677
    %2003 = vmatpush1.bf16.msra.mxu0 %v1676
    %2004 = vmatprep.subr.bf16.mxu0 %v1681
    %2005 = vmatpush1.bf16.msra.mxu0 %v1680
    %2006 = vmatprep.subr.bf16.mxu0 %v1685
    %2007 = vmatpush1.bf16.msra.mxu0 %v1684
    %2008 = vmatprep.subr.bf16.mxu0 %v1689
    %2009 = vmatpush1.bf16.msra.mxu0 %v1688
    %2010 = vmatprep.subr.bf16.mxu0 %v1693
    %2011 = vmatpush1.bf16.msra.mxu0 %v1692
    %2012 = vmatprep.subr.bf16.mxu0 %v1697
    %2013 = vmatpush1.bf16.msra.mxu0 %v1696
    %2014 = vmatprep.subr.bf16.mxu0 %v1701
    %2015 = vmatpush1.bf16.msra.mxu0 %v1700
    %2016 = vmatprep.subr.bf16.mxu0 %v1705
    %2017 = vmatpush1.bf16.msra.mxu0 %v1704
    %2018 = vmatprep.subr.bf16.mxu0 %v1709
    %2019 = vmatpush1.bf16.msra.mxu0 %v1708
    %2020 = vmatprep.subr.bf16.mxu0 %v1713
    %2021 = vmatpush1.bf16.msra.mxu0 %v1712
    %2022 = vmatprep.subr.bf16.mxu0 %v1717
    %2023 = vmatpush1.bf16.msra.mxu0 %v1716
    %2024 = vmatprep.mubr.bf16.mxu0 %v1251
    %2025 = vmatmul.mubr.bf16.gmra.mrb[0].mxu0 %v1250
    %v2026 = vpop.f32.mrb[0].mxu0
    %v2027 = vadd.f32 %v1265, %v2026
    %v2028 = vpop.f32.mrb[0].mxu0
    %v2029 = vadd.f32 %v1269, %v2028
    %v2030 = vpop.f32.mrb[0].mxu0
    %v2031 = vpop.f32.mrb[0].mxu0
    %2032 = vdwg.mxu0
    %2033 = vmatprep.subr.bf16.mxu0 %v1721
    %2034 = vmatpush1.bf16.msra.mxu0 %v1720
    %2035 = vmatprep.subr.bf16.mxu0 %v1725
    %2036 = vmatpush1.bf16.msra.mxu0 %v1724
    %2037 = vmatprep.subr.bf16.mxu0 %v1729
    %2038 = vmatpush1.bf16.msra.mxu0 %v1728
    %2039 = vmatprep.subr.bf16.mxu0 %v1733
    %2040 = vmatpush1.bf16.msra.mxu0 %v1732
    %2041 = vmatprep.subr.bf16.mxu0 %v1737
    %2042 = vmatpush1.bf16.msra.mxu0 %v1736
    %2043 = vmatprep.subr.bf16.mxu0 %v1741
    %2044 = vmatpush1.bf16.msra.mxu0 %v1740
    %2045 = vmatprep.subr.bf16.mxu0 %v1745
    %2046 = vmatpush1.bf16.msra.mxu0 %v1744
    %2047 = vmatprep.subr.bf16.mxu0 %v1749
    %2048 = vmatpush1.bf16.msra.mxu0 %v1748
    %2049 = vmatprep.subr.bf16.mxu0 %v1753
    %2050 = vmatpush1.bf16.msra.mxu0 %v1752
    %2051 = vmatprep.subr.bf16.mxu0 %v1757
    %2052 = vmatpush1.bf16.msra.mxu0 %v1756
    %2053 = vmatprep.subr.bf16.mxu0 %v1761
    %2054 = vmatpush1.bf16.msra.mxu0 %v1760
    %2055 = vmatprep.subr.bf16.mxu0 %v1765
    %2056 = vmatpush1.bf16.msra.mxu0 %v1764
    %2057 = vmatprep.subr.bf16.mxu0 %v1769
    %2058 = vmatpush1.bf16.msra.mxu0 %v1768
    %2059 = vmatprep.subr.bf16.mxu0 %v1773
    %2060 = vmatpush1.bf16.msra.mxu0 %v1772
    %2061 = vmatprep.subr.bf16.mxu0 %v1777
    %2062 = vmatpush1.bf16.msra.mxu0 %v1776
    %2063 = vmatprep.subr.bf16.mxu0 %v1781
    %2064 = vmatpush1.bf16.msra.mxu0 %v1780
    %2065 = vmatprep.mubr.bf16.mxu0 %v1253
    %2066 = vmatmul.mubr.bf16.gmra.mrb[0].mxu0 %v1252
    %v2067 = vpop.f32.mrb[0].mxu0
    %v2068 = vadd.f32 %v2027, %v2067
    %v2069 = vpop.f32.mrb[0].mxu0
    %v2070 = vadd.f32 %v2029, %v2069
    %v2071 = vpop.f32.mrb[0].mxu0
    %v2072 = vpop.f32.mrb[0].mxu0
    %2073 = vdwg.mxu0
    %v2074 = vxor.u32 %v1986, 2147483648
    %v2075 = vxor.u32 %v1988, 2147483648
    %v2076 = vxor.u32 %v2068, 2147483648
    %v2077 = vxor.u32 %v2070, 2147483648
    %v2078 = vmul.f32 %v2074, 1.442695
    %v2079 = vpow.pop %v2078
    %v2080 = vmul.f32 %v2075, 1.442695
    %v2081 = vpow.pop %v2080
    %v2082 = vmul.f32 %v2076, 1.442695
    %v2083 = vpow.pop %v2082
    %v2084 = vmul.f32 %v2077, 1.442695
    %v2085 = vpow.pop %v2084
    %v2086 = vadd.f32 %v2079, 1.0
    %v2087 = vadd.f32 %v2081, 1.0
    %v2088 = vadd.f32 %v2083, 1.0
    %v2089 = vadd.f32 %v2085, 1.0
    %v2090 = vrcp.pop %v2086
    %v2091 = vmul.f32 1.0, %v2090
    %v2092 = vrcp.pop %v2087
    %v2093 = vmul.f32 1.0, %v2092
    %v2094 = vrcp.pop %v2088
    %v2095 = vmul.f32 1.0, %v2094
    %v2096 = vrcp.pop %v2089
    %v2097 = vmul.f32 1.0, %v2096
    %v2098 = vmul.f32 %v1986, %v2091
    %v2099 = vmul.f32 %v1988, %v2093
    %v2100 = vmul.f32 %v2068, %v2095
    %v2101 = vmul.f32 %v2070, %v2097
    %v2102 = vpack.c.bf16 %v2098, %v2098
    %v2103 = vpack.c.bf16 %v2099, %v2099
    %v2104 = vpack.c.bf16 %v2100, %v2100
    %v2105 = vpack.c.bf16 %v2101, %v2101
    %v2106 = vlaneseq
    %v2107 = vshrl.u32 %v2106, 7
    %v2108 = vsub.s32 2, %v2107
    %v2109 = vrot.slane %v793, %v2108
    %v2110 = vlaneseq
    %v2111 = vshrl.u32 %v2110, 7
    %v2112 = vsub.s32 2, %v2111
    %v2113 = vrot.slane %v794, %v2112
    %v2114 = vlaneseq
    %v2115 = vshrl.u32 %v2114, 7
    %v2116 = vsub.s32 2, %v2115
    %v2117 = vrot.slane %v795, %v2116
    %v2118 = vlaneseq
    %v2119 = vshrl.u32 %v2118, 7
    %v2120 = vsub.s32 2, %v2119
    %v2121 = vrot.slane %v796, %v2120
    %v2250 = vunpack.c.l.b16 %v99
    %v2251 = vunpack.c.h.b16 %v99
    %v2252 = vunpack.c.l.b16 %v100
    %v2253 = vunpack.c.h.b16 %v100
    %v2254 = vunpack.c.l.b16 %v103
    %v2255 = vunpack.c.h.b16 %v103
    %v2256 = vunpack.c.l.b16 %v104
    %v2257 = vunpack.c.h.b16 %v104
    %v2258 = vunpack.c.l.b16 %v107
    %v2259 = vunpack.c.h.b16 %v107
    %v2260 = vunpack.c.l.b16 %v108
    %v2261 = vunpack.c.h.b16 %v108
    %v2262 = vunpack.c.l.b16 %v111
    %v2263 = vunpack.c.h.b16 %v111
    %v2264 = vunpack.c.l.b16 %v112
    %v2265 = vunpack.c.h.b16 %v112
    %v2266 = vunpack.c.l.b16 %v115
    %v2267 = vunpack.c.h.b16 %v115
    %v2268 = vunpack.c.l.b16 %v116
    %v2269 = vunpack.c.h.b16 %v116
    %v2270 = vunpack.c.l.b16 %v119
    %v2271 = vunpack.c.h.b16 %v119
    %v2272 = vunpack.c.l.b16 %v120
    %v2273 = vunpack.c.h.b16 %v120
    %v2274 = vunpack.c.l.b16 %v123
    %v2275 = vunpack.c.h.b16 %v123
    %v2276 = vunpack.c.l.b16 %v124
    %v2277 = vunpack.c.h.b16 %v124
    %v2278 = vunpack.c.l.b16 %v127
    %v2279 = vunpack.c.h.b16 %v127
    %v2280 = vunpack.c.l.b16 %v128
    %v2281 = vunpack.c.h.b16 %v128
    %v2282 = vunpack.c.l.b16 %v131
    %v2283 = vunpack.c.h.b16 %v131
    %v2284 = vunpack.c.l.b16 %v132
    %v2285 = vunpack.c.h.b16 %v132
    %v2286 = vunpack.c.l.b16 %v135
    %v2287 = vunpack.c.h.b16 %v135
    %v2288 = vunpack.c.l.b16 %v136
    %v2289 = vunpack.c.h.b16 %v136
    %v2290 = vunpack.c.l.b16 %v139
    %v2291 = vunpack.c.h.b16 %v139
    %v2292 = vunpack.c.l.b16 %v140
    %v2293 = vunpack.c.h.b16 %v140
    %v2294 = vunpack.c.l.b16 %v143
    %v2295 = vunpack.c.h.b16 %v143
    %v2296 = vunpack.c.l.b16 %v144
    %v2297 = vunpack.c.h.b16 %v144
    %v2298 = vunpack.c.l.b16 %v147
    %v2299 = vunpack.c.h.b16 %v147
    %v2300 = vunpack.c.l.b16 %v148
    %v2301 = vunpack.c.h.b16 %v148
    %v2302 = vunpack.c.l.b16 %v151
    %v2303 = vunpack.c.h.b16 %v151
    %v2304 = vunpack.c.l.b16 %v152
    %v2305 = vunpack.c.h.b16 %v152
    %v2306 = vunpack.c.l.b16 %v155
    %v2307 = vunpack.c.h.b16 %v155
    %v2308 = vunpack.c.l.b16 %v156
    %v2309 = vunpack.c.h.b16 %v156
    %v2310 = vunpack.c.l.b16 %v159
    %v2311 = vunpack.c.h.b16 %v159
    %v2312 = vunpack.c.l.b16 %v160
    %v2313 = vunpack.c.h.b16 %v160
    %v2314 = vunpack.c.l.b16 %v163
    %v2315 = vunpack.c.h.b16 %v163
    %v2316 = vunpack.c.l.b16 %v164
    %v2317 = vunpack.c.h.b16 %v164
    %v2318 = vunpack.c.l.b16 %v167
    %v2319 = vunpack.c.h.b16 %v167
    %v2320 = vunpack.c.l.b16 %v168
    %v2321 = vunpack.c.h.b16 %v168
    %v2322 = vunpack.c.l.b16 %v171
    %v2323 = vunpack.c.h.b16 %v171
    %v2324 = vunpack.c.l.b16 %v172
    %v2325 = vunpack.c.h.b16 %v172
    %v2326 = vunpack.c.l.b16 %v175
    %v2327 = vunpack.c.h.b16 %v175
    %v2328 = vunpack.c.l.b16 %v176
    %v2329 = vunpack.c.h.b16 %v176
    %v2330 = vunpack.c.l.b16 %v179
    %v2331 = vunpack.c.h.b16 %v179
    %v2332 = vunpack.c.l.b16 %v180
    %v2333 = vunpack.c.h.b16 %v180
    %v2334 = vunpack.c.l.b16 %v183
    %v2335 = vunpack.c.h.b16 %v183
    %v2336 = vunpack.c.l.b16 %v184
    %v2337 = vunpack.c.h.b16 %v184
    %v2338 = vunpack.c.l.b16 %v187
    %v2339 = vunpack.c.h.b16 %v187
    %v2340 = vunpack.c.l.b16 %v188
    %v2341 = vunpack.c.h.b16 %v188
    %v2342 = vunpack.c.l.b16 %v191
    %v2343 = vunpack.c.h.b16 %v191
    %v2344 = vunpack.c.l.b16 %v192
    %v2345 = vunpack.c.h.b16 %v192
    %v2346 = vunpack.c.l.b16 %v195
    %v2347 = vunpack.c.h.b16 %v195
    %v2348 = vunpack.c.l.b16 %v196
    %v2349 = vunpack.c.h.b16 %v196
    %v2350 = vunpack.c.l.b16 %v199
    %v2351 = vunpack.c.h.b16 %v199
    %v2352 = vunpack.c.l.b16 %v200
    %v2353 = vunpack.c.h.b16 %v200
    %v2354 = vunpack.c.l.b16 %v203
    %v2355 = vunpack.c.h.b16 %v203
    %v2356 = vunpack.c.l.b16 %v204
    %v2357 = vunpack.c.h.b16 %v204
    %v2358 = vunpack.c.l.b16 %v207
    %v2359 = vunpack.c.h.b16 %v207
    %v2360 = vunpack.c.l.b16 %v208
    %v2361 = vunpack.c.h.b16 %v208
    %v2362 = vunpack.c.l.b16 %v211
    %v2363 = vunpack.c.h.b16 %v211
    %v2364 = vunpack.c.l.b16 %v212
    %v2365 = vunpack.c.h.b16 %v212
    %v2366 = vunpack.c.l.b16 %v215
    %v2367 = vunpack.c.h.b16 %v215
    %v2368 = vunpack.c.l.b16 %v216
    %v2369 = vunpack.c.h.b16 %v216
    %v2370 = vunpack.c.l.b16 %v219
    %v2371 = vunpack.c.h.b16 %v219
    %v2372 = vunpack.c.l.b16 %v220
    %v2373 = vunpack.c.h.b16 %v220
    %v2374 = vunpack.c.l.b16 %v223
    %v2375 = vunpack.c.h.b16 %v223
    %v2376 = vunpack.c.l.b16 %v224
    %v2377 = vunpack.c.h.b16 %v224
    %v2378 = vunpack.c.l.b16 %v227
    %v2379 = vunpack.c.h.b16 %v227
    %v2380 = vunpack.c.l.b16 %v228
    %v2381 = vunpack.c.h.b16 %v228
    %v2382 = vunpack.c.l.b16 %v231
    %v2383 = vunpack.c.h.b16 %v231
    %v2384 = vunpack.c.l.b16 %v232
    %v2385 = vunpack.c.h.b16 %v232
    %v2386 = vunpack.c.l.b16 %v235
    %v2387 = vunpack.c.h.b16 %v235
    %v2388 = vunpack.c.l.b16 %v236
    %v2389 = vunpack.c.h.b16 %v236
    %v2390 = vunpack.c.l.b16 %v239
    %v2391 = vunpack.c.h.b16 %v239
    %v2392 = vunpack.c.l.b16 %v240
    %v2393 = vunpack.c.h.b16 %v240
    %v2394 = vunpack.c.l.b16 %v243
    %v2395 = vunpack.c.h.b16 %v243
    %v2396 = vunpack.c.l.b16 %v244
    %v2397 = vunpack.c.h.b16 %v244
    %v2398 = vunpack.c.l.b16 %v247
    %v2399 = vunpack.c.h.b16 %v247
    %v2400 = vunpack.c.l.b16 %v248
    %v2401 = vunpack.c.h.b16 %v248
    %v2402 = vunpack.c.l.b16 %v251
    %v2403 = vunpack.c.h.b16 %v251
    %v2404 = vunpack.c.l.b16 %v252
    %v2405 = vunpack.c.h.b16 %v252
    %v2406 = vunpack.c.l.b16 %v255
    %v2407 = vunpack.c.h.b16 %v255
    %v2408 = vunpack.c.l.b16 %v256
    %v2409 = vunpack.c.h.b16 %v256
    %v2410 = vunpack.c.l.b16 %v259
    %v2411 = vunpack.c.h.b16 %v259
    %v2412 = vunpack.c.l.b16 %v260
    %v2413 = vunpack.c.h.b16 %v260
    %v2414 = vunpack.c.l.b16 %v263
    %v2415 = vunpack.c.h.b16 %v263
    %v2416 = vunpack.c.l.b16 %v264
    %v2417 = vunpack.c.h.b16 %v264
    %v2418 = vunpack.c.l.b16 %v267
    %v2419 = vunpack.c.h.b16 %v267
    %v2420 = vunpack.c.l.b16 %v268
    %v2421 = vunpack.c.h.b16 %v268
    %v2422 = vunpack.c.l.b16 %v271
    %v2423 = vunpack.c.h.b16 %v271
    %v2424 = vunpack.c.l.b16 %v272
    %v2425 = vunpack.c.h.b16 %v272
    %v2426 = vunpack.c.l.b16 %v275
    %v2427 = vunpack.c.h.b16 %v275
    %v2428 = vunpack.c.l.b16 %v276
    %v2429 = vunpack.c.h.b16 %v276
    %v2430 = vunpack.c.l.b16 %v279
    %v2431 = vunpack.c.h.b16 %v279
    %v2432 = vunpack.c.l.b16 %v280
    %v2433 = vunpack.c.h.b16 %v280
    %v2434 = vunpack.c.l.b16 %v283
    %v2435 = vunpack.c.h.b16 %v283
    %v2436 = vunpack.c.l.b16 %v284
    %v2437 = vunpack.c.h.b16 %v284
    %v2438 = vunpack.c.l.b16 %v287
    %v2439 = vunpack.c.h.b16 %v287
    %v2440 = vunpack.c.l.b16 %v288
    %v2441 = vunpack.c.h.b16 %v288
    %v2442 = vunpack.c.l.b16 %v291
    %v2443 = vunpack.c.h.b16 %v291
    %v2444 = vunpack.c.l.b16 %v292
    %v2445 = vunpack.c.h.b16 %v292
    %v2446 = vunpack.c.l.b16 %v295
    %v2447 = vunpack.c.h.b16 %v295
    %v2448 = vunpack.c.l.b16 %v296
    %v2449 = vunpack.c.h.b16 %v296
    %v2450 = vunpack.c.l.b16 %v299
    %v2451 = vunpack.c.h.b16 %v299
    %v2452 = vunpack.c.l.b16 %v300
    %v2453 = vunpack.c.h.b16 %v300
    %v2454 = vunpack.c.l.b16 %v303
    %v2455 = vunpack.c.h.b16 %v303
    %v2456 = vunpack.c.l.b16 %v304
    %v2457 = vunpack.c.h.b16 %v304
    %v2458 = vunpack.c.l.b16 %v307
    %v2459 = vunpack.c.h.b16 %v307
    %v2460 = vunpack.c.l.b16 %v308
    %v2461 = vunpack.c.h.b16 %v308
    %v2462 = vunpack.c.l.b16 %v311
    %v2463 = vunpack.c.h.b16 %v311
    %v2464 = vunpack.c.l.b16 %v312
    %v2465 = vunpack.c.h.b16 %v312
    %v2466 = vunpack.c.l.b16 %v315
    %v2467 = vunpack.c.h.b16 %v315
    %v2468 = vunpack.c.l.b16 %v316
    %v2469 = vunpack.c.h.b16 %v316
    %v2470 = vunpack.c.l.b16 %v319
    %v2471 = vunpack.c.h.b16 %v319
    %v2472 = vunpack.c.l.b16 %v320
    %v2473 = vunpack.c.h.b16 %v320
    %v2474 = vunpack.c.l.b16 %v323
    %v2475 = vunpack.c.h.b16 %v323
    %v2476 = vunpack.c.l.b16 %v324
    %v2477 = vunpack.c.h.b16 %v324
    %v2478 = vunpack.c.l.b16 %v327
    %v2479 = vunpack.c.h.b16 %v327
    %v2480 = vunpack.c.l.b16 %v328
    %v2481 = vunpack.c.h.b16 %v328
    %v2482 = vunpack.c.l.b16 %v331
    %v2483 = vunpack.c.h.b16 %v331
    %v2484 = vunpack.c.l.b16 %v332
    %v2485 = vunpack.c.h.b16 %v332
    %v2486 = vunpack.c.l.b16 %v335
    %v2487 = vunpack.c.h.b16 %v335
    %v2488 = vunpack.c.l.b16 %v336
    %v2489 = vunpack.c.h.b16 %v336
    %v2490 = vunpack.c.l.b16 %v339
    %v2491 = vunpack.c.h.b16 %v339
    %v2492 = vunpack.c.l.b16 %v340
    %v2493 = vunpack.c.h.b16 %v340
    %v2494 = vunpack.c.l.b16 %v343
    %v2495 = vunpack.c.h.b16 %v343
    %v2496 = vunpack.c.l.b16 %v344
    %v2497 = vunpack.c.h.b16 %v344
    %v2498 = vunpack.c.l.b16 %v347
    %v2499 = vunpack.c.h.b16 %v347
    %v2500 = vunpack.c.l.b16 %v348
    %v2501 = vunpack.c.h.b16 %v348
    %v2502 = vunpack.c.l.b16 %v351
    %v2503 = vunpack.c.h.b16 %v351
    %v2504 = vunpack.c.l.b16 %v352
    %v2505 = vunpack.c.h.b16 %v352
    %v2506 = vpack.c.b16 %v2254, %v2250
    %v2507 = vpack.c.b16 %v2255, %v2251
    %v2508 = vpack.c.b16 %v2256, %v2252
    %v2509 = vpack.c.b16 %v2257, %v2253
    %v2510 = vpack.c.b16 %v2262, %v2258
    %v2511 = vpack.c.b16 %v2263, %v2259
    %v2512 = vpack.c.b16 %v2264, %v2260
    %v2513 = vpack.c.b16 %v2265, %v2261
    %v2514 = vpack.c.b16 %v2270, %v2266
    %v2515 = vpack.c.b16 %v2271, %v2267
    %v2516 = vpack.c.b16 %v2272, %v2268
    %v2517 = vpack.c.b16 %v2273, %v2269
    %v2518 = vpack.c.b16 %v2278, %v2274
    %v2519 = vpack.c.b16 %v2279, %v2275
    %v2520 = vpack.c.b16 %v2280, %v2276
    %v2521 = vpack.c.b16 %v2281, %v2277
    %v2522 = vpack.c.b16 %v2286, %v2282
    %v2523 = vpack.c.b16 %v2287, %v2283
    %v2524 = vpack.c.b16 %v2288, %v2284
    %v2525 = vpack.c.b16 %v2289, %v2285
    %v2526 = vpack.c.b16 %v2294, %v2290
    %v2527 = vpack.c.b16 %v2295, %v2291
    %v2528 = vpack.c.b16 %v2296, %v2292
    %v2529 = vpack.c.b16 %v2297, %v2293
    %v2530 = vpack.c.b16 %v2302, %v2298
    %v2531 = vpack.c.b16 %v2303, %v2299
    %v2532 = vpack.c.b16 %v2304, %v2300
    %v2533 = vpack.c.b16 %v2305, %v2301
    %v2534 = vpack.c.b16 %v2310, %v2306
    %v2535 = vpack.c.b16 %v2311, %v2307
    %v2536 = vpack.c.b16 %v2312, %v2308
    %v2537 = vpack.c.b16 %v2313, %v2309
    %v2538 = vpack.c.b16 %v2318, %v2314
    %v2539 = vpack.c.b16 %v2319, %v2315
    %v2540 = vpack.c.b16 %v2320, %v2316
    %v2541 = vpack.c.b16 %v2321, %v2317
    %v2542 = vpack.c.b16 %v2326, %v2322
    %v2543 = vpack.c.b16 %v2327, %v2323
    %v2544 = vpack.c.b16 %v2328, %v2324
    %v2545 = vpack.c.b16 %v2329, %v2325
    %v2546 = vpack.c.b16 %v2334, %v2330
    %v2547 = vpack.c.b16 %v2335, %v2331
    %v2548 = vpack.c.b16 %v2336, %v2332
    %v2549 = vpack.c.b16 %v2337, %v2333
    %v2550 = vpack.c.b16 %v2342, %v2338
    %v2551 = vpack.c.b16 %v2343, %v2339
    %v2552 = vpack.c.b16 %v2344, %v2340
    %v2553 = vpack.c.b16 %v2345, %v2341
    %v2554 = vpack.c.b16 %v2350, %v2346
    %v2555 = vpack.c.b16 %v2351, %v2347
    %v2556 = vpack.c.b16 %v2352, %v2348
    %v2557 = vpack.c.b16 %v2353, %v2349
    %v2558 = vpack.c.b16 %v2358, %v2354
    %v2559 = vpack.c.b16 %v2359, %v2355
    %v2560 = vpack.c.b16 %v2360, %v2356
    %v2561 = vpack.c.b16 %v2361, %v2357
    %v2562 = vpack.c.b16 %v2366, %v2362
    %v2563 = vpack.c.b16 %v2367, %v2363
    %v2564 = vpack.c.b16 %v2368, %v2364
    %v2565 = vpack.c.b16 %v2369, %v2365
    %v2566 = vpack.c.b16 %v2374, %v2370
    %v2567 = vpack.c.b16 %v2375, %v2371
    %v2568 = vpack.c.b16 %v2376, %v2372
    %v2569 = vpack.c.b16 %v2377, %v2373
    %v2570 = vpack.c.b16 %v2382, %v2378
    %v2571 = vpack.c.b16 %v2383, %v2379
    %v2572 = vpack.c.b16 %v2384, %v2380
    %v2573 = vpack.c.b16 %v2385, %v2381
    %v2574 = vpack.c.b16 %v2390, %v2386
    %v2575 = vpack.c.b16 %v2391, %v2387
    %v2576 = vpack.c.b16 %v2392, %v2388
    %v2577 = vpack.c.b16 %v2393, %v2389
    %v2578 = vpack.c.b16 %v2398, %v2394
    %v2579 = vpack.c.b16 %v2399, %v2395
    %v2580 = vpack.c.b16 %v2400, %v2396
    %v2581 = vpack.c.b16 %v2401, %v2397
    %v2582 = vpack.c.b16 %v2406, %v2402
    %v2583 = vpack.c.b16 %v2407, %v2403
    %v2584 = vpack.c.b16 %v2408, %v2404
    %v2585 = vpack.c.b16 %v2409, %v2405
    %v2586 = vpack.c.b16 %v2414, %v2410
    %v2587 = vpack.c.b16 %v2415, %v2411
    %v2588 = vpack.c.b16 %v2416, %v2412
    %v2589 = vpack.c.b16 %v2417, %v2413
    %v2590 = vpack.c.b16 %v2422, %v2418
    %v2591 = vpack.c.b16 %v2423, %v2419
    %v2592 = vpack.c.b16 %v2424, %v2420
    %v2593 = vpack.c.b16 %v2425, %v2421
    %v2594 = vpack.c.b16 %v2430, %v2426
    %v2595 = vpack.c.b16 %v2431, %v2427
    %v2596 = vpack.c.b16 %v2432, %v2428
    %v2597 = vpack.c.b16 %v2433, %v2429
    %v2598 = vpack.c.b16 %v2438, %v2434
    %v2599 = vpack.c.b16 %v2439, %v2435
    %v2600 = vpack.c.b16 %v2440, %v2436
    %v2601 = vpack.c.b16 %v2441, %v2437
    %v2602 = vpack.c.b16 %v2446, %v2442
    %v2603 = vpack.c.b16 %v2447, %v2443
    %v2604 = vpack.c.b16 %v2448, %v2444
    %v2605 = vpack.c.b16 %v2449, %v2445
    %v2606 = vpack.c.b16 %v2454, %v2450
    %v2607 = vpack.c.b16 %v2455, %v2451
    %v2608 = vpack.c.b16 %v2456, %v2452
    %v2609 = vpack.c.b16 %v2457, %v2453
    %v2610 = vpack.c.b16 %v2462, %v2458
    %v2611 = vpack.c.b16 %v2463, %v2459
    %v2612 = vpack.c.b16 %v2464, %v2460
    %v2613 = vpack.c.b16 %v2465, %v2461
    %v2614 = vpack.c.b16 %v2470, %v2466
    %v2615 = vpack.c.b16 %v2471, %v2467
    %v2616 = vpack.c.b16 %v2472, %v2468
    %v2617 = vpack.c.b16 %v2473, %v2469
    %v2618 = vpack.c.b16 %v2478, %v2474
    %v2619 = vpack.c.b16 %v2479, %v2475
    %v2620 = vpack.c.b16 %v2480, %v2476
    %v2621 = vpack.c.b16 %v2481, %v2477
    %v2622 = vpack.c.b16 %v2486, %v2482
    %v2623 = vpack.c.b16 %v2487, %v2483
    %v2624 = vpack.c.b16 %v2488, %v2484
    %v2625 = vpack.c.b16 %v2489, %v2485
    %v2626 = vpack.c.b16 %v2494, %v2490
    %v2627 = vpack.c.b16 %v2495, %v2491
    %v2628 = vpack.c.b16 %v2496, %v2492
    %v2629 = vpack.c.b16 %v2497, %v2493
    %v2630 = vpack.c.b16 %v2502, %v2498
    %v2631 = vpack.c.b16 %v2503, %v2499
    %v2632 = vpack.c.b16 %v2504, %v2500
    %v2633 = vpack.c.b16 %v2505, %v2501
    %2762 = vmatprep.subr.bf16.mxu0 %v2507
    %2763 = vmatpush1.bf16.msra.mxu0 %v2506
    %2764 = vmatprep.subr.bf16.mxu0 %v2511
    %2765 = vmatpush1.bf16.msra.mxu0 %v2510
    %2766 = vmatprep.subr.bf16.mxu0 %v2515
    %2767 = vmatpush1.bf16.msra.mxu0 %v2514
    %2768 = vmatprep.subr.bf16.mxu0 %v2519
    %2769 = vmatpush1.bf16.msra.mxu0 %v2518
    %2770 = vmatprep.subr.bf16.mxu0 %v2523
    %2771 = vmatpush1.bf16.msra.mxu0 %v2522
    %2772 = vmatprep.subr.bf16.mxu0 %v2527
    %2773 = vmatpush1.bf16.msra.mxu0 %v2526
    %2774 = vmatprep.subr.bf16.mxu0 %v2531
    %2775 = vmatpush1.bf16.msra.mxu0 %v2530
    %2776 = vmatprep.subr.bf16.mxu0 %v2535
    %2777 = vmatpush1.bf16.msra.mxu0 %v2534
    %2778 = vmatprep.subr.bf16.mxu0 %v2539
    %2779 = vmatpush1.bf16.msra.mxu0 %v2538
    %2780 = vmatprep.subr.bf16.mxu0 %v2543
    %2781 = vmatpush1.bf16.msra.mxu0 %v2542
    %2782 = vmatprep.subr.bf16.mxu0 %v2547
    %2783 = vmatpush1.bf16.msra.mxu0 %v2546
    %2784 = vmatprep.subr.bf16.mxu0 %v2551
    %2785 = vmatpush1.bf16.msra.mxu0 %v2550
    %2786 = vmatprep.subr.bf16.mxu0 %v2555
    %2787 = vmatpush1.bf16.msra.mxu0 %v2554
    %2788 = vmatprep.subr.bf16.mxu0 %v2559
    %2789 = vmatpush1.bf16.msra.mxu0 %v2558
    %2790 = vmatprep.subr.bf16.mxu0 %v2563
    %2791 = vmatpush1.bf16.msra.mxu0 %v2562
    %2792 = vmatprep.subr.bf16.mxu0 %v2567
    %2793 = vmatpush1.bf16.msra.mxu0 %v2566
    %2794 = vmatprep.mubr.bf16.mxu0 %v2103
    %2795 = vmatmul.mubr.bf16.gmra.mrb[0].mxu0 %v2102
    %v2796 = vpop.f32.mrb[0].mxu0
    %v2797 = vadd.f32 %v2109, %v2796
    %v2798 = vpop.f32.mrb[0].mxu0
    %v2799 = vadd.f32 %v2113, %v2798
    %v2800 = vpop.f32.mrb[0].mxu0
    %v2801 = vpop.f32.mrb[0].mxu0
    %2802 = vdwg.mxu0
    %2803 = vmatprep.subr.bf16.mxu0 %v2571
    %2804 = vmatpush1.bf16.msra.mxu0 %v2570
    %2805 = vmatprep.subr.bf16.mxu0 %v2575
    %2806 = vmatpush1.bf16.msra.mxu0 %v2574
    %2807 = vmatprep.subr.bf16.mxu0 %v2579
    %2808 = vmatpush1.bf16.msra.mxu0 %v2578
    %2809 = vmatprep.subr.bf16.mxu0 %v2583
    %2810 = vmatpush1.bf16.msra.mxu0 %v2582
    %2811 = vmatprep.subr.bf16.mxu0 %v2587
    %2812 = vmatpush1.bf16.msra.mxu0 %v2586
    %2813 = vmatprep.subr.bf16.mxu0 %v2591
    %2814 = vmatpush1.bf16.msra.mxu0 %v2590
    %2815 = vmatprep.subr.bf16.mxu0 %v2595
    %2816 = vmatpush1.bf16.msra.mxu0 %v2594
    %2817 = vmatprep.subr.bf16.mxu0 %v2599
    %2818 = vmatpush1.bf16.msra.mxu0 %v2598
    %2819 = vmatprep.subr.bf16.mxu0 %v2603
    %2820 = vmatpush1.bf16.msra.mxu0 %v2602
    %2821 = vmatprep.subr.bf16.mxu0 %v2607
    %2822 = vmatpush1.bf16.msra.mxu0 %v2606
    %2823 = vmatprep.subr.bf16.mxu0 %v2611
    %2824 = vmatpush1.bf16.msra.mxu0 %v2610
    %2825 = vmatprep.subr.bf16.mxu0 %v2615
    %2826 = vmatpush1.bf16.msra.mxu0 %v2614
    %2827 = vmatprep.subr.bf16.mxu0 %v2619
    %2828 = vmatpush1.bf16.msra.mxu0 %v2618
    %2829 = vmatprep.subr.bf16.mxu0 %v2623
    %2830 = vmatpush1.bf16.msra.mxu0 %v2622
    %2831 = vmatprep.subr.bf16.mxu0 %v2627
    %2832 = vmatpush1.bf16.msra.mxu0 %v2626
    %2833 = vmatprep.subr.bf16.mxu0 %v2631
    %2834 = vmatpush1.bf16.msra.mxu0 %v2630
    %2835 = vmatprep.mubr.bf16.mxu0 %v2105
    %2836 = vmatmul.mubr.bf16.gmra.mrb[0].mxu0 %v2104
    %v2837 = vpop.f32.mrb[0].mxu0
    %v2838 = vadd.f32 %v2797, %v2837
    %v2839 = vpop.f32.mrb[0].mxu0
    %v2840 = vadd.f32 %v2799, %v2839
    %v2841 = vpop.f32.mrb[0].mxu0
    %v2842 = vpop.f32.mrb[0].mxu0
    %2843 = vdwg.mxu0
    %2844 = vmatprep.subr.bf16.mxu0 %v2509
    %2845 = vmatpush1.bf16.msra.mxu0 %v2508
    %2846 = vmatprep.subr.bf16.mxu0 %v2513
    %2847 = vmatpush1.bf16.msra.mxu0 %v2512
    %2848 = vmatprep.subr.bf16.mxu0 %v2517
    %2849 = vmatpush1.bf16.msra.mxu0 %v2516
    %2850 = vmatprep.subr.bf16.mxu0 %v2521
    %2851 = vmatpush1.bf16.msra.mxu0 %v2520
    %2852 = vmatprep.subr.bf16.mxu0 %v2525
    %2853 = vmatpush1.bf16.msra.mxu0 %v2524
    %2854 = vmatprep.subr.bf16.mxu0 %v2529
    %2855 = vmatpush1.bf16.msra.mxu0 %v2528
    %2856 = vmatprep.subr.bf16.mxu0 %v2533
    %2857 = vmatpush1.bf16.msra.mxu0 %v2532
    %2858 = vmatprep.subr.bf16.mxu0 %v2537
    %2859 = vmatpush1.bf16.msra.mxu0 %v2536
    %2860 = vmatprep.subr.bf16.mxu0 %v2541
    %2861 = vmatpush1.bf16.msra.mxu0 %v2540
    %2862 = vmatprep.subr.bf16.mxu0 %v2545
    %2863 = vmatpush1.bf16.msra.mxu0 %v2544
    %2864 = vmatprep.subr.bf16.mxu0 %v2549
    %2865 = vmatpush1.bf16.msra.mxu0 %v2548
    %2866 = vmatprep.subr.bf16.mxu0 %v2553
    %2867 = vmatpush1.bf16.msra.mxu0 %v2552
    %2868 = vmatprep.subr.bf16.mxu0 %v2557
    %2869 = vmatpush1.bf16.msra.mxu0 %v2556
    %2870 = vmatprep.subr.bf16.mxu0 %v2561
    %2871 = vmatpush1.bf16.msra.mxu0 %v2560
    %2872 = vmatprep.subr.bf16.mxu0 %v2565
    %2873 = vmatpush1.bf16.msra.mxu0 %v2564
    %2874 = vmatprep.subr.bf16.mxu0 %v2569
    %2875 = vmatpush1.bf16.msra.mxu0 %v2568
    %2876 = vmatprep.mubr.bf16.mxu0 %v2103
    %2877 = vmatmul.mubr.bf16.gmra.mrb[0].mxu0 %v2102
    %v2878 = vpop.f32.mrb[0].mxu0
    %v2879 = vadd.f32 %v2117, %v2878
    %v2880 = vpop.f32.mrb[0].mxu0
    %v2881 = vadd.f32 %v2121, %v2880
    %v2882 = vpop.f32.mrb[0].mxu0
    %v2883 = vpop.f32.mrb[0].mxu0
    %2884 = vdwg.mxu0
    %2885 = vmatprep.subr.bf16.mxu0 %v2573
    %2886 = vmatpush1.bf16.msra.mxu0 %v2572
    %2887 = vmatprep.subr.bf16.mxu0 %v2577
    %2888 = vmatpush1.bf16.msra.mxu0 %v2576
    %2889 = vmatprep.subr.bf16.mxu0 %v2581
    %2890 = vmatpush1.bf16.msra.mxu0 %v2580
    %2891 = vmatprep.subr.bf16.mxu0 %v2585
    %2892 = vmatpush1.bf16.msra.mxu0 %v2584
    %2893 = vmatprep.subr.bf16.mxu0 %v2589
    %2894 = vmatpush1.bf16.msra.mxu0 %v2588
    %2895 = vmatprep.subr.bf16.mxu0 %v2593
    %2896 = vmatpush1.bf16.msra.mxu0 %v2592
    %2897 = vmatprep.subr.bf16.mxu0 %v2597
    %2898 = vmatpush1.bf16.msra.mxu0 %v2596
    %2899 = vmatprep.subr.bf16.mxu0 %v2601
    %2900 = vmatpush1.bf16.msra.mxu0 %v2600
    %2901 = vmatprep.subr.bf16.mxu0 %v2605
    %2902 = vmatpush1.bf16.msra.mxu0 %v2604
    %2903 = vmatprep.subr.bf16.mxu0 %v2609
    %2904 = vmatpush1.bf16.msra.mxu0 %v2608
    %2905 = vmatprep.subr.bf16.mxu0 %v2613
    %2906 = vmatpush1.bf16.msra.mxu0 %v2612
    %2907 = vmatprep.subr.bf16.mxu0 %v2617
    %2908 = vmatpush1.bf16.msra.mxu0 %v2616
    %2909 = vmatprep.subr.bf16.mxu0 %v2621
    %2910 = vmatpush1.bf16.msra.mxu0 %v2620
    %2911 = vmatprep.subr.bf16.mxu0 %v2625
    %2912 = vmatpush1.bf16.msra.mxu0 %v2624
    %2913 = vmatprep.subr.bf16.mxu0 %v2629
    %2914 = vmatpush1.bf16.msra.mxu0 %v2628
    %2915 = vmatprep.subr.bf16.mxu0 %v2633
    %2916 = vmatpush1.bf16.msra.mxu0 %v2632
    %2917 = vmatprep.mubr.bf16.mxu0 %v2105
    %2918 = vmatmul.mubr.bf16.gmra.mrb[0].mxu0 %v2104
    %v2919 = vpop.f32.mrb[0].mxu0
    %v2920 = vadd.f32 %v2879, %v2919
    %v2921 = vpop.f32.mrb[0].mxu0
    %v2922 = vadd.f32 %v2881, %v2921
    %v2923 = vpop.f32.mrb[0].mxu0
    %v2924 = vpop.f32.mrb[0].mxu0
    %2925 = vdwg.mxu0
    %v2926 = vpack.c.bf16 %v2838, %v2838
    %v2927 = vpack.c.bf16 %v2840, %v2840
    %v2928 = vpack.c.bf16 %v2920, %v2920
    %v2929 = vpack.c.bf16 %v2922, %v2922
    %v2930 = vlaneseq
    %v2931 = vshrl.u32 %v2930, 7
    %v2932 = vsub.s32 0, %v2931
    %v2933 = vrot.slane %v793, %v2932
    %v2934 = vlaneseq
    %v2935 = vshrl.u32 %v2934, 7
    %v2936 = vsub.s32 0, %v2935
    %v2937 = vrot.slane %v794, %v2936
    %v2938 = vlaneseq
    %v2939 = vshrl.u32 %v2938, 7
    %v2940 = vsub.s32 0, %v2939
    %v2941 = vrot.slane %v795, %v2940
    %v2942 = vlaneseq
    %v2943 = vshrl.u32 %v2942, 7
    %v2944 = vsub.s32 0, %v2943
    %v2945 = vrot.slane %v796, %v2944
    %v2946 = vlaneseq
    %v2947 = vshrl.u32 %v2946, 7
    %v2948 = vsub.s32 0, %v2947
    %v2949 = vrot.slane %v797, %v2948
    %v2950 = vlaneseq
    %v2951 = vshrl.u32 %v2950, 7
    %v2952 = vsub.s32 0, %v2951
    %v2953 = vrot.slane %v798, %v2952
    %v2954 = vlaneseq
    %v2955 = vshrl.u32 %v2954, 7
    %v2956 = vsub.s32 0, %v2955
    %v2957 = vrot.slane %v799, %v2956
    %v2958 = vlaneseq
    %v2959 = vshrl.u32 %v2958, 7
    %v2960 = vsub.s32 0, %v2959
    %v2961 = vrot.slane %v800, %v2960
    %v3218 = vunpack.c.l.b16 %v353
    %v3219 = vunpack.c.h.b16 %v353
    %v3220 = vunpack.c.l.b16 %v354
    %v3221 = vunpack.c.h.b16 %v354
    %v3222 = vunpack.c.l.b16 %v355
    %v3223 = vunpack.c.h.b16 %v355
    %v3224 = vunpack.c.l.b16 %v356
    %v3225 = vunpack.c.h.b16 %v356
    %v3226 = vunpack.c.l.b16 %v357
    %v3227 = vunpack.c.h.b16 %v357
    %v3228 = vunpack.c.l.b16 %v358
    %v3229 = vunpack.c.h.b16 %v358
    %v3230 = vunpack.c.l.b16 %v359
    %v3231 = vunpack.c.h.b16 %v359
    %v3232 = vunpack.c.l.b16 %v360
    %v3233 = vunpack.c.h.b16 %v360
    %v3234 = vunpack.c.l.b16 %v361
    %v3235 = vunpack.c.h.b16 %v361
    %v3236 = vunpack.c.l.b16 %v362
    %v3237 = vunpack.c.h.b16 %v362
    %v3238 = vunpack.c.l.b16 %v363
    %v3239 = vunpack.c.h.b16 %v363
    %v3240 = vunpack.c.l.b16 %v364
    %v3241 = vunpack.c.h.b16 %v364
    %v3242 = vunpack.c.l.b16 %v365
    %v3243 = vunpack.c.h.b16 %v365
    %v3244 = vunpack.c.l.b16 %v366
    %v3245 = vunpack.c.h.b16 %v366
    %v3246 = vunpack.c.l.b16 %v367
    %v3247 = vunpack.c.h.b16 %v367
    %v3248 = vunpack.c.l.b16 %v368
    %v3249 = vunpack.c.h.b16 %v368
    %v3250 = vunpack.c.l.b16 %v369
    %v3251 = vunpack.c.h.b16 %v369
    %v3252 = vunpack.c.l.b16 %v370
    %v3253 = vunpack.c.h.b16 %v370
    %v3254 = vunpack.c.l.b16 %v371
    %v3255 = vunpack.c.h.b16 %v371
    %v3256 = vunpack.c.l.b16 %v372
    %v3257 = vunpack.c.h.b16 %v372
    %v3258 = vunpack.c.l.b16 %v373
    %v3259 = vunpack.c.h.b16 %v373
    %v3260 = vunpack.c.l.b16 %v374
    %v3261 = vunpack.c.h.b16 %v374
    %v3262 = vunpack.c.l.b16 %v375
    %v3263 = vunpack.c.h.b16 %v375
    %v3264 = vunpack.c.l.b16 %v376
    %v3265 = vunpack.c.h.b16 %v376
    %v3266 = vunpack.c.l.b16 %v377
    %v3267 = vunpack.c.h.b16 %v377
    %v3268 = vunpack.c.l.b16 %v378
    %v3269 = vunpack.c.h.b16 %v378
    %v3270 = vunpack.c.l.b16 %v379
    %v3271 = vunpack.c.h.b16 %v379
    %v3272 = vunpack.c.l.b16 %v380
    %v3273 = vunpack.c.h.b16 %v380
    %v3274 = vunpack.c.l.b16 %v381
    %v3275 = vunpack.c.h.b16 %v381
    %v3276 = vunpack.c.l.b16 %v382
    %v3277 = vunpack.c.h.b16 %v382
    %v3278 = vunpack.c.l.b16 %v383
    %v3279 = vunpack.c.h.b16 %v383
    %v3280 = vunpack.c.l.b16 %v384
    %v3281 = vunpack.c.h.b16 %v384
    %v3282 = vunpack.c.l.b16 %v385
    %v3283 = vunpack.c.h.b16 %v385
    %v3284 = vunpack.c.l.b16 %v386
    %v3285 = vunpack.c.h.b16 %v386
    %v3286 = vunpack.c.l.b16 %v387
    %v3287 = vunpack.c.h.b16 %v387
    %v3288 = vunpack.c.l.b16 %v388
    %v3289 = vunpack.c.h.b16 %v388
    %v3290 = vunpack.c.l.b16 %v389
    %v3291 = vunpack.c.h.b16 %v389
    %v3292 = vunpack.c.l.b16 %v390
    %v3293 = vunpack.c.h.b16 %v390
    %v3294 = vunpack.c.l.b16 %v391
    %v3295 = vunpack.c.h.b16 %v391
    %v3296 = vunpack.c.l.b16 %v392
    %v3297 = vunpack.c.h.b16 %v392
    %v3298 = vunpack.c.l.b16 %v393
    %v3299 = vunpack.c.h.b16 %v393
    %v3300 = vunpack.c.l.b16 %v394
    %v3301 = vunpack.c.h.b16 %v394
    %v3302 = vunpack.c.l.b16 %v395
    %v3303 = vunpack.c.h.b16 %v395
    %v3304 = vunpack.c.l.b16 %v396
    %v3305 = vunpack.c.h.b16 %v396
    %v3306 = vunpack.c.l.b16 %v397
    %v3307 = vunpack.c.h.b16 %v397
    %v3308 = vunpack.c.l.b16 %v398
    %v3309 = vunpack.c.h.b16 %v398
    %v3310 = vunpack.c.l.b16 %v399
    %v3311 = vunpack.c.h.b16 %v399
    %v3312 = vunpack.c.l.b16 %v400
    %v3313 = vunpack.c.h.b16 %v400
    %v3314 = vunpack.c.l.b16 %v401
    %v3315 = vunpack.c.h.b16 %v401
    %v3316 = vunpack.c.l.b16 %v402
    %v3317 = vunpack.c.h.b16 %v402
    %v3318 = vunpack.c.l.b16 %v403
    %v3319 = vunpack.c.h.b16 %v403
    %v3320 = vunpack.c.l.b16 %v404
    %v3321 = vunpack.c.h.b16 %v404
    %v3322 = vunpack.c.l.b16 %v405
    %v3323 = vunpack.c.h.b16 %v405
    %v3324 = vunpack.c.l.b16 %v406
    %v3325 = vunpack.c.h.b16 %v406
    %v3326 = vunpack.c.l.b16 %v407
    %v3327 = vunpack.c.h.b16 %v407
    %v3328 = vunpack.c.l.b16 %v408
    %v3329 = vunpack.c.h.b16 %v408
    %v3330 = vunpack.c.l.b16 %v409
    %v3331 = vunpack.c.h.b16 %v409
    %v3332 = vunpack.c.l.b16 %v410
    %v3333 = vunpack.c.h.b16 %v410
    %v3334 = vunpack.c.l.b16 %v411
    %v3335 = vunpack.c.h.b16 %v411
    %v3336 = vunpack.c.l.b16 %v412
    %v3337 = vunpack.c.h.b16 %v412
    %v3338 = vunpack.c.l.b16 %v413
    %v3339 = vunpack.c.h.b16 %v413
    %v3340 = vunpack.c.l.b16 %v414
    %v3341 = vunpack.c.h.b16 %v414
    %v3342 = vunpack.c.l.b16 %v415
    %v3343 = vunpack.c.h.b16 %v415
    %v3344 = vunpack.c.l.b16 %v416
    %v3345 = vunpack.c.h.b16 %v416
    %v3346 = vunpack.c.l.b16 %v417
    %v3347 = vunpack.c.h.b16 %v417
    %v3348 = vunpack.c.l.b16 %v418
    %v3349 = vunpack.c.h.b16 %v418
    %v3350 = vunpack.c.l.b16 %v419
    %v3351 = vunpack.c.h.b16 %v419
    %v3352 = vunpack.c.l.b16 %v420
    %v3353 = vunpack.c.h.b16 %v420
    %v3354 = vunpack.c.l.b16 %v421
    %v3355 = vunpack.c.h.b16 %v421
    %v3356 = vunpack.c.l.b16 %v422
    %v3357 = vunpack.c.h.b16 %v422
    %v3358 = vunpack.c.l.b16 %v423
    %v3359 = vunpack.c.h.b16 %v423
    %v3360 = vunpack.c.l.b16 %v424
    %v3361 = vunpack.c.h.b16 %v424
    %v3362 = vunpack.c.l.b16 %v425
    %v3363 = vunpack.c.h.b16 %v425
    %v3364 = vunpack.c.l.b16 %v426
    %v3365 = vunpack.c.h.b16 %v426
    %v3366 = vunpack.c.l.b16 %v427
    %v3367 = vunpack.c.h.b16 %v427
    %v3368 = vunpack.c.l.b16 %v428
    %v3369 = vunpack.c.h.b16 %v428
    %v3370 = vunpack.c.l.b16 %v429
    %v3371 = vunpack.c.h.b16 %v429
    %v3372 = vunpack.c.l.b16 %v430
    %v3373 = vunpack.c.h.b16 %v430
    %v3374 = vunpack.c.l.b16 %v431
    %v3375 = vunpack.c.h.b16 %v431
    %v3376 = vunpack.c.l.b16 %v432
    %v3377 = vunpack.c.h.b16 %v432
    %v3378 = vunpack.c.l.b16 %v433
    %v3379 = vunpack.c.h.b16 %v433
    %v3380 = vunpack.c.l.b16 %v434
    %v3381 = vunpack.c.h.b16 %v434
    %v3382 = vunpack.c.l.b16 %v435
    %v3383 = vunpack.c.h.b16 %v435
    %v3384 = vunpack.c.l.b16 %v436
    %v3385 = vunpack.c.h.b16 %v436
    %v3386 = vunpack.c.l.b16 %v437
    %v3387 = vunpack.c.h.b16 %v437
    %v3388 = vunpack.c.l.b16 %v438
    %v3389 = vunpack.c.h.b16 %v438
    %v3390 = vunpack.c.l.b16 %v439
    %v3391 = vunpack.c.h.b16 %v439
    %v3392 = vunpack.c.l.b16 %v440
    %v3393 = vunpack.c.h.b16 %v440
    %v3394 = vunpack.c.l.b16 %v441
    %v3395 = vunpack.c.h.b16 %v441
    %v3396 = vunpack.c.l.b16 %v442
    %v3397 = vunpack.c.h.b16 %v442
    %v3398 = vunpack.c.l.b16 %v443
    %v3399 = vunpack.c.h.b16 %v443
    %v3400 = vunpack.c.l.b16 %v444
    %v3401 = vunpack.c.h.b16 %v444
    %v3402 = vunpack.c.l.b16 %v445
    %v3403 = vunpack.c.h.b16 %v445
    %v3404 = vunpack.c.l.b16 %v446
    %v3405 = vunpack.c.h.b16 %v446
    %v3406 = vunpack.c.l.b16 %v447
    %v3407 = vunpack.c.h.b16 %v447
    %v3408 = vunpack.c.l.b16 %v448
    %v3409 = vunpack.c.h.b16 %v448
    %v3410 = vunpack.c.l.b16 %v449
    %v3411 = vunpack.c.h.b16 %v449
    %v3412 = vunpack.c.l.b16 %v450
    %v3413 = vunpack.c.h.b16 %v450
    %v3414 = vunpack.c.l.b16 %v451
    %v3415 = vunpack.c.h.b16 %v451
    %v3416 = vunpack.c.l.b16 %v452
    %v3417 = vunpack.c.h.b16 %v452
    %v3418 = vunpack.c.l.b16 %v453
    %v3419 = vunpack.c.h.b16 %v453
    %v3420 = vunpack.c.l.b16 %v454
    %v3421 = vunpack.c.h.b16 %v454
    %v3422 = vunpack.c.l.b16 %v455
    %v3423 = vunpack.c.h.b16 %v455
    %v3424 = vunpack.c.l.b16 %v456
    %v3425 = vunpack.c.h.b16 %v456
    %v3426 = vunpack.c.l.b16 %v457
    %v3427 = vunpack.c.h.b16 %v457
    %v3428 = vunpack.c.l.b16 %v458
    %v3429 = vunpack.c.h.b16 %v458
    %v3430 = vunpack.c.l.b16 %v459
    %v3431 = vunpack.c.h.b16 %v459
    %v3432 = vunpack.c.l.b16 %v460
    %v3433 = vunpack.c.h.b16 %v460
    %v3434 = vunpack.c.l.b16 %v461
    %v3435 = vunpack.c.h.b16 %v461
    %v3436 = vunpack.c.l.b16 %v462
    %v3437 = vunpack.c.h.b16 %v462
    %v3438 = vunpack.c.l.b16 %v463
    %v3439 = vunpack.c.h.b16 %v463
    %v3440 = vunpack.c.l.b16 %v464
    %v3441 = vunpack.c.h.b16 %v464
    %v3442 = vunpack.c.l.b16 %v465
    %v3443 = vunpack.c.h.b16 %v465
    %v3444 = vunpack.c.l.b16 %v466
    %v3445 = vunpack.c.h.b16 %v466
    %v3446 = vunpack.c.l.b16 %v467
    %v3447 = vunpack.c.h.b16 %v467
    %v3448 = vunpack.c.l.b16 %v468
    %v3449 = vunpack.c.h.b16 %v468
    %v3450 = vunpack.c.l.b16 %v469
    %v3451 = vunpack.c.h.b16 %v469
    %v3452 = vunpack.c.l.b16 %v470
    %v3453 = vunpack.c.h.b16 %v470
    %v3454 = vunpack.c.l.b16 %v471
    %v3455 = vunpack.c.h.b16 %v471
    %v3456 = vunpack.c.l.b16 %v472
    %v3457 = vunpack.c.h.b16 %v472
    %v3458 = vunpack.c.l.b16 %v473
    %v3459 = vunpack.c.h.b16 %v473
    %v3460 = vunpack.c.l.b16 %v474
    %v3461 = vunpack.c.h.b16 %v474
    %v3462 = vunpack.c.l.b16 %v475
    %v3463 = vunpack.c.h.b16 %v475
    %v3464 = vunpack.c.l.b16 %v476
    %v3465 = vunpack.c.h.b16 %v476
    %v3466 = vunpack.c.l.b16 %v477
    %v3467 = vunpack.c.h.b16 %v477
    %v3468 = vunpack.c.l.b16 %v478
    %v3469 = vunpack.c.h.b16 %v478
    %v3470 = vunpack.c.l.b16 %v479
    %v3471 = vunpack.c.h.b16 %v479
    %v3472 = vunpack.c.l.b16 %v480
    %v3473 = vunpack.c.h.b16 %v480
    %v3474 = vunpack.c.l.b16 %v481
    %v3475 = vunpack.c.h.b16 %v481
    %v3476 = vunpack.c.l.b16 %v482
    %v3477 = vunpack.c.h.b16 %v482
    %v3478 = vunpack.c.l.b16 %v483
    %v3479 = vunpack.c.h.b16 %v483
    %v3480 = vunpack.c.l.b16 %v484
    %v3481 = vunpack.c.h.b16 %v484
    %v3482 = vunpack.c.l.b16 %v485
    %v3483 = vunpack.c.h.b16 %v485
    %v3484 = vunpack.c.l.b16 %v486
    %v3485 = vunpack.c.h.b16 %v486
    %v3486 = vunpack.c.l.b16 %v487
    %v3487 = vunpack.c.h.b16 %v487
    %v3488 = vunpack.c.l.b16 %v488
    %v3489 = vunpack.c.h.b16 %v488
    %v3490 = vunpack.c.l.b16 %v489
    %v3491 = vunpack.c.h.b16 %v489
    %v3492 = vunpack.c.l.b16 %v490
    %v3493 = vunpack.c.h.b16 %v490
    %v3494 = vunpack.c.l.b16 %v491
    %v3495 = vunpack.c.h.b16 %v491
    %v3496 = vunpack.c.l.b16 %v492
    %v3497 = vunpack.c.h.b16 %v492
    %v3498 = vunpack.c.l.b16 %v493
    %v3499 = vunpack.c.h.b16 %v493
    %v3500 = vunpack.c.l.b16 %v494
    %v3501 = vunpack.c.h.b16 %v494
    %v3502 = vunpack.c.l.b16 %v495
    %v3503 = vunpack.c.h.b16 %v495
    %v3504 = vunpack.c.l.b16 %v496
    %v3505 = vunpack.c.h.b16 %v496
    %v3506 = vunpack.c.l.b16 %v497
    %v3507 = vunpack.c.h.b16 %v497
    %v3508 = vunpack.c.l.b16 %v498
    %v3509 = vunpack.c.h.b16 %v498
    %v3510 = vunpack.c.l.b16 %v499
    %v3511 = vunpack.c.h.b16 %v499
    %v3512 = vunpack.c.l.b16 %v500
    %v3513 = vunpack.c.h.b16 %v500
    %v3514 = vunpack.c.l.b16 %v501
    %v3515 = vunpack.c.h.b16 %v501
    %v3516 = vunpack.c.l.b16 %v502
    %v3517 = vunpack.c.h.b16 %v502
    %v3518 = vunpack.c.l.b16 %v503
    %v3519 = vunpack.c.h.b16 %v503
    %v3520 = vunpack.c.l.b16 %v504
    %v3521 = vunpack.c.h.b16 %v504
    %v3522 = vunpack.c.l.b16 %v505
    %v3523 = vunpack.c.h.b16 %v505
    %v3524 = vunpack.c.l.b16 %v506
    %v3525 = vunpack.c.h.b16 %v506
    %v3526 = vunpack.c.l.b16 %v507
    %v3527 = vunpack.c.h.b16 %v507
    %v3528 = vunpack.c.l.b16 %v508
    %v3529 = vunpack.c.h.b16 %v508
    %v3530 = vunpack.c.l.b16 %v509
    %v3531 = vunpack.c.h.b16 %v509
    %v3532 = vunpack.c.l.b16 %v510
    %v3533 = vunpack.c.h.b16 %v510
    %v3534 = vunpack.c.l.b16 %v511
    %v3535 = vunpack.c.h.b16 %v511
    %v3536 = vunpack.c.l.b16 %v512
    %v3537 = vunpack.c.h.b16 %v512
    %v3538 = vunpack.c.l.b16 %v513
    %v3539 = vunpack.c.h.b16 %v513
    %v3540 = vunpack.c.l.b16 %v514
    %v3541 = vunpack.c.h.b16 %v514
    %v3542 = vunpack.c.l.b16 %v515
    %v3543 = vunpack.c.h.b16 %v515
    %v3544 = vunpack.c.l.b16 %v516
    %v3545 = vunpack.c.h.b16 %v516
    %v3546 = vunpack.c.l.b16 %v517
    %v3547 = vunpack.c.h.b16 %v517
    %v3548 = vunpack.c.l.b16 %v518
    %v3549 = vunpack.c.h.b16 %v518
    %v3550 = vunpack.c.l.b16 %v519
    %v3551 = vunpack.c.h.b16 %v519
    %v3552 = vunpack.c.l.b16 %v520
    %v3553 = vunpack.c.h.b16 %v520
    %v3554 = vunpack.c.l.b16 %v521
    %v3555 = vunpack.c.h.b16 %v521
    %v3556 = vunpack.c.l.b16 %v522
    %v3557 = vunpack.c.h.b16 %v522
    %v3558 = vunpack.c.l.b16 %v523
    %v3559 = vunpack.c.h.b16 %v523
    %v3560 = vunpack.c.l.b16 %v524
    %v3561 = vunpack.c.h.b16 %v524
    %v3562 = vunpack.c.l.b16 %v525
    %v3563 = vunpack.c.h.b16 %v525
    %v3564 = vunpack.c.l.b16 %v526
    %v3565 = vunpack.c.h.b16 %v526
    %v3566 = vunpack.c.l.b16 %v527
    %v3567 = vunpack.c.h.b16 %v527
    %v3568 = vunpack.c.l.b16 %v528
    %v3569 = vunpack.c.h.b16 %v528
    %v3570 = vunpack.c.l.b16 %v529
    %v3571 = vunpack.c.h.b16 %v529
    %v3572 = vunpack.c.l.b16 %v530
    %v3573 = vunpack.c.h.b16 %v530
    %v3574 = vunpack.c.l.b16 %v531
    %v3575 = vunpack.c.h.b16 %v531
    %v3576 = vunpack.c.l.b16 %v532
    %v3577 = vunpack.c.h.b16 %v532
    %v3578 = vunpack.c.l.b16 %v533
    %v3579 = vunpack.c.h.b16 %v533
    %v3580 = vunpack.c.l.b16 %v534
    %v3581 = vunpack.c.h.b16 %v534
    %v3582 = vunpack.c.l.b16 %v535
    %v3583 = vunpack.c.h.b16 %v535
    %v3584 = vunpack.c.l.b16 %v536
    %v3585 = vunpack.c.h.b16 %v536
    %v3586 = vunpack.c.l.b16 %v537
    %v3587 = vunpack.c.h.b16 %v537
    %v3588 = vunpack.c.l.b16 %v538
    %v3589 = vunpack.c.h.b16 %v538
    %v3590 = vunpack.c.l.b16 %v539
    %v3591 = vunpack.c.h.b16 %v539
    %v3592 = vunpack.c.l.b16 %v540
    %v3593 = vunpack.c.h.b16 %v540
    %v3594 = vunpack.c.l.b16 %v541
    %v3595 = vunpack.c.h.b16 %v541
    %v3596 = vunpack.c.l.b16 %v542
    %v3597 = vunpack.c.h.b16 %v542
    %v3598 = vunpack.c.l.b16 %v543
    %v3599 = vunpack.c.h.b16 %v543
    %v3600 = vunpack.c.l.b16 %v544
    %v3601 = vunpack.c.h.b16 %v544
    %v3602 = vunpack.c.l.b16 %v545
    %v3603 = vunpack.c.h.b16 %v545
    %v3604 = vunpack.c.l.b16 %v546
    %v3605 = vunpack.c.h.b16 %v546
    %v3606 = vunpack.c.l.b16 %v547
    %v3607 = vunpack.c.h.b16 %v547
    %v3608 = vunpack.c.l.b16 %v548
    %v3609 = vunpack.c.h.b16 %v548
    %v3610 = vunpack.c.l.b16 %v549
    %v3611 = vunpack.c.h.b16 %v549
    %v3612 = vunpack.c.l.b16 %v550
    %v3613 = vunpack.c.h.b16 %v550
    %v3614 = vunpack.c.l.b16 %v551
    %v3615 = vunpack.c.h.b16 %v551
    %v3616 = vunpack.c.l.b16 %v552
    %v3617 = vunpack.c.h.b16 %v552
    %v3618 = vunpack.c.l.b16 %v553
    %v3619 = vunpack.c.h.b16 %v553
    %v3620 = vunpack.c.l.b16 %v554
    %v3621 = vunpack.c.h.b16 %v554
    %v3622 = vunpack.c.l.b16 %v555
    %v3623 = vunpack.c.h.b16 %v555
    %v3624 = vunpack.c.l.b16 %v556
    %v3625 = vunpack.c.h.b16 %v556
    %v3626 = vunpack.c.l.b16 %v557
    %v3627 = vunpack.c.h.b16 %v557
    %v3628 = vunpack.c.l.b16 %v558
    %v3629 = vunpack.c.h.b16 %v558
    %v3630 = vunpack.c.l.b16 %v559
    %v3631 = vunpack.c.h.b16 %v559
    %v3632 = vunpack.c.l.b16 %v560
    %v3633 = vunpack.c.h.b16 %v560
    %v3634 = vunpack.c.l.b16 %v561
    %v3635 = vunpack.c.h.b16 %v561
    %v3636 = vunpack.c.l.b16 %v562
    %v3637 = vunpack.c.h.b16 %v562
    %v3638 = vunpack.c.l.b16 %v563
    %v3639 = vunpack.c.h.b16 %v563
    %v3640 = vunpack.c.l.b16 %v564
    %v3641 = vunpack.c.h.b16 %v564
    %v3642 = vunpack.c.l.b16 %v565
    %v3643 = vunpack.c.h.b16 %v565
    %v3644 = vunpack.c.l.b16 %v566
    %v3645 = vunpack.c.h.b16 %v566
    %v3646 = vunpack.c.l.b16 %v567
    %v3647 = vunpack.c.h.b16 %v567
    %v3648 = vunpack.c.l.b16 %v568
    %v3649 = vunpack.c.h.b16 %v568
    %v3650 = vunpack.c.l.b16 %v569
    %v3651 = vunpack.c.h.b16 %v569
    %v3652 = vunpack.c.l.b16 %v570
    %v3653 = vunpack.c.h.b16 %v570
    %v3654 = vunpack.c.l.b16 %v571
    %v3655 = vunpack.c.h.b16 %v571
    %v3656 = vunpack.c.l.b16 %v572
    %v3657 = vunpack.c.h.b16 %v572
    %v3658 = vunpack.c.l.b16 %v573
    %v3659 = vunpack.c.h.b16 %v573
    %v3660 = vunpack.c.l.b16 %v574
    %v3661 = vunpack.c.h.b16 %v574
    %v3662 = vunpack.c.l.b16 %v575
    %v3663 = vunpack.c.h.b16 %v575
    %v3664 = vunpack.c.l.b16 %v576
    %v3665 = vunpack.c.h.b16 %v576
    %v3666 = vunpack.c.l.b16 %v577
    %v3667 = vunpack.c.h.b16 %v577
    %v3668 = vunpack.c.l.b16 %v578
    %v3669 = vunpack.c.h.b16 %v578
    %v3670 = vunpack.c.l.b16 %v579
    %v3671 = vunpack.c.h.b16 %v579
    %v3672 = vunpack.c.l.b16 %v580
    %v3673 = vunpack.c.h.b16 %v580
    %v3674 = vunpack.c.l.b16 %v581
    %v3675 = vunpack.c.h.b16 %v581
    %v3676 = vunpack.c.l.b16 %v582
    %v3677 = vunpack.c.h.b16 %v582
    %v3678 = vunpack.c.l.b16 %v583
    %v3679 = vunpack.c.h.b16 %v583
    %v3680 = vunpack.c.l.b16 %v584
    %v3681 = vunpack.c.h.b16 %v584
    %v3682 = vunpack.c.l.b16 %v585
    %v3683 = vunpack.c.h.b16 %v585
    %v3684 = vunpack.c.l.b16 %v586
    %v3685 = vunpack.c.h.b16 %v586
    %v3686 = vunpack.c.l.b16 %v587
    %v3687 = vunpack.c.h.b16 %v587
    %v3688 = vunpack.c.l.b16 %v588
    %v3689 = vunpack.c.h.b16 %v588
    %v3690 = vunpack.c.l.b16 %v589
    %v3691 = vunpack.c.h.b16 %v589
    %v3692 = vunpack.c.l.b16 %v590
    %v3693 = vunpack.c.h.b16 %v590
    %v3694 = vunpack.c.l.b16 %v591
    %v3695 = vunpack.c.h.b16 %v591
    %v3696 = vunpack.c.l.b16 %v592
    %v3697 = vunpack.c.h.b16 %v592
    %v3698 = vunpack.c.l.b16 %v593
    %v3699 = vunpack.c.h.b16 %v593
    %v3700 = vunpack.c.l.b16 %v594
    %v3701 = vunpack.c.h.b16 %v594
    %v3702 = vunpack.c.l.b16 %v595
    %v3703 = vunpack.c.h.b16 %v595
    %v3704 = vunpack.c.l.b16 %v596
    %v3705 = vunpack.c.h.b16 %v596
    %v3706 = vunpack.c.l.b16 %v597
    %v3707 = vunpack.c.h.b16 %v597
    %v3708 = vunpack.c.l.b16 %v598
    %v3709 = vunpack.c.h.b16 %v598
    %v3710 = vunpack.c.l.b16 %v599
    %v3711 = vunpack.c.h.b16 %v599
    %v3712 = vunpack.c.l.b16 %v600
    %v3713 = vunpack.c.h.b16 %v600
    %v3714 = vunpack.c.l.b16 %v601
    %v3715 = vunpack.c.h.b16 %v601
    %v3716 = vunpack.c.l.b16 %v602
    %v3717 = vunpack.c.h.b16 %v602
    %v3718 = vunpack.c.l.b16 %v603
    %v3719 = vunpack.c.h.b16 %v603
    %v3720 = vunpack.c.l.b16 %v604
    %v3721 = vunpack.c.h.b16 %v604
    %v3722 = vunpack.c.l.b16 %v605
    %v3723 = vunpack.c.h.b16 %v605
    %v3724 = vunpack.c.l.b16 %v606
    %v3725 = vunpack.c.h.b16 %v606
    %v3726 = vunpack.c.l.b16 %v607
    %v3727 = vunpack.c.h.b16 %v607
    %v3728 = vunpack.c.l.b16 %v608
    %v3729 = vunpack.c.h.b16 %v608
    %v3730 = vpack.c.b16 %v3226, %v3218
    %v3731 = vpack.c.b16 %v3227, %v3219
    %v3732 = vpack.c.b16 %v3228, %v3220
    %v3733 = vpack.c.b16 %v3229, %v3221
    %v3734 = vpack.c.b16 %v3230, %v3222
    %v3735 = vpack.c.b16 %v3231, %v3223
    %v3736 = vpack.c.b16 %v3232, %v3224
    %v3737 = vpack.c.b16 %v3233, %v3225
    %v3738 = vpack.c.b16 %v3242, %v3234
    %v3739 = vpack.c.b16 %v3243, %v3235
    %v3740 = vpack.c.b16 %v3244, %v3236
    %v3741 = vpack.c.b16 %v3245, %v3237
    %v3742 = vpack.c.b16 %v3246, %v3238
    %v3743 = vpack.c.b16 %v3247, %v3239
    %v3744 = vpack.c.b16 %v3248, %v3240
    %v3745 = vpack.c.b16 %v3249, %v3241
    %v3746 = vpack.c.b16 %v3258, %v3250
    %v3747 = vpack.c.b16 %v3259, %v3251
    %v3748 = vpack.c.b16 %v3260, %v3252
    %v3749 = vpack.c.b16 %v3261, %v3253
    %v3750 = vpack.c.b16 %v3262, %v3254
    %v3751 = vpack.c.b16 %v3263, %v3255
    %v3752 = vpack.c.b16 %v3264, %v3256
    %v3753 = vpack.c.b16 %v3265, %v3257
    %v3754 = vpack.c.b16 %v3274, %v3266
    %v3755 = vpack.c.b16 %v3275, %v3267
    %v3756 = vpack.c.b16 %v3276, %v3268
    %v3757 = vpack.c.b16 %v3277, %v3269
    %v3758 = vpack.c.b16 %v3278, %v3270
    %v3759 = vpack.c.b16 %v3279, %v3271
    %v3760 = vpack.c.b16 %v3280, %v3272
    %v3761 = vpack.c.b16 %v3281, %v3273
    %v3762 = vpack.c.b16 %v3290, %v3282
    %v3763 = vpack.c.b16 %v3291, %v3283
    %v3764 = vpack.c.b16 %v3292, %v3284
    %v3765 = vpack.c.b16 %v3293, %v3285
    %v3766 = vpack.c.b16 %v3294, %v3286
    %v3767 = vpack.c.b16 %v3295, %v3287
    %v3768 = vpack.c.b16 %v3296, %v3288
    %v3769 = vpack.c.b16 %v3297, %v3289
    %v3770 = vpack.c.b16 %v3306, %v3298
    %v3771 = vpack.c.b16 %v3307, %v3299
    %v3772 = vpack.c.b16 %v3308, %v3300
    %v3773 = vpack.c.b16 %v3309, %v3301
    %v3774 = vpack.c.b16 %v3310, %v3302
    %v3775 = vpack.c.b16 %v3311, %v3303
    %v3776 = vpack.c.b16 %v3312, %v3304
    %v3777 = vpack.c.b16 %v3313, %v3305
    %v3778 = vpack.c.b16 %v3322, %v3314
    %v3779 = vpack.c.b16 %v3323, %v3315
    %v3780 = vpack.c.b16 %v3324, %v3316
    %v3781 = vpack.c.b16 %v3325, %v3317
    %v3782 = vpack.c.b16 %v3326, %v3318
    %v3783 = vpack.c.b16 %v3327, %v3319
    %v3784 = vpack.c.b16 %v3328, %v3320
    %v3785 = vpack.c.b16 %v3329, %v3321
    %v3786 = vpack.c.b16 %v3338, %v3330
    %v3787 = vpack.c.b16 %v3339, %v3331
    %v3788 = vpack.c.b16 %v3340, %v3332
    %v3789 = vpack.c.b16 %v3341, %v3333
    %v3790 = vpack.c.b16 %v3342, %v3334
    %v3791 = vpack.c.b16 %v3343, %v3335
    %v3792 = vpack.c.b16 %v3344, %v3336
    %v3793 = vpack.c.b16 %v3345, %v3337
    %v3794 = vpack.c.b16 %v3354, %v3346
    %v3795 = vpack.c.b16 %v3355, %v3347
    %v3796 = vpack.c.b16 %v3356, %v3348
    %v3797 = vpack.c.b16 %v3357, %v3349
    %v3798 = vpack.c.b16 %v3358, %v3350
    %v3799 = vpack.c.b16 %v3359, %v3351
    %v3800 = vpack.c.b16 %v3360, %v3352
    %v3801 = vpack.c.b16 %v3361, %v3353
    %v3802 = vpack.c.b16 %v3370, %v3362
    %v3803 = vpack.c.b16 %v3371, %v3363
    %v3804 = vpack.c.b16 %v3372, %v3364
    %v3805 = vpack.c.b16 %v3373, %v3365
    %v3806 = vpack.c.b16 %v3374, %v3366
    %v3807 = vpack.c.b16 %v3375, %v3367
    %v3808 = vpack.c.b16 %v3376, %v3368
    %v3809 = vpack.c.b16 %v3377, %v3369
    %v3810 = vpack.c.b16 %v3386, %v3378
    %v3811 = vpack.c.b16 %v3387, %v3379
    %v3812 = vpack.c.b16 %v3388, %v3380
    %v3813 = vpack.c.b16 %v3389, %v3381
    %v3814 = vpack.c.b16 %v3390, %v3382
    %v3815 = vpack.c.b16 %v3391, %v3383
    %v3816 = vpack.c.b16 %v3392, %v3384
    %v3817 = vpack.c.b16 %v3393, %v3385
    %v3818 = vpack.c.b16 %v3402, %v3394
    %v3819 = vpack.c.b16 %v3403, %v3395
    %v3820 = vpack.c.b16 %v3404, %v3396
    %v3821 = vpack.c.b16 %v3405, %v3397
    %v3822 = vpack.c.b16 %v3406, %v3398
    %v3823 = vpack.c.b16 %v3407, %v3399
    %v3824 = vpack.c.b16 %v3408, %v3400
    %v3825 = vpack.c.b16 %v3409, %v3401
    %v3826 = vpack.c.b16 %v3418, %v3410
    %v3827 = vpack.c.b16 %v3419, %v3411
    %v3828 = vpack.c.b16 %v3420, %v3412
    %v3829 = vpack.c.b16 %v3421, %v3413
    %v3830 = vpack.c.b16 %v3422, %v3414
    %v3831 = vpack.c.b16 %v3423, %v3415
    %v3832 = vpack.c.b16 %v3424, %v3416
    %v3833 = vpack.c.b16 %v3425, %v3417
    %v3834 = vpack.c.b16 %v3434, %v3426
    %v3835 = vpack.c.b16 %v3435, %v3427
    %v3836 = vpack.c.b16 %v3436, %v3428
    %v3837 = vpack.c.b16 %v3437, %v3429
    %v3838 = vpack.c.b16 %v3438, %v3430
    %v3839 = vpack.c.b16 %v3439, %v3431
    %v3840 = vpack.c.b16 %v3440, %v3432
    %v3841 = vpack.c.b16 %v3441, %v3433
    %v3842 = vpack.c.b16 %v3450, %v3442
    %v3843 = vpack.c.b16 %v3451, %v3443
    %v3844 = vpack.c.b16 %v3452, %v3444
    %v3845 = vpack.c.b16 %v3453, %v3445
    %v3846 = vpack.c.b16 %v3454, %v3446
    %v3847 = vpack.c.b16 %v3455, %v3447
    %v3848 = vpack.c.b16 %v3456, %v3448
    %v3849 = vpack.c.b16 %v3457, %v3449
    %v3850 = vpack.c.b16 %v3466, %v3458
    %v3851 = vpack.c.b16 %v3467, %v3459
    %v3852 = vpack.c.b16 %v3468, %v3460
    %v3853 = vpack.c.b16 %v3469, %v3461
    %v3854 = vpack.c.b16 %v3470, %v3462
    %v3855 = vpack.c.b16 %v3471, %v3463
    %v3856 = vpack.c.b16 %v3472, %v3464
    %v3857 = vpack.c.b16 %v3473, %v3465
    %v3858 = vpack.c.b16 %v3482, %v3474
    %v3859 = vpack.c.b16 %v3483, %v3475
    %v3860 = vpack.c.b16 %v3484, %v3476
    %v3861 = vpack.c.b16 %v3485, %v3477
    %v3862 = vpack.c.b16 %v3486, %v3478
    %v3863 = vpack.c.b16 %v3487, %v3479
    %v3864 = vpack.c.b16 %v3488, %v3480
    %v3865 = vpack.c.b16 %v3489, %v3481
    %v3866 = vpack.c.b16 %v3498, %v3490
    %v3867 = vpack.c.b16 %v3499, %v3491
    %v3868 = vpack.c.b16 %v3500, %v3492
    %v3869 = vpack.c.b16 %v3501, %v3493
    %v3870 = vpack.c.b16 %v3502, %v3494
    %v3871 = vpack.c.b16 %v3503, %v3495
    %v3872 = vpack.c.b16 %v3504, %v3496
    %v3873 = vpack.c.b16 %v3505, %v3497
    %v3874 = vpack.c.b16 %v3514, %v3506
    %v3875 = vpack.c.b16 %v3515, %v3507
    %v3876 = vpack.c.b16 %v3516, %v3508
    %v3877 = vpack.c.b16 %v3517, %v3509
    %v3878 = vpack.c.b16 %v3518, %v3510
    %v3879 = vpack.c.b16 %v3519, %v3511
    %v3880 = vpack.c.b16 %v3520, %v3512
    %v3881 = vpack.c.b16 %v3521, %v3513
    %v3882 = vpack.c.b16 %v3530, %v3522
    %v3883 = vpack.c.b16 %v3531, %v3523
    %v3884 = vpack.c.b16 %v3532, %v3524
    %v3885 = vpack.c.b16 %v3533, %v3525
    %v3886 = vpack.c.b16 %v3534, %v3526
    %v3887 = vpack.c.b16 %v3535, %v3527
    %v3888 = vpack.c.b16 %v3536, %v3528
    %v3889 = vpack.c.b16 %v3537, %v3529
    %v3890 = vpack.c.b16 %v3546, %v3538
    %v3891 = vpack.c.b16 %v3547, %v3539
    %v3892 = vpack.c.b16 %v3548, %v3540
    %v3893 = vpack.c.b16 %v3549, %v3541
    %v3894 = vpack.c.b16 %v3550, %v3542
    %v3895 = vpack.c.b16 %v3551, %v3543
    %v3896 = vpack.c.b16 %v3552, %v3544
    %v3897 = vpack.c.b16 %v3553, %v3545
    %v3898 = vpack.c.b16 %v3562, %v3554
    %v3899 = vpack.c.b16 %v3563, %v3555
    %v3900 = vpack.c.b16 %v3564, %v3556
    %v3901 = vpack.c.b16 %v3565, %v3557
    %v3902 = vpack.c.b16 %v3566, %v3558
    %v3903 = vpack.c.b16 %v3567, %v3559
    %v3904 = vpack.c.b16 %v3568, %v3560
    %v3905 = vpack.c.b16 %v3569, %v3561
    %v3906 = vpack.c.b16 %v3578, %v3570
    %v3907 = vpack.c.b16 %v3579, %v3571
    %v3908 = vpack.c.b16 %v3580, %v3572
    %v3909 = vpack.c.b16 %v3581, %v3573
    %v3910 = vpack.c.b16 %v3582, %v3574
    %v3911 = vpack.c.b16 %v3583, %v3575
    %v3912 = vpack.c.b16 %v3584, %v3576
    %v3913 = vpack.c.b16 %v3585, %v3577
    %v3914 = vpack.c.b16 %v3594, %v3586
    %v3915 = vpack.c.b16 %v3595, %v3587
    %v3916 = vpack.c.b16 %v3596, %v3588
    %v3917 = vpack.c.b16 %v3597, %v3589
    %v3918 = vpack.c.b16 %v3598, %v3590
    %v3919 = vpack.c.b16 %v3599, %v3591
    %v3920 = vpack.c.b16 %v3600, %v3592
    %v3921 = vpack.c.b16 %v3601, %v3593
    %v3922 = vpack.c.b16 %v3610, %v3602
    %v3923 = vpack.c.b16 %v3611, %v3603
    %v3924 = vpack.c.b16 %v3612, %v3604
    %v3925 = vpack.c.b16 %v3613, %v3605
    %v3926 = vpack.c.b16 %v3614, %v3606
    %v3927 = vpack.c.b16 %v3615, %v3607
    %v3928 = vpack.c.b16 %v3616, %v3608
    %v3929 = vpack.c.b16 %v3617, %v3609
    %v3930 = vpack.c.b16 %v3626, %v3618
    %v3931 = vpack.c.b16 %v3627, %v3619
    %v3932 = vpack.c.b16 %v3628, %v3620
    %v3933 = vpack.c.b16 %v3629, %v3621
    %v3934 = vpack.c.b16 %v3630, %v3622
    %v3935 = vpack.c.b16 %v3631, %v3623
    %v3936 = vpack.c.b16 %v3632, %v3624
    %v3937 = vpack.c.b16 %v3633, %v3625
    %v3938 = vpack.c.b16 %v3642, %v3634
    %v3939 = vpack.c.b16 %v3643, %v3635
    %v3940 = vpack.c.b16 %v3644, %v3636
    %v3941 = vpack.c.b16 %v3645, %v3637
    %v3942 = vpack.c.b16 %v3646, %v3638
    %v3943 = vpack.c.b16 %v3647, %v3639
    %v3944 = vpack.c.b16 %v3648, %v3640
    %v3945 = vpack.c.b16 %v3649, %v3641
    %v3946 = vpack.c.b16 %v3658, %v3650
    %v3947 = vpack.c.b16 %v3659, %v3651
    %v3948 = vpack.c.b16 %v3660, %v3652
    %v3949 = vpack.c.b16 %v3661, %v3653
    %v3950 = vpack.c.b16 %v3662, %v3654
    %v3951 = vpack.c.b16 %v3663, %v3655
    %v3952 = vpack.c.b16 %v3664, %v3656
    %v3953 = vpack.c.b16 %v3665, %v3657
    %v3954 = vpack.c.b16 %v3674, %v3666
    %v3955 = vpack.c.b16 %v3675, %v3667
    %v3956 = vpack.c.b16 %v3676, %v3668
    %v3957 = vpack.c.b16 %v3677, %v3669
    %v3958 = vpack.c.b16 %v3678, %v3670
    %v3959 = vpack.c.b16 %v3679, %v3671
    %v3960 = vpack.c.b16 %v3680, %v3672
    %v3961 = vpack.c.b16 %v3681, %v3673
    %v3962 = vpack.c.b16 %v3690, %v3682
    %v3963 = vpack.c.b16 %v3691, %v3683
    %v3964 = vpack.c.b16 %v3692, %v3684
    %v3965 = vpack.c.b16 %v3693, %v3685
    %v3966 = vpack.c.b16 %v3694, %v3686
    %v3967 = vpack.c.b16 %v3695, %v3687
    %v3968 = vpack.c.b16 %v3696, %v3688
    %v3969 = vpack.c.b16 %v3697, %v3689
    %v3970 = vpack.c.b16 %v3706, %v3698
    %v3971 = vpack.c.b16 %v3707, %v3699
    %v3972 = vpack.c.b16 %v3708, %v3700
    %v3973 = vpack.c.b16 %v3709, %v3701
    %v3974 = vpack.c.b16 %v3710, %v3702
    %v3975 = vpack.c.b16 %v3711, %v3703
    %v3976 = vpack.c.b16 %v3712, %v3704
    %v3977 = vpack.c.b16 %v3713, %v3705
    %v3978 = vpack.c.b16 %v3722, %v3714
    %v3979 = vpack.c.b16 %v3723, %v3715
    %v3980 = vpack.c.b16 %v3724, %v3716
    %v3981 = vpack.c.b16 %v3725, %v3717
    %v3982 = vpack.c.b16 %v3726, %v3718
    %v3983 = vpack.c.b16 %v3727, %v3719
    %v3984 = vpack.c.b16 %v3728, %v3720
    %v3985 = vpack.c.b16 %v3729, %v3721
    %4242 = vmatprep.subr.bf16.mxu0 %v3731
    %4243 = vmatpush1.bf16.msra.mxu0 %v3730
    %4244 = vmatprep.subr.bf16.mxu0 %v3739
    %4245 = vmatpush1.bf16.msra.mxu0 %v3738
    %4246 = vmatprep.subr.bf16.mxu0 %v3747
    %4247 = vmatpush1.bf16.msra.mxu0 %v3746
    %4248 = vmatprep.subr.bf16.mxu0 %v3755
    %4249 = vmatpush1.bf16.msra.mxu0 %v3754
    %4250 = vmatprep.subr.bf16.mxu0 %v3763
    %4251 = vmatpush1.bf16.msra.mxu0 %v3762
    %4252 = vmatprep.subr.bf16.mxu0 %v3771
    %4253 = vmatpush1.bf16.msra.mxu0 %v3770
    %4254 = vmatprep.subr.bf16.mxu0 %v3779
    %4255 = vmatpush1.bf16.msra.mxu0 %v3778
    %4256 = vmatprep.subr.bf16.mxu0 %v3787
    %4257 = vmatpush1.bf16.msra.mxu0 %v3786
    %4258 = vmatprep.subr.bf16.mxu0 %v3795
    %4259 = vmatpush1.bf16.msra.mxu0 %v3794
    %4260 = vmatprep.subr.bf16.mxu0 %v3803
    %4261 = vmatpush1.bf16.msra.mxu0 %v3802
    %4262 = vmatprep.subr.bf16.mxu0 %v3811
    %4263 = vmatpush1.bf16.msra.mxu0 %v3810
    %4264 = vmatprep.subr.bf16.mxu0 %v3819
    %4265 = vmatpush1.bf16.msra.mxu0 %v3818
    %4266 = vmatprep.subr.bf16.mxu0 %v3827
    %4267 = vmatpush1.bf16.msra.mxu0 %v3826
    %4268 = vmatprep.subr.bf16.mxu0 %v3835
    %4269 = vmatpush1.bf16.msra.mxu0 %v3834
    %4270 = vmatprep.subr.bf16.mxu0 %v3843
    %4271 = vmatpush1.bf16.msra.mxu0 %v3842
    %4272 = vmatprep.subr.bf16.mxu0 %v3851
    %4273 = vmatpush1.bf16.msra.mxu0 %v3850
    %4274 = vmatprep.mubr.bf16.mxu0 %v2927
    %4275 = vmatmul.mubr.bf16.gmra.mrb[0].mxu0 %v2926
    %v4276 = vpop.f32.mrb[0].mxu0
    %v4277 = vadd.f32 %v2933, %v4276
    %v4278 = vpop.f32.mrb[0].mxu0
    %v4279 = vadd.f32 %v2937, %v4278
    %v4280 = vpop.f32.mrb[0].mxu0
    %v4281 = vpop.f32.mrb[0].mxu0
    %4282 = vdwg.mxu0
    %4283 = vmatprep.subr.bf16.mxu0 %v3859
    %4284 = vmatpush1.bf16.msra.mxu0 %v3858
    %4285 = vmatprep.subr.bf16.mxu0 %v3867
    %4286 = vmatpush1.bf16.msra.mxu0 %v3866
    %4287 = vmatprep.subr.bf16.mxu0 %v3875
    %4288 = vmatpush1.bf16.msra.mxu0 %v3874
    %4289 = vmatprep.subr.bf16.mxu0 %v3883
    %4290 = vmatpush1.bf16.msra.mxu0 %v3882
    %4291 = vmatprep.subr.bf16.mxu0 %v3891
    %4292 = vmatpush1.bf16.msra.mxu0 %v3890
    %4293 = vmatprep.subr.bf16.mxu0 %v3899
    %4294 = vmatpush1.bf16.msra.mxu0 %v3898
    %4295 = vmatprep.subr.bf16.mxu0 %v3907
    %4296 = vmatpush1.bf16.msra.mxu0 %v3906
    %4297 = vmatprep.subr.bf16.mxu0 %v3915
    %4298 = vmatpush1.bf16.msra.mxu0 %v3914
    %4299 = vmatprep.subr.bf16.mxu0 %v3923
    %4300 = vmatpush1.bf16.msra.mxu0 %v3922
    %4301 = vmatprep.subr.bf16.mxu0 %v3931
    %4302 = vmatpush1.bf16.msra.mxu0 %v3930
    %4303 = vmatprep.subr.bf16.mxu0 %v3939
    %4304 = vmatpush1.bf16.msra.mxu0 %v3938
    %4305 = vmatprep.subr.bf16.mxu0 %v3947
    %4306 = vmatpush1.bf16.msra.mxu0 %v3946
    %4307 = vmatprep.subr.bf16.mxu0 %v3955
    %4308 = vmatpush1.bf16.msra.mxu0 %v3954
    %4309 = vmatprep.subr.bf16.mxu0 %v3963
    %4310 = vmatpush1.bf16.msra.mxu0 %v3962
    %4311 = vmatprep.subr.bf16.mxu0 %v3971
    %4312 = vmatpush1.bf16.msra.mxu0 %v3970
    %4313 = vmatprep.subr.bf16.mxu0 %v3979
    %4314 = vmatpush1.bf16.msra.mxu0 %v3978
    %4315 = vmatprep.mubr.bf16.mxu0 %v2929
    %4316 = vmatmul.mubr.bf16.gmra.mrb[0].mxu0 %v2928
    %v4317 = vpop.f32.mrb[0].mxu0
    %v4318 = vadd.f32 %v4277, %v4317
    %v4319 = vpop.f32.mrb[0].mxu0
    %v4320 = vadd.f32 %v4279, %v4319
    %v4321 = vpop.f32.mrb[0].mxu0
    %v4322 = vpop.f32.mrb[0].mxu0
    %4323 = vdwg.mxu0
    %4324 = vmatprep.subr.bf16.mxu0 %v3733
    %4325 = vmatpush1.bf16.msra.mxu0 %v3732
    %4326 = vmatprep.subr.bf16.mxu0 %v3741
    %4327 = vmatpush1.bf16.msra.mxu0 %v3740
    %4328 = vmatprep.subr.bf16.mxu0 %v3749
    %4329 = vmatpush1.bf16.msra.mxu0 %v3748
    %4330 = vmatprep.subr.bf16.mxu0 %v3757
    %4331 = vmatpush1.bf16.msra.mxu0 %v3756
    %4332 = vmatprep.subr.bf16.mxu0 %v3765
    %4333 = vmatpush1.bf16.msra.mxu0 %v3764
    %4334 = vmatprep.subr.bf16.mxu0 %v3773
    %4335 = vmatpush1.bf16.msra.mxu0 %v3772
    %4336 = vmatprep.subr.bf16.mxu0 %v3781
    %4337 = vmatpush1.bf16.msra.mxu0 %v3780
    %4338 = vmatprep.subr.bf16.mxu0 %v3789
    %4339 = vmatpush1.bf16.msra.mxu0 %v3788
    %4340 = vmatprep.subr.bf16.mxu0 %v3797
    %4341 = vmatpush1.bf16.msra.mxu0 %v3796
    %4342 = vmatprep.subr.bf16.mxu0 %v3805
    %4343 = vmatpush1.bf16.msra.mxu0 %v3804
    %4344 = vmatprep.subr.bf16.mxu0 %v3813
    %4345 = vmatpush1.bf16.msra.mxu0 %v3812
    %4346 = vmatprep.subr.bf16.mxu0 %v3821
    %4347 = vmatpush1.bf16.msra.mxu0 %v3820
    %4348 = vmatprep.subr.bf16.mxu0 %v3829
    %4349 = vmatpush1.bf16.msra.mxu0 %v3828
    %4350 = vmatprep.subr.bf16.mxu0 %v3837
    %4351 = vmatpush1.bf16.msra.mxu0 %v3836
    %4352 = vmatprep.subr.bf16.mxu0 %v3845
    %4353 = vmatpush1.bf16.msra.mxu0 %v3844
    %4354 = vmatprep.subr.bf16.mxu0 %v3853
    %4355 = vmatpush1.bf16.msra.mxu0 %v3852
    %4356 = vmatprep.mubr.bf16.mxu0 %v2927
    %4357 = vmatmul.mubr.bf16.gmra.mrb[0].mxu0 %v2926
    %v4358 = vpop.f32.mrb[0].mxu0
    %v4359 = vadd.f32 %v2941, %v4358
    %v4360 = vpop.f32.mrb[0].mxu0
    %v4361 = vadd.f32 %v2945, %v4360
    %v4362 = vpop.f32.mrb[0].mxu0
    %v4363 = vpop.f32.mrb[0].mxu0
    %4364 = vdwg.mxu0
    %4365 = vmatprep.subr.bf16.mxu0 %v3861
    %4366 = vmatpush1.bf16.msra.mxu0 %v3860
    %4367 = vmatprep.subr.bf16.mxu0 %v3869
    %4368 = vmatpush1.bf16.msra.mxu0 %v3868
    %4369 = vmatprep.subr.bf16.mxu0 %v3877
    %4370 = vmatpush1.bf16.msra.mxu0 %v3876
    %4371 = vmatprep.subr.bf16.mxu0 %v3885
    %4372 = vmatpush1.bf16.msra.mxu0 %v3884
    %4373 = vmatprep.subr.bf16.mxu0 %v3893
    %4374 = vmatpush1.bf16.msra.mxu0 %v3892
    %4375 = vmatprep.subr.bf16.mxu0 %v3901
    %4376 = vmatpush1.bf16.msra.mxu0 %v3900
    %4377 = vmatprep.subr.bf16.mxu0 %v3909
    %4378 = vmatpush1.bf16.msra.mxu0 %v3908
    %4379 = vmatprep.subr.bf16.mxu0 %v3917
    %4380 = vmatpush1.bf16.msra.mxu0 %v3916
    %4381 = vmatprep.subr.bf16.mxu0 %v3925
    %4382 = vmatpush1.bf16.msra.mxu0 %v3924
    %4383 = vmatprep.subr.bf16.mxu0 %v3933
    %4384 = vmatpush1.bf16.msra.mxu0 %v3932
    %4385 = vmatprep.subr.bf16.mxu0 %v3941
    %4386 = vmatpush1.bf16.msra.mxu0 %v3940
    %4387 = vmatprep.subr.bf16.mxu0 %v3949
    %4388 = vmatpush1.bf16.msra.mxu0 %v3948
    %4389 = vmatprep.subr.bf16.mxu0 %v3957
    %4390 = vmatpush1.bf16.msra.mxu0 %v3956
    %4391 = vmatprep.subr.bf16.mxu0 %v3965
    %4392 = vmatpush1.bf16.msra.mxu0 %v3964
    %4393 = vmatprep.subr.bf16.mxu0 %v3973
    %4394 = vmatpush1.bf16.msra.mxu0 %v3972
    %4395 = vmatprep.subr.bf16.mxu0 %v3981
    %4396 = vmatpush1.bf16.msra.mxu0 %v3980
    %4397 = vmatprep.mubr.bf16.mxu0 %v2929
    %4398 = vmatmul.mubr.bf16.gmra.mrb[0].mxu0 %v2928
    %v4399 = vpop.f32.mrb[0].mxu0
    %v4400 = vadd.f32 %v4359, %v4399
    %v4401 = vpop.f32.mrb[0].mxu0
    %v4402 = vadd.f32 %v4361, %v4401
    %v4403 = vpop.f32.mrb[0].mxu0
    %v4404 = vpop.f32.mrb[0].mxu0
    %4405 = vdwg.mxu0
    %4406 = vmatprep.subr.bf16.mxu0 %v3735
    %4407 = vmatpush1.bf16.msra.mxu0 %v3734
    %4408 = vmatprep.subr.bf16.mxu0 %v3743
    %4409 = vmatpush1.bf16.msra.mxu0 %v3742
    %4410 = vmatprep.subr.bf16.mxu0 %v3751
    %4411 = vmatpush1.bf16.msra.mxu0 %v3750
    %4412 = vmatprep.subr.bf16.mxu0 %v3759
    %4413 = vmatpush1.bf16.msra.mxu0 %v3758
    %4414 = vmatprep.subr.bf16.mxu0 %v3767
    %4415 = vmatpush1.bf16.msra.mxu0 %v3766
    %4416 = vmatprep.subr.bf16.mxu0 %v3775
    %4417 = vmatpush1.bf16.msra.mxu0 %v3774
    %4418 = vmatprep.subr.bf16.mxu0 %v3783
    %4419 = vmatpush1.bf16.msra.mxu0 %v3782
    %4420 = vmatprep.subr.bf16.mxu0 %v3791
    %4421 = vmatpush1.bf16.msra.mxu0 %v3790
    %4422 = vmatprep.subr.bf16.mxu0 %v3799
    %4423 = vmatpush1.bf16.msra.mxu0 %v3798
    %4424 = vmatprep.subr.bf16.mxu0 %v3807
    %4425 = vmatpush1.bf16.msra.mxu0 %v3806
    %4426 = vmatprep.subr.bf16.mxu0 %v3815
    %4427 = vmatpush1.bf16.msra.mxu0 %v3814
    %4428 = vmatprep.subr.bf16.mxu0 %v3823
    %4429 = vmatpush1.bf16.msra.mxu0 %v3822
    %4430 = vmatprep.subr.bf16.mxu0 %v3831
    %4431 = vmatpush1.bf16.msra.mxu0 %v3830
    %4432 = vmatprep.subr.bf16.mxu0 %v3839
    %4433 = vmatpush1.bf16.msra.mxu0 %v3838
    %4434 = vmatprep.subr.bf16.mxu0 %v3847
    %4435 = vmatpush1.bf16.msra.mxu0 %v3846
    %4436 = vmatprep.subr.bf16.mxu0 %v3855
    %4437 = vmatpush1.bf16.msra.mxu0 %v3854
    %4438 = vmatprep.mubr.bf16.mxu0 %v2927
    %4439 = vmatmul.mubr.bf16.gmra.mrb[0].mxu0 %v2926
    %v4440 = vpop.f32.mrb[0].mxu0
    %v4441 = vadd.f32 %v2949, %v4440
    %v4442 = vpop.f32.mrb[0].mxu0
    %v4443 = vadd.f32 %v2953, %v4442
    %v4444 = vpop.f32.mrb[0].mxu0
    %v4445 = vpop.f32.mrb[0].mxu0
    %4446 = vdwg.mxu0
    %4447 = vmatprep.subr.bf16.mxu0 %v3863
    %4448 = vmatpush1.bf16.msra.mxu0 %v3862
    %4449 = vmatprep.subr.bf16.mxu0 %v3871
    %4450 = vmatpush1.bf16.msra.mxu0 %v3870
    %4451 = vmatprep.subr.bf16.mxu0 %v3879
    %4452 = vmatpush1.bf16.msra.mxu0 %v3878
    %4453 = vmatprep.subr.bf16.mxu0 %v3887
    %4454 = vmatpush1.bf16.msra.mxu0 %v3886
    %4455 = vmatprep.subr.bf16.mxu0 %v3895
    %4456 = vmatpush1.bf16.msra.mxu0 %v3894
    %4457 = vmatprep.subr.bf16.mxu0 %v3903
    %4458 = vmatpush1.bf16.msra.mxu0 %v3902
    %4459 = vmatprep.subr.bf16.mxu0 %v3911
    %4460 = vmatpush1.bf16.msra.mxu0 %v3910
    %4461 = vmatprep.subr.bf16.mxu0 %v3919
    %4462 = vmatpush1.bf16.msra.mxu0 %v3918
    %4463 = vmatprep.subr.bf16.mxu0 %v3927
    %4464 = vmatpush1.bf16.msra.mxu0 %v3926
    %4465 = vmatprep.subr.bf16.mxu0 %v3935
    %4466 = vmatpush1.bf16.msra.mxu0 %v3934
    %4467 = vmatprep.subr.bf16.mxu0 %v3943
    %4468 = vmatpush1.bf16.msra.mxu0 %v3942
    %4469 = vmatprep.subr.bf16.mxu0 %v3951
    %4470 = vmatpush1.bf16.msra.mxu0 %v3950
    %4471 = vmatprep.subr.bf16.mxu0 %v3959
    %4472 = vmatpush1.bf16.msra.mxu0 %v3958
    %4473 = vmatprep.subr.bf16.mxu0 %v3967
    %4474 = vmatpush1.bf16.msra.mxu0 %v3966
    %4475 = vmatprep.subr.bf16.mxu0 %v3975
    %4476 = vmatpush1.bf16.msra.mxu0 %v3974
    %4477 = vmatprep.subr.bf16.mxu0 %v3983
    %4478 = vmatpush1.bf16.msra.mxu0 %v3982
    %4479 = vmatprep.mubr.bf16.mxu0 %v2929
    %4480 = vmatmul.mubr.bf16.gmra.mrb[0].mxu0 %v2928
    %v4481 = vpop.f32.mrb[0].mxu0
    %v4482 = vadd.f32 %v4441, %v4481
    %v4483 = vpop.f32.mrb[0].mxu0
    %v4484 = vadd.f32 %v4443, %v4483
    %v4485 = vpop.f32.mrb[0].mxu0
    %v4486 = vpop.f32.mrb[0].mxu0
    %4487 = vdwg.mxu0
    %4488 = vmatprep.subr.bf16.mxu0 %v3737
    %4489 = vmatpush1.bf16.msra.mxu0 %v3736
    %4490 = vmatprep.subr.bf16.mxu0 %v3745
    %4491 = vmatpush1.bf16.msra.mxu0 %v3744
    %4492 = vmatprep.subr.bf16.mxu0 %v3753
    %4493 = vmatpush1.bf16.msra.mxu0 %v3752
    %4494 = vmatprep.subr.bf16.mxu0 %v3761
    %4495 = vmatpush1.bf16.msra.mxu0 %v3760
    %4496 = vmatprep.subr.bf16.mxu0 %v3769
    %4497 = vmatpush1.bf16.msra.mxu0 %v3768
    %4498 = vmatprep.subr.bf16.mxu0 %v3777
    %4499 = vmatpush1.bf16.msra.mxu0 %v3776
    %4500 = vmatprep.subr.bf16.mxu0 %v3785
    %4501 = vmatpush1.bf16.msra.mxu0 %v3784
    %4502 = vmatprep.subr.bf16.mxu0 %v3793
    %4503 = vmatpush1.bf16.msra.mxu0 %v3792
    %4504 = vmatprep.subr.bf16.mxu0 %v3801
    %4505 = vmatpush1.bf16.msra.mxu0 %v3800
    %4506 = vmatprep.subr.bf16.mxu0 %v3809
    %4507 = vmatpush1.bf16.msra.mxu0 %v3808
    %4508 = vmatprep.subr.bf16.mxu0 %v3817
    %4509 = vmatpush1.bf16.msra.mxu0 %v3816
    %4510 = vmatprep.subr.bf16.mxu0 %v3825
    %4511 = vmatpush1.bf16.msra.mxu0 %v3824
    %4512 = vmatprep.subr.bf16.mxu0 %v3833
    %4513 = vmatpush1.bf16.msra.mxu0 %v3832
    %4514 = vmatprep.subr.bf16.mxu0 %v3841
    %4515 = vmatpush1.bf16.msra.mxu0 %v3840
    %4516 = vmatprep.subr.bf16.mxu0 %v3849
    %4517 = vmatpush1.bf16.msra.mxu0 %v3848
    %4518 = vmatprep.subr.bf16.mxu0 %v3857
    %4519 = vmatpush1.bf16.msra.mxu0 %v3856
    %4520 = vmatprep.mubr.bf16.mxu0 %v2927
    %4521 = vmatmul.mubr.bf16.gmra.mrb[0].mxu0 %v2926
    %v4522 = vpop.f32.mrb[0].mxu0
    %v4523 = vadd.f32 %v2957, %v4522
    %v4524 = vpop.f32.mrb[0].mxu0
    %v4525 = vadd.f32 %v2961, %v4524
    %v4526 = vpop.f32.mrb[0].mxu0
    %v4527 = vpop.f32.mrb[0].mxu0
    %4528 = vdwg.mxu0
    %4529 = vmatprep.subr.bf16.mxu0 %v3865
    %4530 = vmatpush1.bf16.msra.mxu0 %v3864
    %4531 = vmatprep.subr.bf16.mxu0 %v3873
    %4532 = vmatpush1.bf16.msra.mxu0 %v3872
    %4533 = vmatprep.subr.bf16.mxu0 %v3881
    %4534 = vmatpush1.bf16.msra.mxu0 %v3880
    %4535 = vmatprep.subr.bf16.mxu0 %v3889
    %4536 = vmatpush1.bf16.msra.mxu0 %v3888
    %4537 = vmatprep.subr.bf16.mxu0 %v3897
    %4538 = vmatpush1.bf16.msra.mxu0 %v3896
    %4539 = vmatprep.subr.bf16.mxu0 %v3905
    %4540 = vmatpush1.bf16.msra.mxu0 %v3904
    %4541 = vmatprep.subr.bf16.mxu0 %v3913
    %4542 = vmatpush1.bf16.msra.mxu0 %v3912
    %4543 = vmatprep.subr.bf16.mxu0 %v3921
    %4544 = vmatpush1.bf16.msra.mxu0 %v3920
    %4545 = vmatprep.subr.bf16.mxu0 %v3929
    %4546 = vmatpush1.bf16.msra.mxu0 %v3928
    %4547 = vmatprep.subr.bf16.mxu0 %v3937
    %4548 = vmatpush1.bf16.msra.mxu0 %v3936
    %4549 = vmatprep.subr.bf16.mxu0 %v3945
    %4550 = vmatpush1.bf16.msra.mxu0 %v3944
    %4551 = vmatprep.subr.bf16.mxu0 %v3953
    %4552 = vmatpush1.bf16.msra.mxu0 %v3952
    %4553 = vmatprep.subr.bf16.mxu0 %v3961
    %4554 = vmatpush1.bf16.msra.mxu0 %v3960
    %4555 = vmatprep.subr.bf16.mxu0 %v3969
    %4556 = vmatpush1.bf16.msra.mxu0 %v3968
    %4557 = vmatprep.subr.bf16.mxu0 %v3977
    %4558 = vmatpush1.bf16.msra.mxu0 %v3976
    %4559 = vmatprep.subr.bf16.mxu0 %v3985
    %4560 = vmatpush1.bf16.msra.mxu0 %v3984
    %4561 = vmatprep.mubr.bf16.mxu0 %v2929
    %4562 = vmatmul.mubr.bf16.gmra.mrb[0].mxu0 %v2928
    %v4563 = vpop.f32.mrb[0].mxu0
    %v4564 = vadd.f32 %v4523, %v4563
    %v4565 = vpop.f32.mrb[0].mxu0
    %v4566 = vadd.f32 %v4525, %v4565
    %v4567 = vpop.f32.mrb[0].mxu0
    %v4568 = vpop.f32.mrb[0].mxu0
    %4569 = vdwg.mxu0
    %v4571 = vrot.slane %v739, 4
    %v4573 = vunpack.c.l.bf16 %v4571
    %vm4574 = vcmask 23552
    %v4576 = vsel %vm4574, %v95, 0
    %vm4578 = vcmask 1042432
    %v4580 = vsel %vm4578, %v4573, 0
    %4582 = vmatprep.subr.mxu0 0.0
    %4583 = vmatpush1.msra.mxu0 %v4580
    %4584 = vmatprep.subr.mxu0 0.0
    %4585 = vmatpush1.msra.mxu0 0.0
    %4586 = vmatprep.subr.mxu0 0.0
    %4587 = vmatpush1.msra.mxu0 0.0
    %4588 = vmatprep.subr.mxu0 0.0
    %4589 = vmatpush1.msra.mxu0 0.0
    %4590 = vmatprep.subr.mxu0 0.0
    %4591 = vmatpush1.msra.mxu0 0.0
    %4592 = vmatprep.subr.mxu0 0.0
    %4593 = vmatpush1.msra.mxu0 0.0
    %4594 = vmatprep.subr.mxu0 0.0
    %4595 = vmatpush1.msra.mxu0 0.0
    %4596 = vmatprep.subr.mxu0 0.0
    %4597 = vmatpush1.msra.mxu0 0.0
    %4598 = vmatprep.subr.mxu0 0.0
    %4599 = vmatpush1.msra.mxu0 0.0
    %4600 = vmatprep.subr.mxu0 0.0
    %4601 = vmatpush1.msra.mxu0 0.0
    %4602 = vmatprep.subr.mxu0 0.0
    %4603 = vmatpush1.msra.mxu0 0.0
    %4604 = vmatprep.subr.mxu0 0.0
    %4605 = vmatpush1.msra.mxu0 0.0
    %4606 = vmatprep.subr.mxu0 0.0
    %4607 = vmatpush1.msra.mxu0 0.0
    %4608 = vmatprep.subr.mxu0 0.0
    %4609 = vmatpush1.msra.mxu0 0.0
    %4610 = vmatprep.subr.mxu0 0.0
    %4611 = vmatpush1.msra.mxu0 0.0
    %4612 = vmatprep.subr.mxu0 0.0
    %4613 = vmatpush1.msra.mxu0 0.0
    %4614 = vmatprep.subr.mxu0 0.0
    %4615 = vmatpush1.msra.mxu0 0.0
    %4616 = vmatprep.subr.mxu0 0.0
    %4617 = vmatpush1.msra.mxu0 0.0
    %4618 = vmatprep.subr.mxu0 0.0
    %4619 = vmatpush1.msra.mxu0 0.0
    %4620 = vmatprep.subr.mxu0 0.0
    %4621 = vmatpush1.msra.mxu0 0.0
    %4622 = vmatprep.subr.mxu0 0.0
    %4623 = vmatpush1.msra.mxu0 0.0
    %4624 = vmatprep.subr.mxu0 0.0
    %4625 = vmatpush1.msra.mxu0 0.0
    %4626 = vmatprep.subr.mxu0 0.0
    %4627 = vmatpush1.msra.mxu0 0.0
    %4628 = vmatprep.subr.mxu0 0.0
    %4629 = vmatpush1.msra.mxu0 0.0
    %4630 = vmatprep.subr.mxu0 0.0
    %4631 = vmatpush1.msra.mxu0 0.0
    %4632 = vmatprep.subr.mxu0 0.0
    %4633 = vmatpush1.msra.mxu0 0.0
    %4634 = vmatprep.subr.mxu0 0.0
    %4635 = vmatpush1.msra.mxu0 0.0
    %4636 = vmatprep.subr.mxu0 0.0
    %4637 = vmatpush1.msra.mxu0 0.0
    %4638 = vmatprep.subr.mxu0 0.0
    %4639 = vmatpush1.msra.mxu0 0.0
    %4640 = vmatprep.subr.mxu0 0.0
    %4641 = vmatpush1.msra.mxu0 0.0
    %4642 = vmatprep.subr.mxu0 0.0
    %4643 = vmatpush1.msra.mxu0 0.0
    %4644 = vmatprep.subr.mxu0 0.0
    %4645 = vmatpush1.msra.mxu0 0.0
    %4646 = vmatprep.mubr.f32.mxu0 0.0
    %4647 = vmatmul.mubr.f32.gmra.mrb[0].mxu0 %v4576
    %v4648 = vpop.f32.mrb[0].mxu0
    %v4649 = vadd.f32 %v4318, %v4648
    %v4650 = vpop.f32.mrb[0].mxu0
    %4651 = vdwg.mxu0
    %v4652 = vxor.u32 %v4649, 2147483648
    %v4653 = vmul.f32 %v4652, 1.442695
    %v4654 = vpow.pop %v4653
    %v4655 = vadd.f32 %v4654, 1.0
    %v4656 = vrcp.pop %v4655
    %v4657 = vmul.f32 1.0, %v4656
    %v4658 = vmul.f32 %v4649, %v4657
    %4659 = vadd.xlane.f32.xlu0 %v4658
    %v4660 = vpop.xlane.xlu0 %4659
    %v4661 = vrcp.pop 128.0
    %v4662 = vmul.f32 %v4660, %v4661
    %v4663 = vsub.f32 %v4658, %v4662
    %v4664 = vmul.f32 %v4663, %v4663
    %4665 = vadd.xlane.f32.xlu0 %v4664
    %v4666 = vpop.xlane.xlu0 %4665
    %v4667 = vmul.f32 %v4666, %v4661
    %v4668 = vadd.f32 %v4667, 1e-05
    %v4669 = vrsqrt.pop %v4668
    %v4670 = vmul.f32 %v4663, %v4669
    %v4671 = vlaneseq
    %v4672 = vshrl.u32 %v4671, 7
    %v4673 = vsub.s32 3, %v4672
    %v4674 = vrot.slane %v793, %v4673
    %v4675 = vmul.f32 %v4670, %v4674
    %v4676 = vlaneseq
    %v4677 = vshrl.u32 %v4676, 7
    %v4678 = vsub.s32 4, %v4677
    %v4679 = vrot.slane %v793, %v4678
    %v4680 = vadd.f32 %v4675, %v4679
    %v4681 = vadd.f32 %v4680, %v4320
    %v4682 = vpack.c.bf16 %v4681, %v4681
    %v4683 = vlaneseq
    %v4684 = vshrl.u32 %v4683, 7
    %v4685 = vsub.s32 5, %v4684
    %v4686 = vrot.slane %v793, %v4685
    %v4687 = vlaneseq
    %v4688 = vshrl.u32 %v4687, 7
    %v4689 = vsub.s32 5, %v4688
    %v4690 = vrot.slane %v794, %v4689
    %v4707 = vunpack.c.l.b16 %v737
    %v4708 = vunpack.c.h.b16 %v737
    %v4709 = vunpack.c.l.b16 %v741
    %v4710 = vunpack.c.h.b16 %v741
    %v4711 = vunpack.c.l.b16 %v745
    %v4712 = vunpack.c.h.b16 %v745
    %v4713 = vunpack.c.l.b16 %v749
    %v4714 = vunpack.c.h.b16 %v749
    %v4715 = vunpack.c.l.b16 %v753
    %v4716 = vunpack.c.h.b16 %v753
    %v4717 = vunpack.c.l.b16 %v757
    %v4718 = vunpack.c.h.b16 %v757
    %v4719 = vunpack.c.l.b16 %v761
    %v4720 = vunpack.c.h.b16 %v761
    %v4721 = vunpack.c.l.b16 %v765
    %v4722 = vunpack.c.h.b16 %v765
    %v4723 = vunpack.c.l.b16 %v769
    %v4724 = vunpack.c.h.b16 %v769
    %v4725 = vunpack.c.l.b16 %v772
    %v4726 = vunpack.c.h.b16 %v772
    %v4727 = vunpack.c.l.b16 %v775
    %v4728 = vunpack.c.h.b16 %v775
    %v4729 = vunpack.c.l.b16 %v778
    %v4730 = vunpack.c.h.b16 %v778
    %v4731 = vunpack.c.l.b16 %v781
    %v4732 = vunpack.c.h.b16 %v781
    %v4733 = vunpack.c.l.b16 %v784
    %v4734 = vunpack.c.h.b16 %v784
    %v4735 = vunpack.c.l.b16 %v787
    %v4736 = vunpack.c.h.b16 %v787
    %v4737 = vunpack.c.l.b16 %v790
    %v4738 = vunpack.c.h.b16 %v790
    %v4739 = vpack.c.b16 %v4709, %v4707
    %v4740 = vpack.c.b16 %v4710, %v4708
    %v4741 = vpack.c.b16 %v4713, %v4711
    %v4742 = vpack.c.b16 %v4714, %v4712
    %v4743 = vpack.c.b16 %v4717, %v4715
    %v4744 = vpack.c.b16 %v4718, %v4716
    %v4745 = vpack.c.b16 %v4721, %v4719
    %v4746 = vpack.c.b16 %v4722, %v4720
    %v4747 = vpack.c.b16 %v4725, %v4723
    %v4748 = vpack.c.b16 %v4726, %v4724
    %v4749 = vpack.c.b16 %v4729, %v4727
    %v4750 = vpack.c.b16 %v4730, %v4728
    %v4751 = vpack.c.b16 %v4733, %v4731
    %v4752 = vpack.c.b16 %v4734, %v4732
    %v4753 = vpack.c.b16 %v4737, %v4735
    %v4754 = vpack.c.b16 %v4738, %v4736
    %4771 = vmatprep.subr.bf16.mxu0 %v4740
    %4772 = vmatpush1.bf16.msra.mxu0 %v4739
    %4773 = vmatprep.subr.bf16.mxu0 %v4742
    %4774 = vmatpush1.bf16.msra.mxu0 %v4741
    %4775 = vmatprep.subr.bf16.mxu0 %v4744
    %4776 = vmatpush1.bf16.msra.mxu0 %v4743
    %4777 = vmatprep.subr.bf16.mxu0 %v4746
    %4778 = vmatpush1.bf16.msra.mxu0 %v4745
    %4779 = vmatprep.subr.bf16.mxu0 %v4748
    %4780 = vmatpush1.bf16.msra.mxu0 %v4747
    %4781 = vmatprep.subr.bf16.mxu0 %v4750
    %4782 = vmatpush1.bf16.msra.mxu0 %v4749
    %4783 = vmatprep.subr.bf16.mxu0 %v4752
    %4784 = vmatpush1.bf16.msra.mxu0 %v4751
    %4785 = vmatprep.subr.bf16.mxu0 %v4754
    %4786 = vmatpush1.bf16.msra.mxu0 %v4753
    %4787 = vmatprep.subr.bf16.mxu0 0
    %4788 = vmatpush1.bf16.msra.mxu0 0
    %4789 = vmatprep.subr.bf16.mxu0 0
    %4790 = vmatpush1.bf16.msra.mxu0 0
    %4791 = vmatprep.subr.bf16.mxu0 0
    %4792 = vmatpush1.bf16.msra.mxu0 0
    %4793 = vmatprep.subr.bf16.mxu0 0
    %4794 = vmatpush1.bf16.msra.mxu0 0
    %4795 = vmatprep.subr.bf16.mxu0 0
    %4796 = vmatpush1.bf16.msra.mxu0 0
    %4797 = vmatprep.subr.bf16.mxu0 0
    %4798 = vmatpush1.bf16.msra.mxu0 0
    %4799 = vmatprep.subr.bf16.mxu0 0
    %4800 = vmatpush1.bf16.msra.mxu0 0
    %4801 = vmatprep.subr.bf16.mxu0 0
    %4802 = vmatpush1.bf16.msra.mxu0 0
    %4803 = vmatprep.mubr.bf16.mxu0 0
    %4804 = vmatmul.mubr.bf16.gmra.mrb[0].mxu0 %v4682
    %v4805 = vpop.f32.mrb[0].mxu0
    %v4806 = vadd.f32 %v4686, %v4805
    %v4807 = vpop.f32.mrb[0].mxu0
    %v4808 = vadd.f32 %v4690, %v4807
    %v4809 = vpop.f32.mrb[0].mxu0
    %v4810 = vpop.f32.mrb[0].mxu0
    %4811 = vdwg.mxu0
    %v4812 = vxor.u32 %v4806, 2147483648
    %v4813 = vxor.u32 %v4808, 2147483648
    %v4814 = vmul.f32 %v4812, 1.442695
    %v4815 = vpow.pop %v4814
    %v4816 = vmul.f32 %v4813, 1.442695
    %v4817 = vpow.pop %v4816
    %v4818 = vadd.f32 %v4815, 1.0
    %v4819 = vadd.f32 %v4817, 1.0
    %v4820 = vrcp.pop %v4818
    %v4821 = vmul.f32 1.0, %v4820
    %v4822 = vrcp.pop %v4819
    %v4823 = vmul.f32 1.0, %v4822
    %v4824 = vmul.f32 %v4806, %v4821
    %v4825 = vmul.f32 %v4808, %v4823
    %v4826 = vadd.f32 %v4824, %v4825
    %4827 = vadd.xlane.f32.xlu0 %v4826
    %v4828 = vpop.xlane.xlu0 %4827
    %v4829 = vrcp.pop 256.0
    %v4830 = vmul.f32 %v4828, %v4829
    %v4831 = vsub.f32 %v4824, %v4830
    %v4832 = vsub.f32 %v4825, %v4830
    %v4833 = vmul.f32 %v4831, %v4831
    %v4834 = vmul.f32 %v4832, %v4832
    %v4835 = vadd.f32 %v4833, %v4834
    %4836 = vadd.xlane.f32.xlu0 %v4835
    %v4837 = vpop.xlane.xlu0 %4836
    %v4838 = vmul.f32 %v4837, %v4829
    %v4839 = vadd.f32 %v4838, 1e-05
    %v4840 = vrsqrt.pop %v4839
    %v4841 = vmul.f32 %v4831, %v4840
    %v4842 = vmul.f32 %v4832, %v4840
    %v4843 = vlaneseq
    %v4844 = vshrl.u32 %v4843, 7
    %v4845 = vsub.s32 6, %v4844
    %v4846 = vrot.slane %v793, %v4845
    %v4847 = vlaneseq
    %v4848 = vshrl.u32 %v4847, 7
    %v4849 = vsub.s32 6, %v4848
    %v4850 = vrot.slane %v794, %v4849
    %v4851 = vmul.f32 %v4841, %v4846
    %v4852 = vmul.f32 %v4842, %v4850
    %v4853 = vlaneseq
    %v4854 = vshrl.u32 %v4853, 7
    %v4855 = vsub.s32 7, %v4854
    %v4856 = vrot.slane %v793, %v4855
    %v4857 = vlaneseq
    %v4858 = vshrl.u32 %v4857, 7
    %v4859 = vsub.s32 7, %v4858
    %v4860 = vrot.slane %v794, %v4859
    %v4861 = vadd.f32 %v4851, %v4856
    %v4862 = vadd.f32 %v4852, %v4860
    %v4863 = vadd.f32 %v4861, %v4400
    %v4864 = vadd.f32 %v4862, %v4402
    %v4865 = vpack.c.bf16 %v4863, %v4863
    %v4866 = vpack.c.bf16 %v4864, %v4864
    %v4867 = vlaneseq
    %v4868 = vshrl.u32 %v4867, 7
    %v4869 = vsub.s32 0, %v4868
    %v4870 = vrot.slane %v801, %v4869
    %v4871 = vlaneseq
    %v4872 = vshrl.u32 %v4871, 7
    %v4873 = vsub.s32 0, %v4872
    %v4874 = vrot.slane %v802, %v4873
    %v4907 = vunpack.c.l.b16 %v609
    %v4908 = vunpack.c.h.b16 %v609
    %v4909 = vunpack.c.l.b16 %v613
    %v4910 = vunpack.c.h.b16 %v613
    %v4911 = vunpack.c.l.b16 %v617
    %v4912 = vunpack.c.h.b16 %v617
    %v4913 = vunpack.c.l.b16 %v621
    %v4914 = vunpack.c.h.b16 %v621
    %v4915 = vunpack.c.l.b16 %v625
    %v4916 = vunpack.c.h.b16 %v625
    %v4917 = vunpack.c.l.b16 %v629
    %v4918 = vunpack.c.h.b16 %v629
    %v4919 = vunpack.c.l.b16 %v633
    %v4920 = vunpack.c.h.b16 %v633
    %v4921 = vunpack.c.l.b16 %v637
    %v4922 = vunpack.c.h.b16 %v637
    %v4923 = vunpack.c.l.b16 %v641
    %v4924 = vunpack.c.h.b16 %v641
    %v4925 = vunpack.c.l.b16 %v645
    %v4926 = vunpack.c.h.b16 %v645
    %v4927 = vunpack.c.l.b16 %v649
    %v4928 = vunpack.c.h.b16 %v649
    %v4929 = vunpack.c.l.b16 %v653
    %v4930 = vunpack.c.h.b16 %v653
    %v4931 = vunpack.c.l.b16 %v657
    %v4932 = vunpack.c.h.b16 %v657
    %v4933 = vunpack.c.l.b16 %v661
    %v4934 = vunpack.c.h.b16 %v661
    %v4935 = vunpack.c.l.b16 %v665
    %v4936 = vunpack.c.h.b16 %v665
    %v4937 = vunpack.c.l.b16 %v669
    %v4938 = vunpack.c.h.b16 %v669
    %v4939 = vunpack.c.l.b16 %v673
    %v4940 = vunpack.c.h.b16 %v673
    %v4941 = vunpack.c.l.b16 %v677
    %v4942 = vunpack.c.h.b16 %v677
    %v4943 = vunpack.c.l.b16 %v681
    %v4944 = vunpack.c.h.b16 %v681
    %v4945 = vunpack.c.l.b16 %v685
    %v4946 = vunpack.c.h.b16 %v685
    %v4947 = vunpack.c.l.b16 %v689
    %v4948 = vunpack.c.h.b16 %v689
    %v4949 = vunpack.c.l.b16 %v693
    %v4950 = vunpack.c.h.b16 %v693
    %v4951 = vunpack.c.l.b16 %v697
    %v4952 = vunpack.c.h.b16 %v697
    %v4953 = vunpack.c.l.b16 %v701
    %v4954 = vunpack.c.h.b16 %v701
    %v4955 = vunpack.c.l.b16 %v705
    %v4956 = vunpack.c.h.b16 %v705
    %v4957 = vunpack.c.l.b16 %v709
    %v4958 = vunpack.c.h.b16 %v709
    %v4959 = vunpack.c.l.b16 %v713
    %v4960 = vunpack.c.h.b16 %v713
    %v4961 = vunpack.c.l.b16 %v717
    %v4962 = vunpack.c.h.b16 %v717
    %v4963 = vunpack.c.l.b16 %v721
    %v4964 = vunpack.c.h.b16 %v721
    %v4965 = vunpack.c.l.b16 %v725
    %v4966 = vunpack.c.h.b16 %v725
    %v4967 = vunpack.c.l.b16 %v729
    %v4968 = vunpack.c.h.b16 %v729
    %v4969 = vunpack.c.l.b16 %v733
    %v4970 = vunpack.c.h.b16 %v733
    %v4971 = vpack.c.b16 %v4909, %v4907
    %v4972 = vpack.c.b16 %v4910, %v4908
    %v4973 = vpack.c.b16 %v4913, %v4911
    %v4974 = vpack.c.b16 %v4914, %v4912
    %v4975 = vpack.c.b16 %v4917, %v4915
    %v4976 = vpack.c.b16 %v4918, %v4916
    %v4977 = vpack.c.b16 %v4921, %v4919
    %v4978 = vpack.c.b16 %v4922, %v4920
    %v4979 = vpack.c.b16 %v4925, %v4923
    %v4980 = vpack.c.b16 %v4926, %v4924
    %v4981 = vpack.c.b16 %v4929, %v4927
    %v4982 = vpack.c.b16 %v4930, %v4928
    %v4983 = vpack.c.b16 %v4933, %v4931
    %v4984 = vpack.c.b16 %v4934, %v4932
    %v4985 = vpack.c.b16 %v4937, %v4935
    %v4986 = vpack.c.b16 %v4938, %v4936
    %v4987 = vpack.c.b16 %v4941, %v4939
    %v4988 = vpack.c.b16 %v4942, %v4940
    %v4989 = vpack.c.b16 %v4945, %v4943
    %v4990 = vpack.c.b16 %v4946, %v4944
    %v4991 = vpack.c.b16 %v4949, %v4947
    %v4992 = vpack.c.b16 %v4950, %v4948
    %v4993 = vpack.c.b16 %v4953, %v4951
    %v4994 = vpack.c.b16 %v4954, %v4952
    %v4995 = vpack.c.b16 %v4957, %v4955
    %v4996 = vpack.c.b16 %v4958, %v4956
    %v4997 = vpack.c.b16 %v4961, %v4959
    %v4998 = vpack.c.b16 %v4962, %v4960
    %v4999 = vpack.c.b16 %v4965, %v4963
    %v5000 = vpack.c.b16 %v4966, %v4964
    %v5001 = vpack.c.b16 %v4969, %v4967
    %v5002 = vpack.c.b16 %v4970, %v4968
    %5035 = vmatprep.subr.bf16.mxu0 %v4972
    %5036 = vmatpush1.bf16.msra.mxu0 %v4971
    %5037 = vmatprep.subr.bf16.mxu0 %v4974
    %5038 = vmatpush1.bf16.msra.mxu0 %v4973
    %5039 = vmatprep.subr.bf16.mxu0 %v4976
    %5040 = vmatpush1.bf16.msra.mxu0 %v4975
    %5041 = vmatprep.subr.bf16.mxu0 %v4978
    %5042 = vmatpush1.bf16.msra.mxu0 %v4977
    %5043 = vmatprep.subr.bf16.mxu0 %v4980
    %5044 = vmatpush1.bf16.msra.mxu0 %v4979
    %5045 = vmatprep.subr.bf16.mxu0 %v4982
    %5046 = vmatpush1.bf16.msra.mxu0 %v4981
    %5047 = vmatprep.subr.bf16.mxu0 %v4984
    %5048 = vmatpush1.bf16.msra.mxu0 %v4983
    %5049 = vmatprep.subr.bf16.mxu0 %v4986
    %5050 = vmatpush1.bf16.msra.mxu0 %v4985
    %5051 = vmatprep.subr.bf16.mxu0 %v4988
    %5052 = vmatpush1.bf16.msra.mxu0 %v4987
    %5053 = vmatprep.subr.bf16.mxu0 %v4990
    %5054 = vmatpush1.bf16.msra.mxu0 %v4989
    %5055 = vmatprep.subr.bf16.mxu0 %v4992
    %5056 = vmatpush1.bf16.msra.mxu0 %v4991
    %5057 = vmatprep.subr.bf16.mxu0 %v4994
    %5058 = vmatpush1.bf16.msra.mxu0 %v4993
    %5059 = vmatprep.subr.bf16.mxu0 %v4996
    %5060 = vmatpush1.bf16.msra.mxu0 %v4995
    %5061 = vmatprep.subr.bf16.mxu0 %v4998
    %5062 = vmatpush1.bf16.msra.mxu0 %v4997
    %5063 = vmatprep.subr.bf16.mxu0 %v5000
    %5064 = vmatpush1.bf16.msra.mxu0 %v4999
    %5065 = vmatprep.subr.bf16.mxu0 %v5002
    %5066 = vmatpush1.bf16.msra.mxu0 %v5001
    %5067 = vmatprep.mubr.bf16.mxu0 %v4866
    %5068 = vmatmul.mubr.bf16.gmra.mrb[0].mxu0 %v4865
    %v5069 = vpop.f32.mrb[0].mxu0
    %v5070 = vadd.f32 %v4870, %v5069
    %v5071 = vpop.f32.mrb[0].mxu0
    %v5072 = vadd.f32 %v4874, %v5071
    %v5073 = vpop.f32.mrb[0].mxu0
    %v5074 = vpop.f32.mrb[0].mxu0
    %5075 = vdwg.mxu0
    %v5076 = vxor.u32 %v5070, 2147483648
    %v5077 = vxor.u32 %v5072, 2147483648
    %v5078 = vmul.f32 %v5076, 1.442695
    %v5079 = vpow.pop %v5078
    %v5080 = vmul.f32 %v5077, 1.442695
    %v5081 = vpow.pop %v5080
    %v5082 = vadd.f32 %v5079, 1.0
    %v5083 = vadd.f32 %v5081, 1.0
    %v5084 = vrcp.pop %v5082
    %v5085 = vmul.f32 1.0, %v5084
    %v5086 = vrcp.pop %v5083
    %v5087 = vmul.f32 1.0, %v5086
    %v5088 = vmul.f32 %v5070, %v5085
    %v5089 = vmul.f32 %v5072, %v5087
    %v5090 = vadd.f32 %v5088, %v5089
    %5091 = vadd.xlane.f32.xlu0 %v5090
    %v5092 = vpop.xlane.xlu0 %5091
    %v5093 = vmul.f32 %v5092, %v4829
    %v5094 = vsub.f32 %v5088, %v5093
    %v5095 = vsub.f32 %v5089, %v5093
    %v5096 = vmul.f32 %v5094, %v5094
    %v5097 = vmul.f32 %v5095, %v5095
    %v5098 = vadd.f32 %v5096, %v5097
    %5099 = vadd.xlane.f32.xlu0 %v5098
    %v5100 = vpop.xlane.xlu0 %5099
    %v5101 = vmul.f32 %v5100, %v4829
    %v5102 = vadd.f32 %v5101, 1e-05
    %v5103 = vrsqrt.pop %v5102
    %v5104 = vmul.f32 %v5094, %v5103
    %v5105 = vmul.f32 %v5095, %v5103
    %v5106 = vlaneseq
    %v5107 = vshrl.u32 %v5106, 7
    %v5108 = vsub.s32 1, %v5107
    %v5109 = vrot.slane %v801, %v5108
    %v5110 = vlaneseq
    %v5111 = vshrl.u32 %v5110, 7
    %v5112 = vsub.s32 1, %v5111
    %v5113 = vrot.slane %v802, %v5112
    %v5114 = vmul.f32 %v5104, %v5109
    %v5115 = vmul.f32 %v5105, %v5113
    %v5116 = vlaneseq
    %v5117 = vshrl.u32 %v5116, 7
    %v5118 = vsub.s32 2, %v5117
    %v5119 = vrot.slane %v801, %v5118
    %v5120 = vlaneseq
    %v5121 = vshrl.u32 %v5120, 7
    %v5122 = vsub.s32 2, %v5121
    %v5123 = vrot.slane %v802, %v5122
    %v5124 = vadd.f32 %v5114, %v5119
    %v5125 = vadd.f32 %v5115, %v5123
    %v5126 = vadd.f32 %v5124, %v4482
    %v5127 = vadd.f32 %v5125, %v4484
    %v5128 = vpack.c.bf16 %v5126, %v5126
    %v5129 = vpack.c.bf16 %v5127, %v5127
    %v5130 = vpack.c.bf16 %v4861, %v4861
    %v5131 = vpack.c.bf16 %v4862, %v4862
    %v5164 = vunpack.c.l.b16 %v611
    %v5165 = vunpack.c.h.b16 %v611
    %v5166 = vunpack.c.l.b16 %v615
    %v5167 = vunpack.c.h.b16 %v615
    %v5168 = vunpack.c.l.b16 %v619
    %v5169 = vunpack.c.h.b16 %v619
    %v5170 = vunpack.c.l.b16 %v623
    %v5171 = vunpack.c.h.b16 %v623
    %v5172 = vunpack.c.l.b16 %v627
    %v5173 = vunpack.c.h.b16 %v627
    %v5174 = vunpack.c.l.b16 %v631
    %v5175 = vunpack.c.h.b16 %v631
    %v5176 = vunpack.c.l.b16 %v635
    %v5177 = vunpack.c.h.b16 %v635
    %v5178 = vunpack.c.l.b16 %v639
    %v5179 = vunpack.c.h.b16 %v639
    %v5180 = vunpack.c.l.b16 %v643
    %v5181 = vunpack.c.h.b16 %v643
    %v5182 = vunpack.c.l.b16 %v647
    %v5183 = vunpack.c.h.b16 %v647
    %v5184 = vunpack.c.l.b16 %v651
    %v5185 = vunpack.c.h.b16 %v651
    %v5186 = vunpack.c.l.b16 %v655
    %v5187 = vunpack.c.h.b16 %v655
    %v5188 = vunpack.c.l.b16 %v659
    %v5189 = vunpack.c.h.b16 %v659
    %v5190 = vunpack.c.l.b16 %v663
    %v5191 = vunpack.c.h.b16 %v663
    %v5192 = vunpack.c.l.b16 %v667
    %v5193 = vunpack.c.h.b16 %v667
    %v5194 = vunpack.c.l.b16 %v671
    %v5195 = vunpack.c.h.b16 %v671
    %v5196 = vunpack.c.l.b16 %v675
    %v5197 = vunpack.c.h.b16 %v675
    %v5198 = vunpack.c.l.b16 %v679
    %v5199 = vunpack.c.h.b16 %v679
    %v5200 = vunpack.c.l.b16 %v683
    %v5201 = vunpack.c.h.b16 %v683
    %v5202 = vunpack.c.l.b16 %v687
    %v5203 = vunpack.c.h.b16 %v687
    %v5204 = vunpack.c.l.b16 %v691
    %v5205 = vunpack.c.h.b16 %v691
    %v5206 = vunpack.c.l.b16 %v695
    %v5207 = vunpack.c.h.b16 %v695
    %v5208 = vunpack.c.l.b16 %v699
    %v5209 = vunpack.c.h.b16 %v699
    %v5210 = vunpack.c.l.b16 %v703
    %v5211 = vunpack.c.h.b16 %v703
    %v5212 = vunpack.c.l.b16 %v707
    %v5213 = vunpack.c.h.b16 %v707
    %v5214 = vunpack.c.l.b16 %v711
    %v5215 = vunpack.c.h.b16 %v711
    %v5216 = vunpack.c.l.b16 %v715
    %v5217 = vunpack.c.h.b16 %v715
    %v5218 = vunpack.c.l.b16 %v719
    %v5219 = vunpack.c.h.b16 %v719
    %v5220 = vunpack.c.l.b16 %v723
    %v5221 = vunpack.c.h.b16 %v723
    %v5222 = vunpack.c.l.b16 %v727
    %v5223 = vunpack.c.h.b16 %v727
    %v5224 = vunpack.c.l.b16 %v731
    %v5225 = vunpack.c.h.b16 %v731
    %v5226 = vunpack.c.l.b16 %v735
    %v5227 = vunpack.c.h.b16 %v735
    %v5228 = vpack.c.b16 %v5166, %v5164
    %v5229 = vpack.c.b16 %v5167, %v5165
    %v5230 = vpack.c.b16 %v5170, %v5168
    %v5231 = vpack.c.b16 %v5171, %v5169
    %v5232 = vpack.c.b16 %v5174, %v5172
    %v5233 = vpack.c.b16 %v5175, %v5173
    %v5234 = vpack.c.b16 %v5178, %v5176
    %v5235 = vpack.c.b16 %v5179, %v5177
    %v5236 = vpack.c.b16 %v5182, %v5180
    %v5237 = vpack.c.b16 %v5183, %v5181
    %v5238 = vpack.c.b16 %v5186, %v5184
    %v5239 = vpack.c.b16 %v5187, %v5185
    %v5240 = vpack.c.b16 %v5190, %v5188
    %v5241 = vpack.c.b16 %v5191, %v5189
    %v5242 = vpack.c.b16 %v5194, %v5192
    %v5243 = vpack.c.b16 %v5195, %v5193
    %v5244 = vpack.c.b16 %v5198, %v5196
    %v5245 = vpack.c.b16 %v5199, %v5197
    %v5246 = vpack.c.b16 %v5202, %v5200
    %v5247 = vpack.c.b16 %v5203, %v5201
    %v5248 = vpack.c.b16 %v5206, %v5204
    %v5249 = vpack.c.b16 %v5207, %v5205
    %v5250 = vpack.c.b16 %v5210, %v5208
    %v5251 = vpack.c.b16 %v5211, %v5209
    %v5252 = vpack.c.b16 %v5214, %v5212
    %v5253 = vpack.c.b16 %v5215, %v5213
    %v5254 = vpack.c.b16 %v5218, %v5216
    %v5255 = vpack.c.b16 %v5219, %v5217
    %v5256 = vpack.c.b16 %v5222, %v5220
    %v5257 = vpack.c.b16 %v5223, %v5221
    %v5258 = vpack.c.b16 %v5226, %v5224
    %v5259 = vpack.c.b16 %v5227, %v5225
    %5292 = vmatprep.subr.bf16.mxu0 %v5229
    %5293 = vmatpush1.bf16.msra.mxu0 %v5228
    %5294 = vmatprep.subr.bf16.mxu0 %v5231
    %5295 = vmatpush1.bf16.msra.mxu0 %v5230
    %5296 = vmatprep.subr.bf16.mxu0 %v5233
    %5297 = vmatpush1.bf16.msra.mxu0 %v5232
    %5298 = vmatprep.subr.bf16.mxu0 %v5235
    %5299 = vmatpush1.bf16.msra.mxu0 %v5234
    %5300 = vmatprep.subr.bf16.mxu0 %v5237
    %5301 = vmatpush1.bf16.msra.mxu0 %v5236
    %5302 = vmatprep.subr.bf16.mxu0 %v5239
    %5303 = vmatpush1.bf16.msra.mxu0 %v5238
    %5304 = vmatprep.subr.bf16.mxu0 %v5241
    %5305 = vmatpush1.bf16.msra.mxu0 %v5240
    %5306 = vmatprep.subr.bf16.mxu0 %v5243
    %5307 = vmatpush1.bf16.msra.mxu0 %v5242
    %5308 = vmatprep.subr.bf16.mxu0 %v5245
    %5309 = vmatpush1.bf16.msra.mxu0 %v5244
    %5310 = vmatprep.subr.bf16.mxu0 %v5247
    %5311 = vmatpush1.bf16.msra.mxu0 %v5246
    %5312 = vmatprep.subr.bf16.mxu0 %v5249
    %5313 = vmatpush1.bf16.msra.mxu0 %v5248
    %5314 = vmatprep.subr.bf16.mxu0 %v5251
    %5315 = vmatpush1.bf16.msra.mxu0 %v5250
    %5316 = vmatprep.subr.bf16.mxu0 %v5253
    %5317 = vmatpush1.bf16.msra.mxu0 %v5252
    %5318 = vmatprep.subr.bf16.mxu0 %v5255
    %5319 = vmatpush1.bf16.msra.mxu0 %v5254
    %5320 = vmatprep.subr.bf16.mxu0 %v5257
    %5321 = vmatpush1.bf16.msra.mxu0 %v5256
    %5322 = vmatprep.subr.bf16.mxu0 %v5259
    %5323 = vmatpush1.bf16.msra.mxu0 %v5258
    %5324 = vmatprep.mubr.bf16.mxu0 %v5131
    %5325 = vmatmul.mubr.bf16.gmra.mrb[0].mxu0 %v5130
    %v5326 = vpop.f32.mrb[0].mxu0
    %v5327 = vadd.f32 0.0, %v5326
    %v5328 = vpop.f32.mrb[0].mxu0
    %v5329 = vadd.f32 0.0, %v5328
    %v5330 = vpop.f32.mrb[0].mxu0
    %v5331 = vpop.f32.mrb[0].mxu0
    %5332 = vdwg.mxu0
    %v5365 = vunpack.c.l.b16 %v610
    %v5366 = vunpack.c.h.b16 %v610
    %v5367 = vunpack.c.l.b16 %v614
    %v5368 = vunpack.c.h.b16 %v614
    %v5369 = vunpack.c.l.b16 %v618
    %v5370 = vunpack.c.h.b16 %v618
    %v5371 = vunpack.c.l.b16 %v622
    %v5372 = vunpack.c.h.b16 %v622
    %v5373 = vunpack.c.l.b16 %v626
    %v5374 = vunpack.c.h.b16 %v626
    %v5375 = vunpack.c.l.b16 %v630
    %v5376 = vunpack.c.h.b16 %v630
    %v5377 = vunpack.c.l.b16 %v634
    %v5378 = vunpack.c.h.b16 %v634
    %v5379 = vunpack.c.l.b16 %v638
    %v5380 = vunpack.c.h.b16 %v638
    %v5381 = vunpack.c.l.b16 %v642
    %v5382 = vunpack.c.h.b16 %v642
    %v5383 = vunpack.c.l.b16 %v646
    %v5384 = vunpack.c.h.b16 %v646
    %v5385 = vunpack.c.l.b16 %v650
    %v5386 = vunpack.c.h.b16 %v650
    %v5387 = vunpack.c.l.b16 %v654
    %v5388 = vunpack.c.h.b16 %v654
    %v5389 = vunpack.c.l.b16 %v658
    %v5390 = vunpack.c.h.b16 %v658
    %v5391 = vunpack.c.l.b16 %v662
    %v5392 = vunpack.c.h.b16 %v662
    %v5393 = vunpack.c.l.b16 %v666
    %v5394 = vunpack.c.h.b16 %v666
    %v5395 = vunpack.c.l.b16 %v670
    %v5396 = vunpack.c.h.b16 %v670
    %v5397 = vunpack.c.l.b16 %v674
    %v5398 = vunpack.c.h.b16 %v674
    %v5399 = vunpack.c.l.b16 %v678
    %v5400 = vunpack.c.h.b16 %v678
    %v5401 = vunpack.c.l.b16 %v682
    %v5402 = vunpack.c.h.b16 %v682
    %v5403 = vunpack.c.l.b16 %v686
    %v5404 = vunpack.c.h.b16 %v686
    %v5405 = vunpack.c.l.b16 %v690
    %v5406 = vunpack.c.h.b16 %v690
    %v5407 = vunpack.c.l.b16 %v694
    %v5408 = vunpack.c.h.b16 %v694
    %v5409 = vunpack.c.l.b16 %v698
    %v5410 = vunpack.c.h.b16 %v698
    %v5411 = vunpack.c.l.b16 %v702
    %v5412 = vunpack.c.h.b16 %v702
    %v5413 = vunpack.c.l.b16 %v706
    %v5414 = vunpack.c.h.b16 %v706
    %v5415 = vunpack.c.l.b16 %v710
    %v5416 = vunpack.c.h.b16 %v710
    %v5417 = vunpack.c.l.b16 %v714
    %v5418 = vunpack.c.h.b16 %v714
    %v5419 = vunpack.c.l.b16 %v718
    %v5420 = vunpack.c.h.b16 %v718
    %v5421 = vunpack.c.l.b16 %v722
    %v5422 = vunpack.c.h.b16 %v722
    %v5423 = vunpack.c.l.b16 %v726
    %v5424 = vunpack.c.h.b16 %v726
    %v5425 = vunpack.c.l.b16 %v730
    %v5426 = vunpack.c.h.b16 %v730
    %v5427 = vunpack.c.l.b16 %v734
    %v5428 = vunpack.c.h.b16 %v734
    %v5429 = vpack.c.b16 %v5367, %v5365
    %v5430 = vpack.c.b16 %v5368, %v5366
    %v5431 = vpack.c.b16 %v5371, %v5369
    %v5432 = vpack.c.b16 %v5372, %v5370
    %v5433 = vpack.c.b16 %v5375, %v5373
    %v5434 = vpack.c.b16 %v5376, %v5374
    %v5435 = vpack.c.b16 %v5379, %v5377
    %v5436 = vpack.c.b16 %v5380, %v5378
    %v5437 = vpack.c.b16 %v5383, %v5381
    %v5438 = vpack.c.b16 %v5384, %v5382
    %v5439 = vpack.c.b16 %v5387, %v5385
    %v5440 = vpack.c.b16 %v5388, %v5386
    %v5441 = vpack.c.b16 %v5391, %v5389
    %v5442 = vpack.c.b16 %v5392, %v5390
    %v5443 = vpack.c.b16 %v5395, %v5393
    %v5444 = vpack.c.b16 %v5396, %v5394
    %v5445 = vpack.c.b16 %v5399, %v5397
    %v5446 = vpack.c.b16 %v5400, %v5398
    %v5447 = vpack.c.b16 %v5403, %v5401
    %v5448 = vpack.c.b16 %v5404, %v5402
    %v5449 = vpack.c.b16 %v5407, %v5405
    %v5450 = vpack.c.b16 %v5408, %v5406
    %v5451 = vpack.c.b16 %v5411, %v5409
    %v5452 = vpack.c.b16 %v5412, %v5410
    %v5453 = vpack.c.b16 %v5415, %v5413
    %v5454 = vpack.c.b16 %v5416, %v5414
    %v5455 = vpack.c.b16 %v5419, %v5417
    %v5456 = vpack.c.b16 %v5420, %v5418
    %v5457 = vpack.c.b16 %v5423, %v5421
    %v5458 = vpack.c.b16 %v5424, %v5422
    %v5459 = vpack.c.b16 %v5427, %v5425
    %v5460 = vpack.c.b16 %v5428, %v5426
    %5493 = vmatprep.subr.bf16.mxu0 %v5430
    %5494 = vmatpush1.bf16.msra.mxu0 %v5429
    %5495 = vmatprep.subr.bf16.mxu0 %v5432
    %5496 = vmatpush1.bf16.msra.mxu0 %v5431
    %5497 = vmatprep.subr.bf16.mxu0 %v5434
    %5498 = vmatpush1.bf16.msra.mxu0 %v5433
    %5499 = vmatprep.subr.bf16.mxu0 %v5436
    %5500 = vmatpush1.bf16.msra.mxu0 %v5435
    %5501 = vmatprep.subr.bf16.mxu0 %v5438
    %5502 = vmatpush1.bf16.msra.mxu0 %v5437
    %5503 = vmatprep.subr.bf16.mxu0 %v5440
    %5504 = vmatpush1.bf16.msra.mxu0 %v5439
    %5505 = vmatprep.subr.bf16.mxu0 %v5442
    %5506 = vmatpush1.bf16.msra.mxu0 %v5441
    %5507 = vmatprep.subr.bf16.mxu0 %v5444
    %5508 = vmatpush1.bf16.msra.mxu0 %v5443
    %5509 = vmatprep.subr.bf16.mxu0 %v5446
    %5510 = vmatpush1.bf16.msra.mxu0 %v5445
    %5511 = vmatprep.subr.bf16.mxu0 %v5448
    %5512 = vmatpush1.bf16.msra.mxu0 %v5447
    %5513 = vmatprep.subr.bf16.mxu0 %v5450
    %5514 = vmatpush1.bf16.msra.mxu0 %v5449
    %5515 = vmatprep.subr.bf16.mxu0 %v5452
    %5516 = vmatpush1.bf16.msra.mxu0 %v5451
    %5517 = vmatprep.subr.bf16.mxu0 %v5454
    %5518 = vmatpush1.bf16.msra.mxu0 %v5453
    %5519 = vmatprep.subr.bf16.mxu0 %v5456
    %5520 = vmatpush1.bf16.msra.mxu0 %v5455
    %5521 = vmatprep.subr.bf16.mxu0 %v5458
    %5522 = vmatpush1.bf16.msra.mxu0 %v5457
    %5523 = vmatprep.subr.bf16.mxu0 %v5460
    %5524 = vmatpush1.bf16.msra.mxu0 %v5459
    %5525 = vmatprep.mubr.bf16.mxu0 %v5129
    %5526 = vmatmul.mubr.bf16.gmra.mrb[0].mxu0 %v5128
    %v5527 = vpop.f32.mrb[0].mxu0
    %v5528 = vadd.f32 %v5327, %v5527
    %v5529 = vpop.f32.mrb[0].mxu0
    %v5530 = vadd.f32 %v5329, %v5529
    %v5531 = vpop.f32.mrb[0].mxu0
    %v5532 = vpop.f32.mrb[0].mxu0
    %5533 = vdwg.mxu0
    %v5534 = vlaneseq
    %v5535 = vshrl.u32 %v5534, 7
    %v5536 = vsub.s32 3, %v5535
    %v5537 = vrot.slane %v801, %v5536
    %v5538 = vlaneseq
    %v5539 = vshrl.u32 %v5538, 7
    %v5540 = vsub.s32 3, %v5539
    %v5541 = vrot.slane %v802, %v5540
    %v5542 = vadd.f32 %v5528, %v5537
    %v5543 = vadd.f32 %v5530, %v5541
    %v5544 = vxor.u32 %v5542, 2147483648
    %v5545 = vxor.u32 %v5543, 2147483648
    %v5546 = vmul.f32 %v5544, 1.442695
    %v5547 = vpow.pop %v5546
    %v5548 = vmul.f32 %v5545, 1.442695
    %v5549 = vpow.pop %v5548
    %v5550 = vadd.f32 %v5547, 1.0
    %v5551 = vadd.f32 %v5549, 1.0
    %v5552 = vrcp.pop %v5550
    %v5553 = vmul.f32 1.0, %v5552
    %v5554 = vrcp.pop %v5551
    %v5555 = vmul.f32 1.0, %v5554
    %v5556 = vmul.f32 %v5542, %v5553
    %v5557 = vmul.f32 %v5543, %v5555
    %v5558 = vadd.f32 %v5556, %v5557
    %5559 = vadd.xlane.f32.xlu0 %v5558
    %v5560 = vpop.xlane.xlu0 %5559
    %v5561 = vmul.f32 %v5560, %v4829
    %v5562 = vsub.f32 %v5556, %v5561
    %v5563 = vsub.f32 %v5557, %v5561
    %v5564 = vmul.f32 %v5562, %v5562
    %v5565 = vmul.f32 %v5563, %v5563
    %v5566 = vadd.f32 %v5564, %v5565
    %5567 = vadd.xlane.f32.xlu0 %v5566
    %v5568 = vpop.xlane.xlu0 %5567
    %v5569 = vmul.f32 %v5568, %v4829
    %v5570 = vadd.f32 %v5569, 1e-05
    %v5571 = vrsqrt.pop %v5570
    %v5572 = vmul.f32 %v5562, %v5571
    %v5573 = vmul.f32 %v5563, %v5571
    %v5574 = vlaneseq
    %v5575 = vshrl.u32 %v5574, 7
    %v5576 = vsub.s32 4, %v5575
    %v5577 = vrot.slane %v801, %v5576
    %v5578 = vlaneseq
    %v5579 = vshrl.u32 %v5578, 7
    %v5580 = vsub.s32 4, %v5579
    %v5581 = vrot.slane %v802, %v5580
    %v5582 = vmul.f32 %v5572, %v5577
    %v5583 = vmul.f32 %v5573, %v5581
    %v5584 = vlaneseq
    %v5585 = vshrl.u32 %v5584, 7
    %v5586 = vsub.s32 5, %v5585
    %v5587 = vrot.slane %v801, %v5586
    %v5588 = vlaneseq
    %v5589 = vshrl.u32 %v5588, 7
    %v5590 = vsub.s32 5, %v5589
    %v5591 = vrot.slane %v802, %v5590
    %v5592 = vadd.f32 %v5582, %v5587
    %v5593 = vadd.f32 %v5583, %v5591
    %v5594 = vpack.c.bf16 %v5592, %v5592
    %v5595 = vpack.c.bf16 %v5593, %v5593
    %v5596 = vlaneseq
    %v5597 = vshrl.u32 %v5596, 7
    %v5598 = vsub.s32 6, %v5597
    %v5599 = vrot.slane %v801, %v5598
    %v5632 = vunpack.c.l.b16 %v612
    %v5633 = vunpack.c.l.b16 %v616
    %v5634 = vunpack.c.l.b16 %v620
    %v5635 = vunpack.c.l.b16 %v624
    %v5636 = vunpack.c.l.b16 %v628
    %v5637 = vunpack.c.l.b16 %v632
    %v5638 = vunpack.c.l.b16 %v636
    %v5639 = vunpack.c.l.b16 %v640
    %v5640 = vunpack.c.l.b16 %v644
    %v5641 = vunpack.c.l.b16 %v648
    %v5642 = vunpack.c.l.b16 %v652
    %v5643 = vunpack.c.l.b16 %v656
    %v5644 = vunpack.c.l.b16 %v660
    %v5645 = vunpack.c.l.b16 %v664
    %v5646 = vunpack.c.l.b16 %v668
    %v5647 = vunpack.c.l.b16 %v672
    %v5648 = vunpack.c.l.b16 %v676
    %v5649 = vunpack.c.l.b16 %v680
    %v5650 = vunpack.c.l.b16 %v684
    %v5651 = vunpack.c.l.b16 %v688
    %v5652 = vunpack.c.l.b16 %v692
    %v5653 = vunpack.c.l.b16 %v696
    %v5654 = vunpack.c.l.b16 %v700
    %v5655 = vunpack.c.l.b16 %v704
    %v5656 = vunpack.c.l.b16 %v708
    %v5657 = vunpack.c.l.b16 %v712
    %v5658 = vunpack.c.l.b16 %v716
    %v5659 = vunpack.c.l.b16 %v720
    %v5660 = vunpack.c.l.b16 %v724
    %v5661 = vunpack.c.l.b16 %v728
    %v5662 = vunpack.c.l.b16 %v732
    %v5663 = vunpack.c.l.b16 %v736
    %v5664 = vpack.c.b16 %v5633, %v5632
    %v5665 = vpack.c.b16 %v5635, %v5634
    %v5666 = vpack.c.b16 %v5637, %v5636
    %v5667 = vpack.c.b16 %v5639, %v5638
    %v5668 = vpack.c.b16 %v5641, %v5640
    %v5669 = vpack.c.b16 %v5643, %v5642
    %v5670 = vpack.c.b16 %v5645, %v5644
    %v5671 = vpack.c.b16 %v5647, %v5646
    %v5672 = vpack.c.b16 %v5649, %v5648
    %v5673 = vpack.c.b16 %v5651, %v5650
    %v5674 = vpack.c.b16 %v5653, %v5652
    %v5675 = vpack.c.b16 %v5655, %v5654
    %v5676 = vpack.c.b16 %v5657, %v5656
    %v5677 = vpack.c.b16 %v5659, %v5658
    %v5678 = vpack.c.b16 %v5661, %v5660
    %v5679 = vpack.c.b16 %v5663, %v5662
    %5696 = vmatprep.subr.bf16.mxu0 0
    %5697 = vmatpush1.bf16.msra.mxu0 %v5664
    %5698 = vmatprep.subr.bf16.mxu0 0
    %5699 = vmatpush1.bf16.msra.mxu0 %v5665
    %5700 = vmatprep.subr.bf16.mxu0 0
    %5701 = vmatpush1.bf16.msra.mxu0 %v5666
    %5702 = vmatprep.subr.bf16.mxu0 0
    %5703 = vmatpush1.bf16.msra.mxu0 %v5667
    %5704 = vmatprep.subr.bf16.mxu0 0
    %5705 = vmatpush1.bf16.msra.mxu0 %v5668
    %5706 = vmatprep.subr.bf16.mxu0 0
    %5707 = vmatpush1.bf16.msra.mxu0 %v5669
    %5708 = vmatprep.subr.bf16.mxu0 0
    %5709 = vmatpush1.bf16.msra.mxu0 %v5670
    %5710 = vmatprep.subr.bf16.mxu0 0
    %5711 = vmatpush1.bf16.msra.mxu0 %v5671
    %5712 = vmatprep.subr.bf16.mxu0 0
    %5713 = vmatpush1.bf16.msra.mxu0 %v5672
    %5714 = vmatprep.subr.bf16.mxu0 0
    %5715 = vmatpush1.bf16.msra.mxu0 %v5673
    %5716 = vmatprep.subr.bf16.mxu0 0
    %5717 = vmatpush1.bf16.msra.mxu0 %v5674
    %5718 = vmatprep.subr.bf16.mxu0 0
    %5719 = vmatpush1.bf16.msra.mxu0 %v5675
    %5720 = vmatprep.subr.bf16.mxu0 0
    %5721 = vmatpush1.bf16.msra.mxu0 %v5676
    %5722 = vmatprep.subr.bf16.mxu0 0
    %5723 = vmatpush1.bf16.msra.mxu0 %v5677
    %5724 = vmatprep.subr.bf16.mxu0 0
    %5725 = vmatpush1.bf16.msra.mxu0 %v5678
    %5726 = vmatprep.subr.bf16.mxu0 0
    %5727 = vmatpush1.bf16.msra.mxu0 %v5679
    %5728 = vmatprep.mubr.bf16.mxu0 %v5595
    %5729 = vmatmul.mubr.bf16.gmra.mrb[0].mxu0 %v5594
    %v5730 = vpop.f32.mrb[0].mxu0
    %v5731 = vadd.f32 %v5599, %v5730
    %v5732 = vpop.f32.mrb[0].mxu0
    %v5733 = vpop.f32.mrb[0].mxu0
    %v5734 = vpop.f32.mrb[0].mxu0
    %5735 = vdwg.mxu0
    %v5736 = vadd.f32 %v5731, %v4564
    %v5737 = vpack.c.bf16 %v5736, %v5736
    %v5738 = vpack.c.bf16 %v4680, %v4680
    %v5755 = vunpack.c.h.b16 %v738
    %v5756 = vunpack.c.h.b16 %v742
    %v5757 = vunpack.c.h.b16 %v746
    %v5758 = vunpack.c.h.b16 %v750
    %v5759 = vunpack.c.h.b16 %v754
    %v5760 = vunpack.c.h.b16 %v758
    %v5761 = vunpack.c.h.b16 %v762
    %v5762 = vunpack.c.h.b16 %v766
    %v5763 = vunpack.c.h.b16 %v770
    %v5764 = vunpack.c.h.b16 %v773
    %v5765 = vunpack.c.h.b16 %v776
    %v5766 = vunpack.c.h.b16 %v779
    %v5767 = vunpack.c.h.b16 %v782
    %v5768 = vunpack.c.h.b16 %v785
    %v5769 = vunpack.c.h.b16 %v788
    %v5770 = vunpack.c.h.b16 %v791
    %v5771 = vpack.c.b16 %v5756, %v5755
    %v5772 = vpack.c.b16 %v5758, %v5757
    %v5773 = vpack.c.b16 %v5760, %v5759
    %v5774 = vpack.c.b16 %v5762, %v5761
    %v5775 = vpack.c.b16 %v5764, %v5763
    %v5776 = vpack.c.b16 %v5766, %v5765
    %v5777 = vpack.c.b16 %v5768, %v5767
    %v5778 = vpack.c.b16 %v5770, %v5769
    %5787 = vmatprep.subr.bf16.mxu0 0
    %5788 = vmatpush1.bf16.msra.mxu0 %v5771
    %5789 = vmatprep.subr.bf16.mxu0 0
    %5790 = vmatpush1.bf16.msra.mxu0 %v5772
    %5791 = vmatprep.subr.bf16.mxu0 0
    %5792 = vmatpush1.bf16.msra.mxu0 %v5773
    %5793 = vmatprep.subr.bf16.mxu0 0
    %5794 = vmatpush1.bf16.msra.mxu0 %v5774
    %5795 = vmatprep.subr.bf16.mxu0 0
    %5796 = vmatpush1.bf16.msra.mxu0 %v5775
    %5797 = vmatprep.subr.bf16.mxu0 0
    %5798 = vmatpush1.bf16.msra.mxu0 %v5776
    %5799 = vmatprep.subr.bf16.mxu0 0
    %5800 = vmatpush1.bf16.msra.mxu0 %v5777
    %5801 = vmatprep.subr.bf16.mxu0 0
    %5802 = vmatpush1.bf16.msra.mxu0 %v5778
    %5803 = vmatprep.subr.bf16.mxu0 0
    %5804 = vmatpush1.bf16.msra.mxu0 0
    %5805 = vmatprep.subr.bf16.mxu0 0
    %5806 = vmatpush1.bf16.msra.mxu0 0
    %5807 = vmatprep.subr.bf16.mxu0 0
    %5808 = vmatpush1.bf16.msra.mxu0 0
    %5809 = vmatprep.subr.bf16.mxu0 0
    %5810 = vmatpush1.bf16.msra.mxu0 0
    %5811 = vmatprep.subr.bf16.mxu0 0
    %5812 = vmatpush1.bf16.msra.mxu0 0
    %5813 = vmatprep.subr.bf16.mxu0 0
    %5814 = vmatpush1.bf16.msra.mxu0 0
    %5815 = vmatprep.subr.bf16.mxu0 0
    %5816 = vmatpush1.bf16.msra.mxu0 0
    %5817 = vmatprep.subr.bf16.mxu0 0
    %5818 = vmatpush1.bf16.msra.mxu0 0
    %5819 = vmatprep.mubr.bf16.mxu0 0
    %5820 = vmatmul.mubr.bf16.gmra.mrb[0].mxu0 %v5738
    %v5821 = vpop.f32.mrb[0].mxu0
    %v5822 = vadd.f32 0.0, %v5821
    %v5823 = vpop.f32.mrb[0].mxu0
    %v5824 = vpop.f32.mrb[0].mxu0
    %v5825 = vpop.f32.mrb[0].mxu0
    %5826 = vdwg.mxu0
    %v5827 = vunpack.c.l.b16 %v738
    %v5828 = vunpack.c.l.b16 %v742
    %v5829 = vunpack.c.l.b16 %v746
    %v5830 = vunpack.c.l.b16 %v750
    %v5831 = vunpack.c.l.b16 %v754
    %v5832 = vunpack.c.l.b16 %v758
    %v5833 = vunpack.c.l.b16 %v762
    %v5834 = vunpack.c.l.b16 %v766
    %v5835 = vunpack.c.l.b16 %v770
    %v5836 = vunpack.c.l.b16 %v773
    %v5837 = vunpack.c.l.b16 %v776
    %v5838 = vunpack.c.l.b16 %v779
    %v5839 = vunpack.c.l.b16 %v782
    %v5840 = vunpack.c.l.b16 %v785
    %v5841 = vunpack.c.l.b16 %v788
    %v5842 = vunpack.c.l.b16 %v791
    %v5843 = vpack.c.b16 %v5828, %v5827
    %v5844 = vpack.c.b16 %v5830, %v5829
    %v5845 = vpack.c.b16 %v5832, %v5831
    %v5846 = vpack.c.b16 %v5834, %v5833
    %v5847 = vpack.c.b16 %v5836, %v5835
    %v5848 = vpack.c.b16 %v5838, %v5837
    %v5849 = vpack.c.b16 %v5840, %v5839
    %v5850 = vpack.c.b16 %v5842, %v5841
    %5859 = vmatprep.subr.bf16.mxu0 0
    %5860 = vmatpush1.bf16.msra.mxu0 %v5843
    %5861 = vmatprep.subr.bf16.mxu0 0
    %5862 = vmatpush1.bf16.msra.mxu0 %v5844
    %5863 = vmatprep.subr.bf16.mxu0 0
    %5864 = vmatpush1.bf16.msra.mxu0 %v5845
    %5865 = vmatprep.subr.bf16.mxu0 0
    %5866 = vmatpush1.bf16.msra.mxu0 %v5846
    %5867 = vmatprep.subr.bf16.mxu0 0
    %5868 = vmatpush1.bf16.msra.mxu0 %v5847
    %5869 = vmatprep.subr.bf16.mxu0 0
    %5870 = vmatpush1.bf16.msra.mxu0 %v5848
    %5871 = vmatprep.subr.bf16.mxu0 0
    %5872 = vmatpush1.bf16.msra.mxu0 %v5849
    %5873 = vmatprep.subr.bf16.mxu0 0
    %5874 = vmatpush1.bf16.msra.mxu0 %v5850
    %5875 = vmatprep.subr.bf16.mxu0 0
    %5876 = vmatpush1.bf16.msra.mxu0 0
    %5877 = vmatprep.subr.bf16.mxu0 0
    %5878 = vmatpush1.bf16.msra.mxu0 0
    %5879 = vmatprep.subr.bf16.mxu0 0
    %5880 = vmatpush1.bf16.msra.mxu0 0
    %5881 = vmatprep.subr.bf16.mxu0 0
    %5882 = vmatpush1.bf16.msra.mxu0 0
    %5883 = vmatprep.subr.bf16.mxu0 0
    %5884 = vmatpush1.bf16.msra.mxu0 0
    %5885 = vmatprep.subr.bf16.mxu0 0
    %5886 = vmatpush1.bf16.msra.mxu0 0
    %5887 = vmatprep.subr.bf16.mxu0 0
    %5888 = vmatpush1.bf16.msra.mxu0 0
    %5889 = vmatprep.subr.bf16.mxu0 0
    %5890 = vmatpush1.bf16.msra.mxu0 0
    %5891 = vmatprep.mubr.bf16.mxu0 0
    %5892 = vmatmul.mubr.bf16.gmra.mrb[0].mxu0 %v5737
    %v5893 = vpop.f32.mrb[0].mxu0
    %v5894 = vadd.f32 %v5822, %v5893
    %v5895 = vpop.f32.mrb[0].mxu0
    %v5896 = vpop.f32.mrb[0].mxu0
    %v5897 = vpop.f32.mrb[0].mxu0
    %5898 = vdwg.mxu0
    %v5899 = vlaneseq
    %v5900 = vshrl.u32 %v5899, 7
    %v5901 = vsub.s32 7, %v5900
    %v5902 = vrot.slane %v801, %v5901
    %v5903 = vadd.f32 %v5894, %v5902
    %v5904 = vxor.u32 %v5903, 2147483648
    %v5905 = vmul.f32 %v5904, 1.442695
    %v5906 = vpow.pop %v5905
    %v5907 = vadd.f32 %v5906, 1.0
    %v5908 = vrcp.pop %v5907
    %v5909 = vmul.f32 1.0, %v5908
    %v5910 = vmul.f32 %v5903, %v5909
    %5911 = vadd.xlane.f32.xlu0 %v5910
    %v5912 = vpop.xlane.xlu0 %5911
    %v5913 = vmul.f32 %v5912, %v4661
    %v5914 = vsub.f32 %v5910, %v5913
    %v5915 = vmul.f32 %v5914, %v5914
    %5916 = vadd.xlane.f32.xlu0 %v5915
    %v5917 = vpop.xlane.xlu0 %5916
    %v5918 = vmul.f32 %v5917, %v4661
    %v5919 = vadd.f32 %v5918, 1e-05
    %v5920 = vrsqrt.pop %v5919
    %v5921 = vmul.f32 %v5914, %v5920
    %v5922 = vlaneseq
    %v5923 = vshrl.u32 %v5922, 7
    %v5924 = vsub.s32 0, %v5923
    %v5925 = vrot.slane %v803, %v5924
    %v5926 = vmul.f32 %v5921, %v5925
    %v5927 = vlaneseq
    %v5928 = vshrl.u32 %v5927, 7
    %v5929 = vsub.s32 1, %v5928
    %v5930 = vrot.slane %v803, %v5929
    %v5931 = vadd.f32 %v5926, %v5930
    %v5932 = vadd.f32 %v5931, %v4566
    %v5933 = vpack.c.bf16 %v5932, %v5932
    %v5949 = vunpack.c.l.b16 %v739
    %v5950 = vunpack.c.l.b16 %v743
    %v5951 = vunpack.c.l.b16 %v747
    %v5952 = vunpack.c.l.b16 %v751
    %v5953 = vunpack.c.l.b16 %v755
    %v5954 = vunpack.c.l.b16 %v759
    %v5955 = vunpack.c.l.b16 %v763
    %v5956 = vunpack.c.l.b16 %v767
    %v5957 = vunpack.c.l.b16 %v771
    %v5958 = vunpack.c.l.b16 %v774
    %v5959 = vunpack.c.l.b16 %v777
    %v5960 = vunpack.c.l.b16 %v780
    %v5961 = vunpack.c.l.b16 %v783
    %v5962 = vunpack.c.l.b16 %v786
    %v5963 = vunpack.c.l.b16 %v789
    %v5964 = vunpack.c.l.b16 %v792
    %v5965 = vpack.c.b16 %v5950, %v5949
    %v5966 = vpack.c.b16 %v5952, %v5951
    %v5967 = vpack.c.b16 %v5954, %v5953
    %v5968 = vpack.c.b16 %v5956, %v5955
    %v5969 = vpack.c.b16 %v5958, %v5957
    %v5970 = vpack.c.b16 %v5960, %v5959
    %v5971 = vpack.c.b16 %v5962, %v5961
    %v5972 = vpack.c.b16 %v5964, %v5963
    %5973 = vrot.lane.b32.xlu0 %v5965, 64
    %v5974 = vpop.permute.xlu0 %5973
    %5975 = vrot.lane.b32.xlu0 %v5966, 64
    %v5976 = vpop.permute.xlu0 %5975
    %5977 = vrot.lane.b32.xlu0 %v5967, 64
    %v5978 = vpop.permute.xlu0 %5977
    %5979 = vrot.lane.b32.xlu0 %v5968, 64
    %v5980 = vpop.permute.xlu0 %5979
    %5981 = vrot.lane.b32.xlu0 %v5969, 64
    %v5982 = vpop.permute.xlu0 %5981
    %5983 = vrot.lane.b32.xlu0 %v5970, 64
    %v5984 = vpop.permute.xlu0 %5983
    %5985 = vrot.lane.b32.xlu0 %v5971, 64
    %v5986 = vpop.permute.xlu0 %5985
    %5987 = vrot.lane.b32.xlu0 %v5972, 64
    %v5988 = vpop.permute.xlu0 %5987
    %5997 = vmatprep.subr.bf16.mxu0 0
    %5998 = vmatpush1.bf16.msra.mxu0 %v5974
    %5999 = vmatprep.subr.bf16.mxu0 0
    %6000 = vmatpush1.bf16.msra.mxu0 %v5976
    %6001 = vmatprep.subr.bf16.mxu0 0
    %6002 = vmatpush1.bf16.msra.mxu0 %v5978
    %6003 = vmatprep.subr.bf16.mxu0 0
    %6004 = vmatpush1.bf16.msra.mxu0 %v5980
    %6005 = vmatprep.subr.bf16.mxu0 0
    %6006 = vmatpush1.bf16.msra.mxu0 %v5982
    %6007 = vmatprep.subr.bf16.mxu0 0
    %6008 = vmatpush1.bf16.msra.mxu0 %v5984
    %6009 = vmatprep.subr.bf16.mxu0 0
    %6010 = vmatpush1.bf16.msra.mxu0 %v5986
    %6011 = vmatprep.subr.bf16.mxu0 0
    %6012 = vmatpush1.bf16.msra.mxu0 %v5988
    %6013 = vmatprep.subr.bf16.mxu0 0
    %6014 = vmatpush1.bf16.msra.mxu0 0
    %6015 = vmatprep.subr.bf16.mxu0 0
    %6016 = vmatpush1.bf16.msra.mxu0 0
    %6017 = vmatprep.subr.bf16.mxu0 0
    %6018 = vmatpush1.bf16.msra.mxu0 0
    %6019 = vmatprep.subr.bf16.mxu0 0
    %6020 = vmatpush1.bf16.msra.mxu0 0
    %6021 = vmatprep.subr.bf16.mxu0 0
    %6022 = vmatpush1.bf16.msra.mxu0 0
    %6023 = vmatprep.subr.bf16.mxu0 0
    %6024 = vmatpush1.bf16.msra.mxu0 0
    %6025 = vmatprep.subr.bf16.mxu0 0
    %6026 = vmatpush1.bf16.msra.mxu0 0
    %6027 = vmatprep.subr.bf16.mxu0 0
    %6028 = vmatpush1.bf16.msra.mxu0 0
    %6029 = vmatprep.mubr.bf16.mxu0 0
    %6030 = vmatmul.mubr.bf16.gmra.mrb[0].mxu0 %v5738
    %v6031 = vpop.f32.mrb[0].mxu0
    %v6032 = vadd.f32 0.0, %v6031
    %v6033 = vpop.f32.mrb[0].mxu0
    %v6034 = vpop.f32.mrb[0].mxu0
    %v6035 = vpop.f32.mrb[0].mxu0
    %6036 = vdwg.mxu0
    %6045 = vmatprep.subr.bf16.mxu0 0
    %6046 = vmatpush1.bf16.msra.mxu0 %v5965
    %6047 = vmatprep.subr.bf16.mxu0 0
    %6048 = vmatpush1.bf16.msra.mxu0 %v5966
    %6049 = vmatprep.subr.bf16.mxu0 0
    %6050 = vmatpush1.bf16.msra.mxu0 %v5967
    %6051 = vmatprep.subr.bf16.mxu0 0
    %6052 = vmatpush1.bf16.msra.mxu0 %v5968
    %6053 = vmatprep.subr.bf16.mxu0 0
    %6054 = vmatpush1.bf16.msra.mxu0 %v5969
    %6055 = vmatprep.subr.bf16.mxu0 0
    %6056 = vmatpush1.bf16.msra.mxu0 %v5970
    %6057 = vmatprep.subr.bf16.mxu0 0
    %6058 = vmatpush1.bf16.msra.mxu0 %v5971
    %6059 = vmatprep.subr.bf16.mxu0 0
    %6060 = vmatpush1.bf16.msra.mxu0 %v5972
    %6061 = vmatprep.subr.bf16.mxu0 0
    %6062 = vmatpush1.bf16.msra.mxu0 0
    %6063 = vmatprep.subr.bf16.mxu0 0
    %6064 = vmatpush1.bf16.msra.mxu0 0
    %6065 = vmatprep.subr.bf16.mxu0 0
    %6066 = vmatpush1.bf16.msra.mxu0 0
    %6067 = vmatprep.subr.bf16.mxu0 0
    %6068 = vmatpush1.bf16.msra.mxu0 0
    %6069 = vmatprep.subr.bf16.mxu0 0
    %6070 = vmatpush1.bf16.msra.mxu0 0
    %6071 = vmatprep.subr.bf16.mxu0 0
    %6072 = vmatpush1.bf16.msra.mxu0 0
    %6073 = vmatprep.subr.bf16.mxu0 0
    %6074 = vmatpush1.bf16.msra.mxu0 0
    %6075 = vmatprep.subr.bf16.mxu0 0
    %6076 = vmatpush1.bf16.msra.mxu0 0
    %6077 = vmatprep.mubr.bf16.mxu0 0
    %6078 = vmatmul.mubr.bf16.gmra.mrb[0].mxu0 %v5933
    %v6079 = vpop.f32.mrb[0].mxu0
    %v6080 = vadd.f32 %v6032, %v6079
    %v6081 = vpop.f32.mrb[0].mxu0
    %v6082 = vpop.f32.mrb[0].mxu0
    %v6083 = vpop.f32.mrb[0].mxu0
    %6084 = vdwg.mxu0
    %v6085 = vlaneseq
    %v6086 = vshrl.u32 %v6085, 7
    %v6087 = vsub.s32 2, %v6086
    %v6088 = vrot.slane %v803, %v6087
    %v6089 = vadd.f32 %v6080, %v6088
    %v6090 = vxor.u32 %v6089, 2147483648
    %v6091 = vmul.f32 %v6090, 1.442695
    %v6092 = vpow.pop %v6091
    %v6093 = vadd.f32 %v6092, 1.0
    %v6094 = vrcp.pop %v6093
    %v6095 = vmul.f32 1.0, %v6094
    %v6096 = vmul.f32 %v6089, %v6095
    %vm6097 = vcmask 523264
    %v6098 = vsel %vm6097, %v6096, 0.0
    %6099 = vadd.xlane.f32.xlu0 %v6098
    %v6100 = vpop.xlane.xlu0 %6099
    %v6101 = vrcp.pop 64.0
    %v6102 = vmul.f32 %v6100, %v6101
    %v6103 = vsub.f32 %v6096, %v6102
    %v6104 = vmul.f32 %v6103, %v6103
    %v6105 = vsel %vm6097, %v6104, 0.0
    %6106 = vadd.xlane.f32.xlu0 %v6105
    %v6107 = vpop.xlane.xlu0 %6106
    %v6108 = vmul.f32 %v6107, %v6101
    %v6109 = vadd.f32 %v6108, 1e-05
    %v6110 = vrsqrt.pop %v6109
    %v6111 = vmul.f32 %v6103, %v6110
    %v6112 = vlaneseq
    %v6113 = vshrl.u32 %v6112, 7
    %v6114 = vsub.s32 3, %v6113
    %v6115 = vrot.slane %v803, %v6114
    %v6116 = vmul.f32 %v6111, %v6115
    %v6117 = vlaneseq
    %v6118 = vshrl.u32 %v6117, 7
    %v6119 = vsub.s32 4, %v6118
    %v6120 = vrot.slane %v803, %v6119
    %v6121 = vadd.f32 %v6116, %v6120
    %v6122 = vunpack.c.l.bf16 %v740
    %v6123 = vunpack.c.l.bf16 %v744
    %v6124 = vunpack.c.l.bf16 %v748
    %v6125 = vunpack.c.l.bf16 %v752
    %v6126 = vunpack.c.l.bf16 %v756
    %v6127 = vunpack.c.l.bf16 %v760
    %v6128 = vunpack.c.l.bf16 %v764
    %v6129 = vunpack.c.l.bf16 %v768
    %v6130 = vlaneseq
    %v6131 = vshrl.u32 %v6130, 7
    %v6132 = vsub.s32 5, %v6131
    %v6133 = vrot.slane %v803, %v6132
    %v6135 = vsel %vm6097, %v6121, 0
    %6137 = vmatprep.subr.mxu0 0.0
    %6138 = vmatpush1.msra.mxu0 %v6122
    %6139 = vmatprep.subr.mxu0 0.0
    %6140 = vmatpush1.msra.mxu0 %v6123
    %6141 = vmatprep.subr.mxu0 0.0
    %6142 = vmatpush1.msra.mxu0 %v6124
    %6143 = vmatprep.subr.mxu0 0.0
    %6144 = vmatpush1.msra.mxu0 %v6125
    %6145 = vmatprep.subr.mxu0 0.0
    %6146 = vmatpush1.msra.mxu0 %v6126
    %6147 = vmatprep.subr.mxu0 0.0
    %6148 = vmatpush1.msra.mxu0 %v6127
    %6149 = vmatprep.subr.mxu0 0.0
    %6150 = vmatpush1.msra.mxu0 %v6128
    %6151 = vmatprep.subr.mxu0 0.0
    %6152 = vmatpush1.msra.mxu0 %v6129
    %6153 = vmatprep.subr.mxu0 0.0
    %6154 = vmatpush1.msra.mxu0 0.0
    %6155 = vmatprep.subr.mxu0 0.0
    %6156 = vmatpush1.msra.mxu0 0.0
    %6157 = vmatprep.subr.mxu0 0.0
    %6158 = vmatpush1.msra.mxu0 0.0
    %6159 = vmatprep.subr.mxu0 0.0
    %6160 = vmatpush1.msra.mxu0 0.0
    %6161 = vmatprep.subr.mxu0 0.0
    %6162 = vmatpush1.msra.mxu0 0.0
    %6163 = vmatprep.subr.mxu0 0.0
    %6164 = vmatpush1.msra.mxu0 0.0
    %6165 = vmatprep.subr.mxu0 0.0
    %6166 = vmatpush1.msra.mxu0 0.0
    %6167 = vmatprep.subr.mxu0 0.0
    %6168 = vmatpush1.msra.mxu0 0.0
    %6169 = vmatprep.subr.mxu0 0.0
    %6170 = vmatpush1.msra.mxu0 0.0
    %6171 = vmatprep.subr.mxu0 0.0
    %6172 = vmatpush1.msra.mxu0 0.0
    %6173 = vmatprep.subr.mxu0 0.0
    %6174 = vmatpush1.msra.mxu0 0.0
    %6175 = vmatprep.subr.mxu0 0.0
    %6176 = vmatpush1.msra.mxu0 0.0
    %6177 = vmatprep.subr.mxu0 0.0
    %6178 = vmatpush1.msra.mxu0 0.0
    %6179 = vmatprep.subr.mxu0 0.0
    %6180 = vmatpush1.msra.mxu0 0.0
    %6181 = vmatprep.subr.mxu0 0.0
    %6182 = vmatpush1.msra.mxu0 0.0
    %6183 = vmatprep.subr.mxu0 0.0
    %6184 = vmatpush1.msra.mxu0 0.0
    %6185 = vmatprep.subr.mxu0 0.0
    %6186 = vmatpush1.msra.mxu0 0.0
    %6187 = vmatprep.subr.mxu0 0.0
    %6188 = vmatpush1.msra.mxu0 0.0
    %6189 = vmatprep.subr.mxu0 0.0
    %6190 = vmatpush1.msra.mxu0 0.0
    %6191 = vmatprep.subr.mxu0 0.0
    %6192 = vmatpush1.msra.mxu0 0.0
    %6193 = vmatprep.subr.mxu0 0.0
    %6194 = vmatpush1.msra.mxu0 0.0
    %6195 = vmatprep.subr.mxu0 0.0
    %6196 = vmatpush1.msra.mxu0 0.0
    %6197 = vmatprep.subr.mxu0 0.0
    %6198 = vmatpush1.msra.mxu0 0.0
    %6199 = vmatprep.subr.mxu0 0.0
    %6200 = vmatpush1.msra.mxu0 0.0
    %6201 = vmatprep.mubr.f32.mxu0 0.0
    %6202 = vmatmul.mubr.f32.gmra.mrb[0].mxu0 %v6135
    %v6203 = vpop.f32.mrb[0].mxu0
    %v6204 = vadd.f32 %v6133, %v6203
    %v6205 = vpop.f32.mrb[0].mxu0
    %6206 = vdwg.mxu0
    %6207 = vst.msk [vmem:[%s7] sm:$0xff] %vm4574, %v6204
    // Predicated region
    $region50: #{ddpm_forward.1} parent=1 // pred_check
      _
    $region51: #{ddpm_forward.1} parent=1 // pred_check_branch
      %6209 = sbr.rel (0) target = $region53
    $region52: #{ddpm_forward.1} parent=1 // pred_region
      _
    $region53: #{ddpm_forward.1} parent=1 // pred_fallthru
      _
    // Predicated region
    $region54: #{ddpm_forward.1} parent=1 // pred_check
      _
    $region55: #{ddpm_forward.1} parent=1 // pred_check_branch
      %6211 = sbr.rel (0) target = $region57
    $region56: #{ddpm_forward.1} parent=1 // pred_region
      _
    $region57: #{ddpm_forward.1} parent=1 // pred_fallthru
      _
    %6212 = vsyncpa [#allocation3], 1
    %6213 = vsyncpa [#allocation5], 1
    %6214 = vsyncpa [#allocation8], 1

</llo_original>
